<compile_context>
chip_gen: v7x
topology: tpu7x:2x2x1
jax: 0.10.0
libtpu: 0.0.40
codegen_flags: <defaults>
</compile_context>

<pallas_src>
import numpy as np

import jax
import jax.numpy as jnp
from jax.experimental import pallas as pl
from jax.experimental.pallas import tpu as pltpu


_TB = 8  # batch tile; multiple of 8 (one sublane tile) so in-kernel reshapes are layout-preserving


# ----------------------------------------------------------------------------
# Fused forward kernel (one batch tile per grid step, everything in VMEM/vregs)
# ----------------------------------------------------------------------------
def _lenet_fused_kernel(x_ref, w1e_ref, w1o_ref, b1_ref, w2e_ref, w2o_ref, b2_ref,
                        wf1_ref, bf1_ref, wf2_ref, bf2_ref, wf3_ref, bf3_ref,
                        out_ref):
    tb = x_ref.shape[1]
    x = x_ref[...]                                   # (32, TB, 96); lanes = (w, c_in)

    def banded_matmul(src, w_ref, rows_out):
        # src: (H_in, TB, K).  w_ref: (KH, K, N) banded weights, one per kernel
        # row offset.  Result rows are (y, b), cols are (x_out_slot, c_out).
        kh, _, n = w_ref.shape
        k = src.shape[2]
        acc = jnp.zeros((rows_out * tb, n), jnp.float32)
        for i in range(kh):                          # static unroll, KH = 5
            a = src[i:i + rows_out].reshape(rows_out * tb, k)
            acc = acc + jnp.dot(a, w_ref[i], preferred_element_type=jnp.float32)
        return acc

    def pool_rows(pre, rows_out):
        # pre: (2*rows_out*TB, N), rows ordered (y, b) -> max over y pairs.
        n = pre.shape[1]
        g = pre.reshape(rows_out, 2 * tb, n)         # sublane groups of 2*TB (tile aligned)
        return jnp.maximum(g[:, :tb, :], g[:, tb:, :])   # (rows_out, TB, N)

    # conv1 (5x5, 3->6) + 2x2 maxpool + bias + ReLU (pool commutes with bias/ReLU)
    pre_e = banded_matmul(x, w1e_ref, 28)            # even conv output columns
    pre_o = banded_matmul(x, w1o_ref, 28)            # odd  conv output columns
    h1 = pool_rows(jnp.maximum(pre_e, pre_o), 14)    # (14, TB, 84); lanes = (x, c=6)
    h1 = jnp.maximum(h1 + b1_ref[...], 0.0)

    # conv2 (5x5, 6->16) + 2x2 maxpool + bias + ReLU
    pre_e = banded_matmul(h1, w2e_ref, 10)
    pre_o = banded_matmul(h1, w2o_ref, 10)
    h2 = pool_rows(jnp.maximum(pre_e, pre_o), 5)     # (5, TB, 80); lanes = (x, c=16)
    h2 = jnp.maximum(h2 + b2_ref[...], 0.0)

    # fc1: the PyTorch (C,H,W) flatten is folded into wf1's row permutation,
    # so no transpose is needed — just 5 row-dots accumulated.
    acc = jnp.zeros((tb, wf1_ref.shape[2]), jnp.float32)
    for yo in range(wf1_ref.shape[0]):               # 5
        acc = acc + jnp.dot(h2[yo], wf1_ref[yo], preferred_element_type=jnp.float32)
    f1 = jnp.maximum(acc + bf1_ref[...], 0.0)        # (TB, 128), cols >=120 stay 0

    f2 = jnp.maximum(jnp.dot(f1, wf2_ref[...], preferred_element_type=jnp.float32)
                     + bf2_ref[...], 0.0)            # (TB, 128), cols >=84 stay 0
    out = jnp.dot(f2, wf3_ref[...], preferred_element_type=jnp.float32) + bf3_ref[...]
    out_ref[...] = out                               # lane-dense (TB, 128) store


# ----------------------------------------------------------------------------
# Offline weight packing (done once at init, plain numpy)
# ----------------------------------------------------------------------------
def _banded_conv_weight(w_oihw, w_in, out_xs):
    """Torch conv weight (Co,Ci,KH,KW) -> (KH, w_in*Ci, len(out_xs)*Co) banded
    GEMM weights.  Row index = xw*Ci + ci; col index = oi*Co + co."""
    w = np.asarray(w_oihw, np.float32)
    co_n, ci_n, kh, kw = w.shape
    out_xs = list(out_xs)
    out = np.zeros((kh, w_in * ci_n, len(out_xs) * co_n), np.float32)
    for i in range(kh):
        for oi, xo in enumerate(out_xs):
            for j in range(kw):
                xw = xo + j
                out[i, xw * ci_n:(xw + 1) * ci_n,
                    oi * co_n:(oi + 1) * co_n] = w[:, :, i, j].T
    return out


def _fc1_packed(wf1, n_pad=128):
    """Torch fc1 weight (120, 400) with feature order (c, y, x) -> (5, 80, n_pad)
    indexed [yo, x*16 + c, n] so the PyTorch flatten is baked in."""
    w = np.asarray(wf1, np.float32)
    out = np.zeros((5, 80, n_pad), np.float32)
    for yo in range(5):
        for xo in range(5):
            for co in range(16):
                out[yo, xo * 16 + co, :w.shape[0]] = w[:, co * 25 + yo * 5 + xo]
    return out


def _fc_packed(w, in_pad, out_pad):
    """Torch linear weight (out, in) -> zero-padded (in_pad, out_pad)."""
    w = np.asarray(w, np.float32)
    o, i = w.shape
    out = np.zeros((in_pad, out_pad), np.float32)
    out[:i, :o] = w.T
    return out


def _pad_row(b, n_pad):
    b = np.asarray(b, np.float32)
    out = np.zeros((1, n_pad), np.float32)
    out[0, :b.shape[0]] = b
    return out


def init_params(key):
    ks = jax.random.split(key, 10)
    w1 = jax.random.normal(ks[0], (6, 3, 5, 5), jnp.float32) * 0.10
    b1 = jax.random.normal(ks[1], (6,), jnp.float32) * 0.10
    w2 = jax.random.normal(ks[2], (16, 6, 5, 5), jnp.float32) * 0.05
    b2 = jax.random.normal(ks[3], (16,), jnp.float32) * 0.05
    wf1 = jax.random.normal(ks[4], (120, 400), jnp.float32) * 0.05   # torch (out, in)
    bf1 = jax.random.normal(ks[5], (120,), jnp.float32) * 0.05
    wf2 = jax.random.normal(ks[6], (84, 120), jnp.float32) * 0.05
    bf2 = jax.random.normal(ks[7], (84,), jnp.float32) * 0.05
    wf3 = jax.random.normal(ks[8], (10, 84), jnp.float32) * 0.05
    bf3 = jax.random.normal(ks[9], (10,), jnp.float32) * 0.05

    params = dict(
        # packed, kernel-side layouts
        w1e=jnp.asarray(_banded_conv_weight(w1, 32, range(0, 28, 2))),  # (5, 96, 84)
        w1o=jnp.asarray(_banded_conv_weight(w1, 32, range(1, 28, 2))),
        b1t=jnp.asarray(np.tile(np.asarray(b1, np.float32), 14).reshape(1, 84)),
        w2e=jnp.asarray(_banded_conv_weight(w2, 14, range(0, 10, 2))),  # (5, 84, 80)
        w2o=jnp.asarray(_banded_conv_weight(w2, 14, range(1, 10, 2))),
        b2t=jnp.asarray(np.tile(np.asarray(b2, np.float32), 5).reshape(1, 80)),
        wf1p=jnp.asarray(_fc1_packed(wf1)),                             # (5, 80, 128)
        bf1p=jnp.asarray(_pad_row(bf1, 128)),
        wf2p=jnp.asarray(_fc_packed(wf2, 128, 128)),
        bf2p=jnp.asarray(_pad_row(bf2, 128)),
        wf3p=jnp.asarray(_fc_packed(wf3, 128, 128)),
        bf3p=jnp.asarray(_pad_row(bf3, 128)),
        # torch-layout copies for the pure-JAX reference
        w1_t=w1, b1=b1, w2_t=w2, b2=b2,
        wf1_t=wf1, bf1=bf1, wf2_t=wf2, bf2=bf2, wf3_t=wf3, bf3=bf3,
    )
    return params


# ----------------------------------------------------------------------------
# Forward pass wrapper
# ----------------------------------------------------------------------------
@jax.jit
def net_forward(params, x_nchw):
    assert x_nchw.shape[1:] == (3, 32, 32), x_nchw.shape
    B = x_nchw.shape[0]
    n_tiles = -(-B // _TB)
    bp = n_tiles * _TB

    # NCHW -> (H, B, W*C): batch on sublanes, (width, channel) packed on lanes.
    x = jnp.transpose(x_nchw.astype(jnp.float32), (2, 0, 3, 1)).reshape(32, B, 96)
    if bp != B:
        x = jnp.pad(x, ((0, 0), (0, bp - B), (0, 0)))

    const = lambda *_: None  # noqa: E731 (documentation only)

    out = pl.pallas_call(
        _lenet_fused_kernel,
        out_shape=jax.ShapeDtypeStruct((bp, 128), jnp.float32),
        grid=(n_tiles,),
        in_specs=[
            pl.BlockSpec((32, _TB, 96), lambda b: (0, b, 0)),   # input batch tile
            pl.BlockSpec((5, 96, 84), lambda b: (0, 0, 0)),     # conv1 banded, even cols
            pl.BlockSpec((5, 96, 84), lambda b: (0, 0, 0)),     # conv1 banded, odd cols
            pl.BlockSpec((1, 84), lambda b: (0, 0)),            # conv1 bias (tiled over x)
            pl.BlockSpec((5, 84, 80), lambda b: (0, 0, 0)),     # conv2 banded, even cols
            pl.BlockSpec((5, 84, 80), lambda b: (0, 0, 0)),     # conv2 banded, odd cols
            pl.BlockSpec((1, 80), lambda b: (0, 0)),            # conv2 bias (tiled over x)
            pl.BlockSpec((5, 80, 128), lambda b: (0, 0, 0)),    # fc1 (flatten-permuted)
            pl.BlockSpec((1, 128), lambda b: (0, 0)),
            pl.BlockSpec((128, 128), lambda b: (0, 0)),         # fc2 (padded)
            pl.BlockSpec((1, 128), lambda b: (0, 0)),
            pl.BlockSpec((128, 128), lambda b: (0, 0)),         # fc3 (padded)
            pl.BlockSpec((1, 128), lambda b: (0, 0)),
        ],
        out_specs=pl.BlockSpec((_TB, 128), lambda b: (b, 0)),
        compiler_params=pltpu.CompilerParams(
            dimension_semantics=("parallel",),
        ),
    )(x, params["w1e"], params["w1o"], params["b1t"],
      params["w2e"], params["w2o"], params["b2t"],
      params["wf1p"], params["bf1p"],
      params["wf2p"], params["bf2p"],
      params["wf3p"], params["bf3p"])

    return out[:B, :10]


# Pure-JAX reference replicating PyTorch semantics exactly (NCHW conv, etc.)
def net_forward_reference(params, x):
    hp = jax.lax.Precision.HIGHEST
    dn1 = jax.lax.conv_dimension_numbers(x.shape, params["w1_t"].shape,
                                         ("NCHW", "OIHW", "NCHW"))
    h = jax.lax.conv_general_dilated(x, params["w1_t"], (1, 1), "VALID",
                                     dimension_numbers=dn1, precision=hp)
    h = jax.nn.relu(h + params["b1"][None, :, None, None])
    h = jax.lax.reduce_window(h, -jnp.inf, jax.lax.max, (1, 1, 2, 2), (1, 1, 2, 2), "VALID")
    dn2 = jax.lax.conv_dimension_numbers(h.shape, params["w2_t"].shape,
                                         ("NCHW", "OIHW", "NCHW"))
    h = jax.lax.conv_general_dilated(h, params["w2_t"], (1, 1), "VALID",
                                     dimension_numbers=dn2, precision=hp)
    h = jax.nn.relu(h + params["b2"][None, :, None, None])
    h = jax.lax.reduce_window(h, -jnp.inf, jax.lax.max, (1, 1, 2, 2), (1, 1, 2, 2), "VALID")
    h = h.reshape(h.shape[0], -1)
    h = jax.nn.relu(jnp.dot(h, params["wf1_t"].T, precision=hp) + params["bf1"])
    h = jax.nn.relu(jnp.dot(h, params["wf2_t"].T, precision=hp) + params["bf2"])
    return jnp.dot(h, params["wf3_t"].T, precision=hp) + params["bf3"]


if __name__ == "__main__":
    B = 2
    # The module's 16*5*5 flatten implies 32x32 spatial, 3 input channels.
    x = jax.random.normal(jax.random.PRNGKey(0), (B, 3, 32, 32), jnp.float32)
    params = init_params(jax.random.PRNGKey(1))

    out = jax.block_until_ready(net_forward(params, x))
    assert out.shape == (B, 10), out.shape

    ref = net_forward_reference(params, x)
    max_err = float(jnp.max(jnp.abs(out - ref)))
    # Default-precision MXU dots use bf16 multiply passes (f32 accumulate), so
    # allow a slightly looser tolerance than the f32-HIGHEST reference.
    tol = 3e-2 * (1.0 + float(jnp.max(jnp.abs(ref))))
    assert max_err < tol, (max_err, tol)

    print("KERNEL_OK")
</pallas_src>

<mosaic_0001>
module attributes {stable_mosaic.version = 11 : i64} {
  func.func @_lenet_fused_kernel(%arg0: i32, %arg1: memref<32x8x96xf32, #tpu.memory_space<vmem>>, %arg2: memref<5x96x84xf32, #tpu.memory_space<vmem>>, %arg3: memref<5x96x84xf32, #tpu.memory_space<vmem>>, %arg4: memref<1x84xf32, #tpu.memory_space<vmem>>, %arg5: memref<5x84x80xf32, #tpu.memory_space<vmem>>, %arg6: memref<5x84x80xf32, #tpu.memory_space<vmem>>, %arg7: memref<1x80xf32, #tpu.memory_space<vmem>>, %arg8: memref<5x80x128xf32, #tpu.memory_space<vmem>>, %arg9: memref<1x128xf32, #tpu.memory_space<vmem>>, %arg10: memref<128x128xf32, #tpu.memory_space<vmem>>, %arg11: memref<1x128xf32, #tpu.memory_space<vmem>>, %arg12: memref<128x128xf32, #tpu.memory_space<vmem>>, %arg13: memref<1x128xf32, #tpu.memory_space<vmem>>, %arg14: memref<8x128xf32, #tpu.memory_space<vmem>>) attributes {dimension_semantics = [#tpu.dimension_semantics<parallel>], iteration_bounds = array<i64: 1>, scalar_prefetch = 0 : i64, scratch_operands = 0 : i64, tpu.core_type = #tpu.core_type<tc>, window_params = [{transform_indices = @transform_0, window_bounds = array<i64: 32, 8, 96>}, {pipeline_mode = #tpu.pipeline_mode<synchronous>, transform_indices = @transform_1, window_bounds = array<i64: 5, 96, 84>}, {pipeline_mode = #tpu.pipeline_mode<synchronous>, transform_indices = @transform_2, window_bounds = array<i64: 5, 96, 84>}, {pipeline_mode = #tpu.pipeline_mode<synchronous>, transform_indices = @transform_3, window_bounds = array<i64: 1, 84>}, {pipeline_mode = #tpu.pipeline_mode<synchronous>, transform_indices = @transform_4, window_bounds = array<i64: 5, 84, 80>}, {pipeline_mode = #tpu.pipeline_mode<synchronous>, transform_indices = @transform_5, window_bounds = array<i64: 5, 84, 80>}, {pipeline_mode = #tpu.pipeline_mode<synchronous>, transform_indices = @transform_6, window_bounds = array<i64: 1, 80>}, {pipeline_mode = #tpu.pipeline_mode<synchronous>, transform_indices = @transform_7, window_bounds = array<i64: 5, 80, 128>}, {pipeline_mode = #tpu.pipeline_mode<synchronous>, transform_indices = @transform_8, window_bounds = array<i64: 1, 128>}, {pipeline_mode = #tpu.pipeline_mode<synchronous>, transform_indices = @transform_9, window_bounds = array<i64: 128, 128>}, {pipeline_mode = #tpu.pipeline_mode<synchronous>, transform_indices = @transform_10, window_bounds = array<i64: 1, 128>}, {pipeline_mode = #tpu.pipeline_mode<synchronous>, transform_indices = @transform_11, window_bounds = array<i64: 128, 128>}, {pipeline_mode = #tpu.pipeline_mode<synchronous>, transform_indices = @transform_12, window_bounds = array<i64: 1, 128>}, {transform_indices = @transform_13, window_bounds = array<i64: 8, 128>}]} {
    %c0 = arith.constant 0 : index
    %c0_0 = arith.constant 0 : index
    %c0_1 = arith.constant 0 : index
    %0 = vector.load %arg1[%c0, %c0_0, %c0_1] : memref<32x8x96xf32, #tpu.memory_space<vmem>>, vector<32x8x96xf32>
    %cst = arith.constant 0.000000e+00 : f32
    %1 = vector.broadcast %cst : f32 to vector<224x84xf32>
    %2 = vector.extract_strided_slice %0 {offsets = [0, 0, 0], sizes = [28, 8, 96], strides = [1, 1, 1]} : vector<32x8x96xf32> to vector<28x8x96xf32>
    %3 = vector.shape_cast %2 : vector<28x8x96xf32> to vector<224x96xf32>
    %c0_2 = arith.constant 0 : index
    %c0_3 = arith.constant 0 : index
    %c0_4 = arith.constant 0 : index
    %4 = vector.load %arg2[%c0_2, %c0_3, %c0_4] : memref<5x96x84xf32, #tpu.memory_space<vmem>>, vector<1x96x84xf32>
    %5 = vector.shape_cast %4 : vector<1x96x84xf32> to vector<96x84xf32>
    %cst_5 = arith.constant dense<0.000000e+00> : vector<224x84xf32>
    %6 = tpu.matmul %3, %5, %cst_5 {dimension_numbers = #tpu.dot_dimension_numbers<[1], [0], [0], [1], [0, 0, 1, 1], [], []>} : vector<224x96xf32>, vector<96x84xf32>, vector<224x84xf32> -> vector<224x84xf32>
    %7 = arith.addf %1, %6 : vector<224x84xf32>
    %8 = vector.extract_strided_slice %0 {offsets = [1, 0, 0], sizes = [28, 8, 96], strides = [1, 1, 1]} : vector<32x8x96xf32> to vector<28x8x96xf32>
    %9 = vector.shape_cast %8 : vector<28x8x96xf32> to vector<224x96xf32>
    %c1 = arith.constant 1 : index
    %c0_6 = arith.constant 0 : index
    %c0_7 = arith.constant 0 : index
    %10 = vector.load %arg2[%c1, %c0_6, %c0_7] : memref<5x96x84xf32, #tpu.memory_space<vmem>>, vector<1x96x84xf32>
    %11 = vector.shape_cast %10 : vector<1x96x84xf32> to vector<96x84xf32>
    %cst_8 = arith.constant dense<0.000000e+00> : vector<224x84xf32>
    %12 = tpu.matmul %9, %11, %cst_8 {dimension_numbers = #tpu.dot_dimension_numbers<[1], [0], [0], [1], [0, 0, 1, 1], [], []>} : vector<224x96xf32>, vector<96x84xf32>, vector<224x84xf32> -> vector<224x84xf32>
    %13 = arith.addf %7, %12 : vector<224x84xf32>
    %14 = vector.extract_strided_slice %0 {offsets = [2, 0, 0], sizes = [28, 8, 96], strides = [1, 1, 1]} : vector<32x8x96xf32> to vector<28x8x96xf32>
    %15 = vector.shape_cast %14 : vector<28x8x96xf32> to vector<224x96xf32>
    %c2 = arith.constant 2 : index
    %c0_9 = arith.constant 0 : index
    %c0_10 = arith.constant 0 : index
    %16 = vector.load %arg2[%c2, %c0_9, %c0_10] : memref<5x96x84xf32, #tpu.memory_space<vmem>>, vector<1x96x84xf32>
    %17 = vector.shape_cast %16 : vector<1x96x84xf32> to vector<96x84xf32>
    %cst_11 = arith.constant dense<0.000000e+00> : vector<224x84xf32>
    %18 = tpu.matmul %15, %17, %cst_11 {dimension_numbers = #tpu.dot_dimension_numbers<[1], [0], [0], [1], [0, 0, 1, 1], [], []>} : vector<224x96xf32>, vector<96x84xf32>, vector<224x84xf32> -> vector<224x84xf32>
    %19 = arith.addf %13, %18 : vector<224x84xf32>
    %20 = vector.extract_strided_slice %0 {offsets = [3, 0, 0], sizes = [28, 8, 96], strides = [1, 1, 1]} : vector<32x8x96xf32> to vector<28x8x96xf32>
    %21 = vector.shape_cast %20 : vector<28x8x96xf32> to vector<224x96xf32>
    %c3 = arith.constant 3 : index
    %c0_12 = arith.constant 0 : index
    %c0_13 = arith.constant 0 : index
    %22 = vector.load %arg2[%c3, %c0_12, %c0_13] : memref<5x96x84xf32, #tpu.memory_space<vmem>>, vector<1x96x84xf32>
    %23 = vector.shape_cast %22 : vector<1x96x84xf32> to vector<96x84xf32>
    %cst_14 = arith.constant dense<0.000000e+00> : vector<224x84xf32>
    %24 = tpu.matmul %21, %23, %cst_14 {dimension_numbers = #tpu.dot_dimension_numbers<[1], [0], [0], [1], [0, 0, 1, 1], [], []>} : vector<224x96xf32>, vector<96x84xf32>, vector<224x84xf32> -> vector<224x84xf32>
    %25 = arith.addf %19, %24 : vector<224x84xf32>
    %26 = vector.extract_strided_slice %0 {offsets = [4, 0, 0], sizes = [28, 8, 96], strides = [1, 1, 1]} : vector<32x8x96xf32> to vector<28x8x96xf32>
    %27 = vector.shape_cast %26 : vector<28x8x96xf32> to vector<224x96xf32>
    %c4 = arith.constant 4 : index
    %c0_15 = arith.constant 0 : index
    %c0_16 = arith.constant 0 : index
    %28 = vector.load %arg2[%c4, %c0_15, %c0_16] : memref<5x96x84xf32, #tpu.memory_space<vmem>>, vector<1x96x84xf32>
    %29 = vector.shape_cast %28 : vector<1x96x84xf32> to vector<96x84xf32>
    %cst_17 = arith.constant dense<0.000000e+00> : vector<224x84xf32>
    %30 = tpu.matmul %27, %29, %cst_17 {dimension_numbers = #tpu.dot_dimension_numbers<[1], [0], [0], [1], [0, 0, 1, 1], [], []>} : vector<224x96xf32>, vector<96x84xf32>, vector<224x84xf32> -> vector<224x84xf32>
    %31 = arith.addf %25, %30 : vector<224x84xf32>
    %cst_18 = arith.constant 0.000000e+00 : f32
    %32 = vector.broadcast %cst_18 : f32 to vector<224x84xf32>
    %33 = vector.extract_strided_slice %0 {offsets = [0, 0, 0], sizes = [28, 8, 96], strides = [1, 1, 1]} : vector<32x8x96xf32> to vector<28x8x96xf32>
    %34 = vector.shape_cast %33 : vector<28x8x96xf32> to vector<224x96xf32>
    %c0_19 = arith.constant 0 : index
    %c0_20 = arith.constant 0 : index
    %c0_21 = arith.constant 0 : index
    %35 = vector.load %arg3[%c0_19, %c0_20, %c0_21] : memref<5x96x84xf32, #tpu.memory_space<vmem>>, vector<1x96x84xf32>
    %36 = vector.shape_cast %35 : vector<1x96x84xf32> to vector<96x84xf32>
    %cst_22 = arith.constant dense<0.000000e+00> : vector<224x84xf32>
    %37 = tpu.matmul %34, %36, %cst_22 {dimension_numbers = #tpu.dot_dimension_numbers<[1], [0], [0], [1], [0, 0, 1, 1], [], []>} : vector<224x96xf32>, vector<96x84xf32>, vector<224x84xf32> -> vector<224x84xf32>
    %38 = arith.addf %32, %37 : vector<224x84xf32>
    %39 = vector.extract_strided_slice %0 {offsets = [1, 0, 0], sizes = [28, 8, 96], strides = [1, 1, 1]} : vector<32x8x96xf32> to vector<28x8x96xf32>
    %40 = vector.shape_cast %39 : vector<28x8x96xf32> to vector<224x96xf32>
    %c1_23 = arith.constant 1 : index
    %c0_24 = arith.constant 0 : index
    %c0_25 = arith.constant 0 : index
    %41 = vector.load %arg3[%c1_23, %c0_24, %c0_25] : memref<5x96x84xf32, #tpu.memory_space<vmem>>, vector<1x96x84xf32>
    %42 = vector.shape_cast %41 : vector<1x96x84xf32> to vector<96x84xf32>
    %cst_26 = arith.constant dense<0.000000e+00> : vector<224x84xf32>
    %43 = tpu.matmul %40, %42, %cst_26 {dimension_numbers = #tpu.dot_dimension_numbers<[1], [0], [0], [1], [0, 0, 1, 1], [], []>} : vector<224x96xf32>, vector<96x84xf32>, vector<224x84xf32> -> vector<224x84xf32>
    %44 = arith.addf %38, %43 : vector<224x84xf32>
    %45 = vector.extract_strided_slice %0 {offsets = [2, 0, 0], sizes = [28, 8, 96], strides = [1, 1, 1]} : vector<32x8x96xf32> to vector<28x8x96xf32>
    %46 = vector.shape_cast %45 : vector<28x8x96xf32> to vector<224x96xf32>
    %c2_27 = arith.constant 2 : index
    %c0_28 = arith.constant 0 : index
    %c0_29 = arith.constant 0 : index
    %47 = vector.load %arg3[%c2_27, %c0_28, %c0_29] : memref<5x96x84xf32, #tpu.memory_space<vmem>>, vector<1x96x84xf32>
    %48 = vector.shape_cast %47 : vector<1x96x84xf32> to vector<96x84xf32>
    %cst_30 = arith.constant dense<0.000000e+00> : vector<224x84xf32>
    %49 = tpu.matmul %46, %48, %cst_30 {dimension_numbers = #tpu.dot_dimension_numbers<[1], [0], [0], [1], [0, 0, 1, 1], [], []>} : vector<224x96xf32>, vector<96x84xf32>, vector<224x84xf32> -> vector<224x84xf32>
    %50 = arith.addf %44, %49 : vector<224x84xf32>
    %51 = vector.extract_strided_slice %0 {offsets = [3, 0, 0], sizes = [28, 8, 96], strides = [1, 1, 1]} : vector<32x8x96xf32> to vector<28x8x96xf32>
    %52 = vector.shape_cast %51 : vector<28x8x96xf32> to vector<224x96xf32>
    %c3_31 = arith.constant 3 : index
    %c0_32 = arith.constant 0 : index
    %c0_33 = arith.constant 0 : index
    %53 = vector.load %arg3[%c3_31, %c0_32, %c0_33] : memref<5x96x84xf32, #tpu.memory_space<vmem>>, vector<1x96x84xf32>
    %54 = vector.shape_cast %53 : vector<1x96x84xf32> to vector<96x84xf32>
    %cst_34 = arith.constant dense<0.000000e+00> : vector<224x84xf32>
    %55 = tpu.matmul %52, %54, %cst_34 {dimension_numbers = #tpu.dot_dimension_numbers<[1], [0], [0], [1], [0, 0, 1, 1], [], []>} : vector<224x96xf32>, vector<96x84xf32>, vector<224x84xf32> -> vector<224x84xf32>
    %56 = arith.addf %50, %55 : vector<224x84xf32>
    %57 = vector.extract_strided_slice %0 {offsets = [4, 0, 0], sizes = [28, 8, 96], strides = [1, 1, 1]} : vector<32x8x96xf32> to vector<28x8x96xf32>
    %58 = vector.shape_cast %57 : vector<28x8x96xf32> to vector<224x96xf32>
    %c4_35 = arith.constant 4 : index
    %c0_36 = arith.constant 0 : index
    %c0_37 = arith.constant 0 : index
    %59 = vector.load %arg3[%c4_35, %c0_36, %c0_37] : memref<5x96x84xf32, #tpu.memory_space<vmem>>, vector<1x96x84xf32>
    %60 = vector.shape_cast %59 : vector<1x96x84xf32> to vector<96x84xf32>
    %cst_38 = arith.constant dense<0.000000e+00> : vector<224x84xf32>
    %61 = tpu.matmul %58, %60, %cst_38 {dimension_numbers = #tpu.dot_dimension_numbers<[1], [0], [0], [1], [0, 0, 1, 1], [], []>} : vector<224x96xf32>, vector<96x84xf32>, vector<224x84xf32> -> vector<224x84xf32>
    %62 = arith.addf %56, %61 : vector<224x84xf32>
    %63 = arith.maximumf %31, %62 : vector<224x84xf32>
    %64 = vector.shape_cast %63 : vector<224x84xf32> to vector<14x16x84xf32>
    %65 = vector.extract_strided_slice %64 {offsets = [0, 0, 0], sizes = [14, 8, 84], strides = [1, 1, 1]} : vector<14x16x84xf32> to vector<14x8x84xf32>
    %66 = vector.extract_strided_slice %64 {offsets = [0, 8, 0], sizes = [14, 8, 84], strides = [1, 1, 1]} : vector<14x16x84xf32> to vector<14x8x84xf32>
    %67 = arith.maximumf %65, %66 : vector<14x8x84xf32>
    %c0_39 = arith.constant 0 : index
    %c0_40 = arith.constant 0 : index
    %68 = vector.load %arg4[%c0_39, %c0_40] : memref<1x84xf32, #tpu.memory_space<vmem>>, vector<1x84xf32>
    %69 = vector.shape_cast %68 : vector<1x84xf32> to vector<1x1x84xf32>
    %70 = vector.broadcast %69 : vector<1x1x84xf32> to vector<14x8x84xf32>
    %71 = arith.addf %67, %70 : vector<14x8x84xf32>
    %cst_41 = arith.constant 0.000000e+00 : f32
    %72 = vector.broadcast %cst_41 : f32 to vector<14x8x84xf32>
    %73 = arith.maximumf %71, %72 : vector<14x8x84xf32>
    %cst_42 = arith.constant 0.000000e+00 : f32
    %74 = vector.broadcast %cst_42 : f32 to vector<80x80xf32>
    %75 = vector.extract_strided_slice %73 {offsets = [0, 0, 0], sizes = [10, 8, 84], strides = [1, 1, 1]} : vector<14x8x84xf32> to vector<10x8x84xf32>
    %76 = vector.shape_cast %75 : vector<10x8x84xf32> to vector<80x84xf32>
    %c0_43 = arith.constant 0 : index
    %c0_44 = arith.constant 0 : index
    %c0_45 = arith.constant 0 : index
    %77 = vector.load %arg5[%c0_43, %c0_44, %c0_45] : memref<5x84x80xf32, #tpu.memory_space<vmem>>, vector<1x84x80xf32>
    %78 = vector.shape_cast %77 : vector<1x84x80xf32> to vector<84x80xf32>
    %cst_46 = arith.constant dense<0.000000e+00> : vector<80x80xf32>
    %79 = tpu.matmul %76, %78, %cst_46 {dimension_numbers = #tpu.dot_dimension_numbers<[1], [0], [0], [1], [0, 0, 1, 1], [], []>} : vector<80x84xf32>, vector<84x80xf32>, vector<80x80xf32> -> vector<80x80xf32>
    %80 = arith.addf %74, %79 : vector<80x80xf32>
    %81 = vector.extract_strided_slice %73 {offsets = [1, 0, 0], sizes = [10, 8, 84], strides = [1, 1, 1]} : vector<14x8x84xf32> to vector<10x8x84xf32>
    %82 = vector.shape_cast %81 : vector<10x8x84xf32> to vector<80x84xf32>
    %c1_47 = arith.constant 1 : index
    %c0_48 = arith.constant 0 : index
    %c0_49 = arith.constant 0 : index
    %83 = vector.load %arg5[%c1_47, %c0_48, %c0_49] : memref<5x84x80xf32, #tpu.memory_space<vmem>>, vector<1x84x80xf32>
    %84 = vector.shape_cast %83 : vector<1x84x80xf32> to vector<84x80xf32>
    %cst_50 = arith.constant dense<0.000000e+00> : vector<80x80xf32>
    %85 = tpu.matmul %82, %84, %cst_50 {dimension_numbers = #tpu.dot_dimension_numbers<[1], [0], [0], [1], [0, 0, 1, 1], [], []>} : vector<80x84xf32>, vector<84x80xf32>, vector<80x80xf32> -> vector<80x80xf32>
    %86 = arith.addf %80, %85 : vector<80x80xf32>
    %87 = vector.extract_strided_slice %73 {offsets = [2, 0, 0], sizes = [10, 8, 84], strides = [1, 1, 1]} : vector<14x8x84xf32> to vector<10x8x84xf32>
    %88 = vector.shape_cast %87 : vector<10x8x84xf32> to vector<80x84xf32>
    %c2_51 = arith.constant 2 : index
    %c0_52 = arith.constant 0 : index
    %c0_53 = arith.constant 0 : index
    %89 = vector.load %arg5[%c2_51, %c0_52, %c0_53] : memref<5x84x80xf32, #tpu.memory_space<vmem>>, vector<1x84x80xf32>
    %90 = vector.shape_cast %89 : vector<1x84x80xf32> to vector<84x80xf32>
    %cst_54 = arith.constant dense<0.000000e+00> : vector<80x80xf32>
    %91 = tpu.matmul %88, %90, %cst_54 {dimension_numbers = #tpu.dot_dimension_numbers<[1], [0], [0], [1], [0, 0, 1, 1], [], []>} : vector<80x84xf32>, vector<84x80xf32>, vector<80x80xf32> -> vector<80x80xf32>
    %92 = arith.addf %86, %91 : vector<80x80xf32>
    %93 = vector.extract_strided_slice %73 {offsets = [3, 0, 0], sizes = [10, 8, 84], strides = [1, 1, 1]} : vector<14x8x84xf32> to vector<10x8x84xf32>
    %94 = vector.shape_cast %93 : vector<10x8x84xf32> to vector<80x84xf32>
    %c3_55 = arith.constant 3 : index
    %c0_56 = arith.constant 0 : index
    %c0_57 = arith.constant 0 : index
    %95 = vector.load %arg5[%c3_55, %c0_56, %c0_57] : memref<5x84x80xf32, #tpu.memory_space<vmem>>, vector<1x84x80xf32>
    %96 = vector.shape_cast %95 : vector<1x84x80xf32> to vector<84x80xf32>
    %cst_58 = arith.constant dense<0.000000e+00> : vector<80x80xf32>
    %97 = tpu.matmul %94, %96, %cst_58 {dimension_numbers = #tpu.dot_dimension_numbers<[1], [0], [0], [1], [0, 0, 1, 1], [], []>} : vector<80x84xf32>, vector<84x80xf32>, vector<80x80xf32> -> vector<80x80xf32>
    %98 = arith.addf %92, %97 : vector<80x80xf32>
    %99 = vector.extract_strided_slice %73 {offsets = [4, 0, 0], sizes = [10, 8, 84], strides = [1, 1, 1]} : vector<14x8x84xf32> to vector<10x8x84xf32>
    %100 = vector.shape_cast %99 : vector<10x8x84xf32> to vector<80x84xf32>
    %c4_59 = arith.constant 4 : index
    %c0_60 = arith.constant 0 : index
    %c0_61 = arith.constant 0 : index
    %101 = vector.load %arg5[%c4_59, %c0_60, %c0_61] : memref<5x84x80xf32, #tpu.memory_space<vmem>>, vector<1x84x80xf32>
    %102 = vector.shape_cast %101 : vector<1x84x80xf32> to vector<84x80xf32>
    %cst_62 = arith.constant dense<0.000000e+00> : vector<80x80xf32>
    %103 = tpu.matmul %100, %102, %cst_62 {dimension_numbers = #tpu.dot_dimension_numbers<[1], [0], [0], [1], [0, 0, 1, 1], [], []>} : vector<80x84xf32>, vector<84x80xf32>, vector<80x80xf32> -> vector<80x80xf32>
    %104 = arith.addf %98, %103 : vector<80x80xf32>
    %cst_63 = arith.constant 0.000000e+00 : f32
    %105 = vector.broadcast %cst_63 : f32 to vector<80x80xf32>
    %106 = vector.extract_strided_slice %73 {offsets = [0, 0, 0], sizes = [10, 8, 84], strides = [1, 1, 1]} : vector<14x8x84xf32> to vector<10x8x84xf32>
    %107 = vector.shape_cast %106 : vector<10x8x84xf32> to vector<80x84xf32>
    %c0_64 = arith.constant 0 : index
    %c0_65 = arith.constant 0 : index
    %c0_66 = arith.constant 0 : index
    %108 = vector.load %arg6[%c0_64, %c0_65, %c0_66] : memref<5x84x80xf32, #tpu.memory_space<vmem>>, vector<1x84x80xf32>
    %109 = vector.shape_cast %108 : vector<1x84x80xf32> to vector<84x80xf32>
    %cst_67 = arith.constant dense<0.000000e+00> : vector<80x80xf32>
    %110 = tpu.matmul %107, %109, %cst_67 {dimension_numbers = #tpu.dot_dimension_numbers<[1], [0], [0], [1], [0, 0, 1, 1], [], []>} : vector<80x84xf32>, vector<84x80xf32>, vector<80x80xf32> -> vector<80x80xf32>
    %111 = arith.addf %105, %110 : vector<80x80xf32>
    %112 = vector.extract_strided_slice %73 {offsets = [1, 0, 0], sizes = [10, 8, 84], strides = [1, 1, 1]} : vector<14x8x84xf32> to vector<10x8x84xf32>
    %113 = vector.shape_cast %112 : vector<10x8x84xf32> to vector<80x84xf32>
    %c1_68 = arith.constant 1 : index
    %c0_69 = arith.constant 0 : index
    %c0_70 = arith.constant 0 : index
    %114 = vector.load %arg6[%c1_68, %c0_69, %c0_70] : memref<5x84x80xf32, #tpu.memory_space<vmem>>, vector<1x84x80xf32>
    %115 = vector.shape_cast %114 : vector<1x84x80xf32> to vector<84x80xf32>
    %cst_71 = arith.constant dense<0.000000e+00> : vector<80x80xf32>
    %116 = tpu.matmul %113, %115, %cst_71 {dimension_numbers = #tpu.dot_dimension_numbers<[1], [0], [0], [1], [0, 0, 1, 1], [], []>} : vector<80x84xf32>, vector<84x80xf32>, vector<80x80xf32> -> vector<80x80xf32>
    %117 = arith.addf %111, %116 : vector<80x80xf32>
    %118 = vector.extract_strided_slice %73 {offsets = [2, 0, 0], sizes = [10, 8, 84], strides = [1, 1, 1]} : vector<14x8x84xf32> to vector<10x8x84xf32>
    %119 = vector.shape_cast %118 : vector<10x8x84xf32> to vector<80x84xf32>
    %c2_72 = arith.constant 2 : index
    %c0_73 = arith.constant 0 : index
    %c0_74 = arith.constant 0 : index
    %120 = vector.load %arg6[%c2_72, %c0_73, %c0_74] : memref<5x84x80xf32, #tpu.memory_space<vmem>>, vector<1x84x80xf32>
    %121 = vector.shape_cast %120 : vector<1x84x80xf32> to vector<84x80xf32>
    %cst_75 = arith.constant dense<0.000000e+00> : vector<80x80xf32>
    %122 = tpu.matmul %119, %121, %cst_75 {dimension_numbers = #tpu.dot_dimension_numbers<[1], [0], [0], [1], [0, 0, 1, 1], [], []>} : vector<80x84xf32>, vector<84x80xf32>, vector<80x80xf32> -> vector<80x80xf32>
    %123 = arith.addf %117, %122 : vector<80x80xf32>
    %124 = vector.extract_strided_slice %73 {offsets = [3, 0, 0], sizes = [10, 8, 84], strides = [1, 1, 1]} : vector<14x8x84xf32> to vector<10x8x84xf32>
    %125 = vector.shape_cast %124 : vector<10x8x84xf32> to vector<80x84xf32>
    %c3_76 = arith.constant 3 : index
    %c0_77 = arith.constant 0 : index
    %c0_78 = arith.constant 0 : index
    %126 = vector.load %arg6[%c3_76, %c0_77, %c0_78] : memref<5x84x80xf32, #tpu.memory_space<vmem>>, vector<1x84x80xf32>
    %127 = vector.shape_cast %126 : vector<1x84x80xf32> to vector<84x80xf32>
    %cst_79 = arith.constant dense<0.000000e+00> : vector<80x80xf32>
    %128 = tpu.matmul %125, %127, %cst_79 {dimension_numbers = #tpu.dot_dimension_numbers<[1], [0], [0], [1], [0, 0, 1, 1], [], []>} : vector<80x84xf32>, vector<84x80xf32>, vector<80x80xf32> -> vector<80x80xf32>
    %129 = arith.addf %123, %128 : vector<80x80xf32>
    %130 = vector.extract_strided_slice %73 {offsets = [4, 0, 0], sizes = [10, 8, 84], strides = [1, 1, 1]} : vector<14x8x84xf32> to vector<10x8x84xf32>
    %131 = vector.shape_cast %130 : vector<10x8x84xf32> to vector<80x84xf32>
    %c4_80 = arith.constant 4 : index
    %c0_81 = arith.constant 0 : index
    %c0_82 = arith.constant 0 : index
    %132 = vector.load %arg6[%c4_80, %c0_81, %c0_82] : memref<5x84x80xf32, #tpu.memory_space<vmem>>, vector<1x84x80xf32>
    %133 = vector.shape_cast %132 : vector<1x84x80xf32> to vector<84x80xf32>
    %cst_83 = arith.constant dense<0.000000e+00> : vector<80x80xf32>
    %134 = tpu.matmul %131, %133, %cst_83 {dimension_numbers = #tpu.dot_dimension_numbers<[1], [0], [0], [1], [0, 0, 1, 1], [], []>} : vector<80x84xf32>, vector<84x80xf32>, vector<80x80xf32> -> vector<80x80xf32>
    %135 = arith.addf %129, %134 : vector<80x80xf32>
    %136 = arith.maximumf %104, %135 : vector<80x80xf32>
    %137 = vector.shape_cast %136 : vector<80x80xf32> to vector<5x16x80xf32>
    %138 = vector.extract_strided_slice %137 {offsets = [0, 0, 0], sizes = [5, 8, 80], strides = [1, 1, 1]} : vector<5x16x80xf32> to vector<5x8x80xf32>
    %139 = vector.extract_strided_slice %137 {offsets = [0, 8, 0], sizes = [5, 8, 80], strides = [1, 1, 1]} : vector<5x16x80xf32> to vector<5x8x80xf32>
    %140 = arith.maximumf %138, %139 : vector<5x8x80xf32>
    %c0_84 = arith.constant 0 : index
    %c0_85 = arith.constant 0 : index
    %141 = vector.load %arg7[%c0_84, %c0_85] : memref<1x80xf32, #tpu.memory_space<vmem>>, vector<1x80xf32>
    %142 = vector.shape_cast %141 : vector<1x80xf32> to vector<1x1x80xf32>
    %143 = vector.broadcast %142 : vector<1x1x80xf32> to vector<5x8x80xf32>
    %144 = arith.addf %140, %143 : vector<5x8x80xf32>
    %cst_86 = arith.constant 0.000000e+00 : f32
    %145 = vector.broadcast %cst_86 : f32 to vector<5x8x80xf32>
    %146 = arith.maximumf %144, %145 : vector<5x8x80xf32>
    %cst_87 = arith.constant 0.000000e+00 : f32
    %147 = vector.broadcast %cst_87 : f32 to vector<8x128xf32>
    %148 = vector.extract_strided_slice %146 {offsets = [0, 0, 0], sizes = [1, 8, 80], strides = [1, 1, 1]} : vector<5x8x80xf32> to vector<1x8x80xf32>
    %149 = vector.shape_cast %148 : vector<1x8x80xf32> to vector<8x80xf32>
    %c0_88 = arith.constant 0 : index
    %c0_89 = arith.constant 0 : index
    %c0_90 = arith.constant 0 : index
    %150 = vector.load %arg8[%c0_88, %c0_89, %c0_90] : memref<5x80x128xf32, #tpu.memory_space<vmem>>, vector<1x80x128xf32>
    %151 = vector.shape_cast %150 : vector<1x80x128xf32> to vector<80x128xf32>
    %cst_91 = arith.constant dense<0.000000e+00> : vector<8x128xf32>
    %152 = tpu.matmul %149, %151, %cst_91 {dimension_numbers = #tpu.dot_dimension_numbers<[1], [0], [0], [1], [0, 0, 1, 1], [], []>} : vector<8x80xf32>, vector<80x128xf32>, vector<8x128xf32> -> vector<8x128xf32>
    %153 = arith.addf %147, %152 : vector<8x128xf32>
    %154 = vector.extract_strided_slice %146 {offsets = [1, 0, 0], sizes = [1, 8, 80], strides = [1, 1, 1]} : vector<5x8x80xf32> to vector<1x8x80xf32>
    %155 = vector.shape_cast %154 : vector<1x8x80xf32> to vector<8x80xf32>
    %c1_92 = arith.constant 1 : index
    %c0_93 = arith.constant 0 : index
    %c0_94 = arith.constant 0 : index
    %156 = vector.load %arg8[%c1_92, %c0_93, %c0_94] : memref<5x80x128xf32, #tpu.memory_space<vmem>>, vector<1x80x128xf32>
    %157 = vector.shape_cast %156 : vector<1x80x128xf32> to vector<80x128xf32>
    %cst_95 = arith.constant dense<0.000000e+00> : vector<8x128xf32>
    %158 = tpu.matmul %155, %157, %cst_95 {dimension_numbers = #tpu.dot_dimension_numbers<[1], [0], [0], [1], [0, 0, 1, 1], [], []>} : vector<8x80xf32>, vector<80x128xf32>, vector<8x128xf32> -> vector<8x128xf32>
    %159 = arith.addf %153, %158 : vector<8x128xf32>
    %160 = vector.extract_strided_slice %146 {offsets = [2, 0, 0], sizes = [1, 8, 80], strides = [1, 1, 1]} : vector<5x8x80xf32> to vector<1x8x80xf32>
    %161 = vector.shape_cast %160 : vector<1x8x80xf32> to vector<8x80xf32>
    %c2_96 = arith.constant 2 : index
    %c0_97 = arith.constant 0 : index
    %c0_98 = arith.constant 0 : index
    %162 = vector.load %arg8[%c2_96, %c0_97, %c0_98] : memref<5x80x128xf32, #tpu.memory_space<vmem>>, vector<1x80x128xf32>
    %163 = vector.shape_cast %162 : vector<1x80x128xf32> to vector<80x128xf32>
    %cst_99 = arith.constant dense<0.000000e+00> : vector<8x128xf32>
    %164 = tpu.matmul %161, %163, %cst_99 {dimension_numbers = #tpu.dot_dimension_numbers<[1], [0], [0], [1], [0, 0, 1, 1], [], []>} : vector<8x80xf32>, vector<80x128xf32>, vector<8x128xf32> -> vector<8x128xf32>
    %165 = arith.addf %159, %164 : vector<8x128xf32>
    %166 = vector.extract_strided_slice %146 {offsets = [3, 0, 0], sizes = [1, 8, 80], strides = [1, 1, 1]} : vector<5x8x80xf32> to vector<1x8x80xf32>
    %167 = vector.shape_cast %166 : vector<1x8x80xf32> to vector<8x80xf32>
    %c3_100 = arith.constant 3 : index
    %c0_101 = arith.constant 0 : index
    %c0_102 = arith.constant 0 : index
    %168 = vector.load %arg8[%c3_100, %c0_101, %c0_102] : memref<5x80x128xf32, #tpu.memory_space<vmem>>, vector<1x80x128xf32>
    %169 = vector.shape_cast %168 : vector<1x80x128xf32> to vector<80x128xf32>
    %cst_103 = arith.constant dense<0.000000e+00> : vector<8x128xf32>
    %170 = tpu.matmul %167, %169, %cst_103 {dimension_numbers = #tpu.dot_dimension_numbers<[1], [0], [0], [1], [0, 0, 1, 1], [], []>} : vector<8x80xf32>, vector<80x128xf32>, vector<8x128xf32> -> vector<8x128xf32>
    %171 = arith.addf %165, %170 : vector<8x128xf32>
    %172 = vector.extract_strided_slice %146 {offsets = [4, 0, 0], sizes = [1, 8, 80], strides = [1, 1, 1]} : vector<5x8x80xf32> to vector<1x8x80xf32>
    %173 = vector.shape_cast %172 : vector<1x8x80xf32> to vector<8x80xf32>
    %c4_104 = arith.constant 4 : index
    %c0_105 = arith.constant 0 : index
    %c0_106 = arith.constant 0 : index
    %174 = vector.load %arg8[%c4_104, %c0_105, %c0_106] : memref<5x80x128xf32, #tpu.memory_space<vmem>>, vector<1x80x128xf32>
    %175 = vector.shape_cast %174 : vector<1x80x128xf32> to vector<80x128xf32>
    %cst_107 = arith.constant dense<0.000000e+00> : vector<8x128xf32>
    %176 = tpu.matmul %173, %175, %cst_107 {dimension_numbers = #tpu.dot_dimension_numbers<[1], [0], [0], [1], [0, 0, 1, 1], [], []>} : vector<8x80xf32>, vector<80x128xf32>, vector<8x128xf32> -> vector<8x128xf32>
    %177 = arith.addf %171, %176 : vector<8x128xf32>
    %c0_108 = arith.constant 0 : index
    %c0_109 = arith.constant 0 : index
    %178 = vector.load %arg9[%c0_108, %c0_109] : memref<1x128xf32, #tpu.memory_space<vmem>>, vector<1x128xf32>
    %179 = vector.broadcast %178 : vector<1x128xf32> to vector<8x128xf32>
    %180 = arith.addf %177, %179 : vector<8x128xf32>
    %cst_110 = arith.constant 0.000000e+00 : f32
    %181 = vector.broadcast %cst_110 : f32 to vector<8x128xf32>
    %182 = arith.maximumf %180, %181 : vector<8x128xf32>
    %c0_111 = arith.constant 0 : index
    %c0_112 = arith.constant 0 : index
    %183 = vector.load %arg10[%c0_111, %c0_112] : memref<128x128xf32, #tpu.memory_space<vmem>>, vector<128x128xf32>
    %cst_113 = arith.constant dense<0.000000e+00> : vector<8x128xf32>
    %184 = tpu.matmul %182, %183, %cst_113 {dimension_numbers = #tpu.dot_dimension_numbers<[1], [0], [0], [1], [0, 0, 1, 1], [], []>} : vector<8x128xf32>, vector<128x128xf32>, vector<8x128xf32> -> vector<8x128xf32>
    %c0_114 = arith.constant 0 : index
    %c0_115 = arith.constant 0 : index
    %185 = vector.load %arg11[%c0_114, %c0_115] : memref<1x128xf32, #tpu.memory_space<vmem>>, vector<1x128xf32>
    %186 = vector.broadcast %185 : vector<1x128xf32> to vector<8x128xf32>
    %187 = arith.addf %184, %186 : vector<8x128xf32>
    %cst_116 = arith.constant 0.000000e+00 : f32
    %188 = vector.broadcast %cst_116 : f32 to vector<8x128xf32>
    %189 = arith.maximumf %187, %188 : vector<8x128xf32>
    %c0_117 = arith.constant 0 : index
    %c0_118 = arith.constant 0 : index
    %190 = vector.load %arg12[%c0_117, %c0_118] : memref<128x128xf32, #tpu.memory_space<vmem>>, vector<128x128xf32>
    %cst_119 = arith.constant dense<0.000000e+00> : vector<8x128xf32>
    %191 = tpu.matmul %189, %190, %cst_119 {dimension_numbers = #tpu.dot_dimension_numbers<[1], [0], [0], [1], [0, 0, 1, 1], [], []>} : vector<8x128xf32>, vector<128x128xf32>, vector<8x128xf32> -> vector<8x128xf32>
    %c0_120 = arith.constant 0 : index
    %c0_121 = arith.constant 0 : index
    %192 = vector.load %arg13[%c0_120, %c0_121] : memref<1x128xf32, #tpu.memory_space<vmem>>, vector<1x128xf32>
    %193 = vector.broadcast %192 : vector<1x128xf32> to vector<8x128xf32>
    %194 = arith.addf %191, %193 : vector<8x128xf32>
    %c0_122 = arith.constant 0 : index
    %c0_123 = arith.constant 0 : index
    %195 = vector.load %arg14[%c0_122, %c0_123] : memref<8x128xf32, #tpu.memory_space<vmem>>, vector<8x128xf32>
    tpu.vector_store %arg14[%c0_122, %c0_123], %194 {strides = array<i32>} : memref<8x128xf32, #tpu.memory_space<vmem>>, vector<8x128xf32>,
    return
  }
  func.func @transform_0(%arg0: i32) -> (i32, i32, i32) {
    %c0_i32 = arith.constant 0 : i32
    %c0_i32_0 = arith.constant 0 : i32
    %c0_i32_1 = arith.constant 0 : i32
    return %c0_i32, %arg0, %c0_i32_0 : i32, i32, i32
  }
  func.func @transform_1(%arg0: i32) -> (i32, i32, i32) {
    %c0_i32 = arith.constant 0 : i32
    %c0_i32_0 = arith.constant 0 : i32
    %c0_i32_1 = arith.constant 0 : i32
    %c0_i32_2 = arith.constant 0 : i32
    return %c0_i32, %c0_i32_0, %c0_i32_1 : i32, i32, i32
  }
  func.func @transform_2(%arg0: i32) -> (i32, i32, i32) {
    %c0_i32 = arith.constant 0 : i32
    %c0_i32_0 = arith.constant 0 : i32
    %c0_i32_1 = arith.constant 0 : i32
    %c0_i32_2 = arith.constant 0 : i32
    return %c0_i32, %c0_i32_0, %c0_i32_1 : i32, i32, i32
  }
  func.func @transform_3(%arg0: i32) -> (i32, i32) {
    %c0_i32 = arith.constant 0 : i32
    %c0_i32_0 = arith.constant 0 : i32
    %c0_i32_1 = arith.constant 0 : i32
    return %c0_i32, %c0_i32_0 : i32, i32
  }
  func.func @transform_4(%arg0: i32) -> (i32, i32, i32) {
    %c0_i32 = arith.constant 0 : i32
    %c0_i32_0 = arith.constant 0 : i32
    %c0_i32_1 = arith.constant 0 : i32
    %c0_i32_2 = arith.constant 0 : i32
    return %c0_i32, %c0_i32_0, %c0_i32_1 : i32, i32, i32
  }
  func.func @transform_5(%arg0: i32) -> (i32, i32, i32) {
    %c0_i32 = arith.constant 0 : i32
    %c0_i32_0 = arith.constant 0 : i32
    %c0_i32_1 = arith.constant 0 : i32
    %c0_i32_2 = arith.constant 0 : i32
    return %c0_i32, %c0_i32_0, %c0_i32_1 : i32, i32, i32
  }
  func.func @transform_6(%arg0: i32) -> (i32, i32) {
    %c0_i32 = arith.constant 0 : i32
    %c0_i32_0 = arith.constant 0 : i32
    %c0_i32_1 = arith.constant 0 : i32
    return %c0_i32, %c0_i32_0 : i32, i32
  }
  func.func @transform_7(%arg0: i32) -> (i32, i32, i32) {
    %c0_i32 = arith.constant 0 : i32
    %c0_i32_0 = arith.constant 0 : i32
    %c0_i32_1 = arith.constant 0 : i32
    %c0_i32_2 = arith.constant 0 : i32
    return %c0_i32, %c0_i32_0, %c0_i32_1 : i32, i32, i32
  }
  func.func @transform_8(%arg0: i32) -> (i32, i32) {
    %c0_i32 = arith.constant 0 : i32
    %c0_i32_0 = arith.constant 0 : i32
    %c0_i32_1 = arith.constant 0 : i32
    return %c0_i32, %c0_i32_0 : i32, i32
  }
  func.func @transform_9(%arg0: i32) -> (i32, i32) {
    %c0_i32 = arith.constant 0 : i32
    %c0_i32_0 = arith.constant 0 : i32
    %c0_i32_1 = arith.constant 0 : i32
    return %c0_i32, %c0_i32_0 : i32, i32
  }
  func.func @transform_10(%arg0: i32) -> (i32, i32) {
    %c0_i32 = arith.constant 0 : i32
    %c0_i32_0 = arith.constant 0 : i32
    %c0_i32_1 = arith.constant 0 : i32
    return %c0_i32, %c0_i32_0 : i32, i32
  }
  func.func @transform_11(%arg0: i32) -> (i32, i32) {
    %c0_i32 = arith.constant 0 : i32
    %c0_i32_0 = arith.constant 0 : i32
    %c0_i32_1 = arith.constant 0 : i32
    return %c0_i32, %c0_i32_0 : i32, i32
  }
  func.func @transform_12(%arg0: i32) -> (i32, i32) {
    %c0_i32 = arith.constant 0 : i32
    %c0_i32_0 = arith.constant 0 : i32
    %c0_i32_1 = arith.constant 0 : i32
    return %c0_i32, %c0_i32_0 : i32, i32
  }
  func.func @transform_13(%arg0: i32) -> (i32, i32) {
    %c0_i32 = arith.constant 0 : i32
    %c0_i32_0 = arith.constant 0 : i32
    return %arg0, %c0_i32 : i32, i32
  }
}

</mosaic_0001>

<llo_original>
// kernel: net_forward.1
$region0: #{net_forward.1}
  #allocation0 [shape = 'u32[]', space=smem, size = 0x4, offset = 0x4, fixed_abs, tag = 'smem constant byte address 0x4 - core index']
  #allocation1 [shape = 'u32[144,128]{1,0:T(1,128)}', space=vmem, size = 0x12000, scoped, tag = 'internal scratch']
  %s0 = inlined_call_operand.vmem [shape: f32[32,8,96], index: 0, kind: input, shape index: {}]
  %s1 = inlined_call_operand.vmem [shape: f32[5,96,84], index: 1, kind: input, shape index: {}]
  %s2 = inlined_call_operand.vmem [shape: f32[5,96,84], index: 2, kind: input, shape index: {}]
  %s3 = inlined_call_operand.vmem [shape: f32[1,84], index: 3, kind: input, shape index: {}]
  %s4 = inlined_call_operand.vmem [shape: f32[5,84,80], index: 4, kind: input, shape index: {}]
  %s5 = inlined_call_operand.vmem [shape: f32[5,84,80], index: 5, kind: input, shape index: {}]
  %s6 = inlined_call_operand.vmem [shape: f32[1,80], index: 6, kind: input, shape index: {}]
  %s7 = inlined_call_operand.vmem [shape: f32[5,80,128], index: 7, kind: input, shape index: {}]
  %s8 = inlined_call_operand.vmem [shape: f32[1,128], index: 8, kind: input, shape index: {}]
  %s9 = inlined_call_operand.vmem [shape: f32[128,128], index: 9, kind: input, shape index: {}]
  %s10 = inlined_call_operand.vmem [shape: f32[1,128], index: 10, kind: input, shape index: {}]
  %s11 = inlined_call_operand.vmem [shape: f32[128,128], index: 11, kind: input, shape index: {}]
  %s12 = inlined_call_operand.vmem [shape: f32[1,128], index: 12, kind: input, shape index: {}]
  %s13 = inlined_call_operand.vmem [shape: f32[8,128], index: 13, kind: output, shape index: {}]
  %s14 = sld [smem:[#allocation0]]
  $region62: #{net_forward.1} parent=0
    _
  %s16 = ssub.s32 1, %s14
  %s17 = scalar_select 0, %s16, %s14
  // Predicated region
  $region2: #{net_forward.1} parent=0 // pred_check
    _
  $region3: #{net_forward.1} parent=0 // pred_check_branch
    %19 = sbr.rel (0) target = $region5
  $region4: #{net_forward.1} parent=0 // pred_region
    _
  $region5: #{net_forward.1} parent=0 // pred_fallthru
    _
  // Predicated region
  $region6: #{net_forward.1} parent=0 // pred_check
    _
  $region7: #{net_forward.1} parent=0 // pred_check_branch
    %21 = sbr.rel (0) target = $region9
  $region8: #{net_forward.1} parent=0 // pred_region
    _
  $region9: #{net_forward.1} parent=0 // pred_fallthru
    _
  // Predicated region
  $region10: #{net_forward.1} parent=0 // pred_check
    _
  $region11: #{net_forward.1} parent=0 // pred_check_branch
    %23 = sbr.rel (0) target = $region13
  $region12: #{net_forward.1} parent=0 // pred_region
    _
  $region13: #{net_forward.1} parent=0 // pred_fallthru
    _
  // Predicated region
  $region14: #{net_forward.1} parent=0 // pred_check
    _
  $region15: #{net_forward.1} parent=0 // pred_check_branch
    %25 = sbr.rel (0) target = $region17
  $region16: #{net_forward.1} parent=0 // pred_region
    _
  $region17: #{net_forward.1} parent=0 // pred_fallthru
    _
  // Predicated region
  $region18: #{net_forward.1} parent=0 // pred_check
    _
  $region19: #{net_forward.1} parent=0 // pred_check_branch
    %27 = sbr.rel (0) target = $region21
  $region20: #{net_forward.1} parent=0 // pred_region
    _
  $region21: #{net_forward.1} parent=0 // pred_fallthru
    _
  // Predicated region
  $region22: #{net_forward.1} parent=0 // pred_check
    _
  $region23: #{net_forward.1} parent=0 // pred_check_branch
    %29 = sbr.rel (0) target = $region25
  $region24: #{net_forward.1} parent=0 // pred_region
    _
  $region25: #{net_forward.1} parent=0 // pred_fallthru
    _
  // Predicated region
  $region26: #{net_forward.1} parent=0 // pred_check
    _
  $region27: #{net_forward.1} parent=0 // pred_check_branch
    %31 = sbr.rel (0) target = $region29
  $region28: #{net_forward.1} parent=0 // pred_region
    _
  $region29: #{net_forward.1} parent=0 // pred_fallthru
    _
  // Predicated region
  $region30: #{net_forward.1} parent=0 // pred_check
    _
  $region31: #{net_forward.1} parent=0 // pred_check_branch
    %33 = sbr.rel (0) target = $region33
  $region32: #{net_forward.1} parent=0 // pred_region
    _
  $region33: #{net_forward.1} parent=0 // pred_fallthru
    _
  // Predicated region
  $region34: #{net_forward.1} parent=0 // pred_check
    _
  $region35: #{net_forward.1} parent=0 // pred_check_branch
    %35 = sbr.rel (0) target = $region37
  $region36: #{net_forward.1} parent=0 // pred_region
    _
  $region37: #{net_forward.1} parent=0 // pred_fallthru
    _
  // Predicated region
  $region38: #{net_forward.1} parent=0 // pred_check
    _
  $region39: #{net_forward.1} parent=0 // pred_check_branch
    %37 = sbr.rel (0) target = $region41
  $region40: #{net_forward.1} parent=0 // pred_region
    _
  $region41: #{net_forward.1} parent=0 // pred_fallthru
    _
  // Predicated region
  $region42: #{net_forward.1} parent=0 // pred_check
    _
  $region43: #{net_forward.1} parent=0 // pred_check_branch
    %39 = sbr.rel (0) target = $region45
  $region44: #{net_forward.1} parent=0 // pred_region
    _
  $region45: #{net_forward.1} parent=0 // pred_fallthru
    _
  // Predicated region
  $region46: #{net_forward.1} parent=0 // pred_check
    _
  $region47: #{net_forward.1} parent=0 // pred_check_branch
    %41 = sbr.rel (0) target = $region49
  $region48: #{net_forward.1} parent=0 // pred_region
    _
  $region49: #{net_forward.1} parent=0 // pred_fallthru
    _
  // Predicated region
  $region50: #{net_forward.1} parent=0 // pred_check
    _
  $region51: #{net_forward.1} parent=0 // pred_check_branch
    %43 = sbr.rel (0) target = $region53
  $region52: #{net_forward.1} parent=0 // pred_region
    _
  $region53: #{net_forward.1} parent=0 // pred_fallthru
    _
  %v44 = vld [vmem:[%s0] sm:$0xff]
  %v45 = vld [vmem:[%s0 + $0x8] sm:$0xff]
  %v46 = vld [vmem:[%s0 + $0x10] sm:$0xff]
  %v47 = vld [vmem:[%s0 + $0x18] sm:$0xff]
  %v48 = vld [vmem:[%s0 + $0x20] sm:$0xff]
  %v49 = vld [vmem:[%s0 + $0x28] sm:$0xff]
  %v50 = vld [vmem:[%s0 + $0x30] sm:$0xff]
  %v51 = vld [vmem:[%s0 + $0x38] sm:$0xff]
  %v52 = vld [vmem:[%s0 + $0x40] sm:$0xff]
  %v53 = vld [vmem:[%s0 + $0x48] sm:$0xff]
  %v54 = vld [vmem:[%s0 + $0x50] sm:$0xff]
  %v55 = vld [vmem:[%s0 + $0x58] sm:$0xff]
  %v56 = vld [vmem:[%s0 + $0x60] sm:$0xff]
  %v57 = vld [vmem:[%s0 + $0x68] sm:$0xff]
  %v58 = vld [vmem:[%s0 + $0x70] sm:$0xff]
  %v59 = vld [vmem:[%s0 + $0x78] sm:$0xff]
  %v60 = vld [vmem:[%s0 + $0x80] sm:$0xff]
  %v61 = vld [vmem:[%s0 + $0x88] sm:$0xff]
  %v62 = vld [vmem:[%s0 + $0x90] sm:$0xff]
  %v63 = vld [vmem:[%s0 + $0x98] sm:$0xff]
  %v64 = vld [vmem:[%s0 + $0xa0] sm:$0xff]
  %v65 = vld [vmem:[%s0 + $0xa8] sm:$0xff]
  %v66 = vld [vmem:[%s0 + $0xb0] sm:$0xff]
  %v67 = vld [vmem:[%s0 + $0xb8] sm:$0xff]
  %v68 = vld [vmem:[%s0 + $0xc0] sm:$0xff]
  %v69 = vld [vmem:[%s0 + $0xc8] sm:$0xff]
  %v70 = vld [vmem:[%s0 + $0xd0] sm:$0xff]
  %v71 = vld [vmem:[%s0 + $0xd8] sm:$0xff]
  %v72 = vld [vmem:[%s0 + $0xe0] sm:$0xff]
  %v73 = vld [vmem:[%s0 + $0xe8] sm:$0xff]
  %v74 = vld [vmem:[%s0 + $0xf0] sm:$0xff]
  %v75 = vld [vmem:[%s0 + $0xf8] sm:$0xff]
  %v76 = vld [vmem:[%s1] sm:$0xff]
  %v77 = vld [vmem:[%s1 + $0x8] sm:$0xff]
  %v78 = vld [vmem:[%s1 + $0x10] sm:$0xff]
  %v79 = vld [vmem:[%s1 + $0x18] sm:$0xff]
  %v80 = vld [vmem:[%s1 + $0x20] sm:$0xff]
  %v81 = vld [vmem:[%s1 + $0x28] sm:$0xff]
  %v82 = vld [vmem:[%s1 + $0x30] sm:$0xff]
  %v83 = vld [vmem:[%s1 + $0x38] sm:$0xff]
  %v84 = vld [vmem:[%s1 + $0x40] sm:$0xff]
  %v85 = vld [vmem:[%s1 + $0x48] sm:$0xff]
  %v86 = vld [vmem:[%s1 + $0x50] sm:$0xff]
  %v87 = vld [vmem:[%s1 + $0x58] sm:$0xff]
  %s88 = scalar_lea.vmem %s1, 96
  %v89 = vld [vmem:[%s88] sm:$0xff]
  %v90 = vld [vmem:[%s88 + $0x8] sm:$0xff]
  %v91 = vld [vmem:[%s88 + $0x10] sm:$0xff]
  %v92 = vld [vmem:[%s88 + $0x18] sm:$0xff]
  %v93 = vld [vmem:[%s88 + $0x20] sm:$0xff]
  %v94 = vld [vmem:[%s88 + $0x28] sm:$0xff]
  %v95 = vld [vmem:[%s88 + $0x30] sm:$0xff]
  %v96 = vld [vmem:[%s88 + $0x38] sm:$0xff]
  %v97 = vld [vmem:[%s88 + $0x40] sm:$0xff]
  %v98 = vld [vmem:[%s88 + $0x48] sm:$0xff]
  %v99 = vld [vmem:[%s88 + $0x50] sm:$0xff]
  %v100 = vld [vmem:[%s88 + $0x58] sm:$0xff]
  %vm101 = vcmask 785408
  %v103 = vsel %vm101, %v45, 0
  %v106 = vsel %vm101, %v46, 0
  %v109 = vsel %vm101, %v47, 0
  %v112 = vsel %vm101, %v48, 0
  %v115 = vsel %vm101, %v49, 0
  %v118 = vsel %vm101, %v50, 0
  %v121 = vsel %vm101, %v51, 0
  %v124 = vsel %vm101, %v52, 0
  %v127 = vsel %vm101, %v53, 0
  %v130 = vsel %vm101, %v54, 0
  %v133 = vsel %vm101, %v55, 0
  %v136 = vsel %vm101, %v56, 0
  %v139 = vsel %vm101, %v57, 0
  %v142 = vsel %vm101, %v58, 0
  %v145 = vsel %vm101, %v59, 0
  %v148 = vsel %vm101, %v60, 0
  %v151 = vsel %vm101, %v61, 0
  %v154 = vsel %vm101, %v62, 0
  %v157 = vsel %vm101, %v63, 0
  %v160 = vsel %vm101, %v64, 0
  %v163 = vsel %vm101, %v65, 0
  %v166 = vsel %vm101, %v66, 0
  %v169 = vsel %vm101, %v67, 0
  %v172 = vsel %vm101, %v68, 0
  %v175 = vsel %vm101, %v69, 0
  %v178 = vsel %vm101, %v70, 0
  %v181 = vsel %vm101, %v71, 0
  %v184 = vsel %vm101, %v72, 0
  %186 = vmatprep.subr.mxu0 0.0
  %187 = vmatpush1.msra.mxu0 %v89
  %188 = vmatprep.subr.mxu0 0.0
  %189 = vmatpush1.msra.mxu0 %v90
  %190 = vmatprep.subr.mxu0 0.0
  %191 = vmatpush1.msra.mxu0 %v91
  %192 = vmatprep.subr.mxu0 0.0
  %193 = vmatpush1.msra.mxu0 %v92
  %194 = vmatprep.subr.mxu0 0.0
  %195 = vmatpush1.msra.mxu0 %v93
  %196 = vmatprep.subr.mxu0 0.0
  %197 = vmatpush1.msra.mxu0 %v94
  %198 = vmatprep.subr.mxu0 0.0
  %199 = vmatpush1.msra.mxu0 %v95
  %200 = vmatprep.subr.mxu0 0.0
  %201 = vmatpush1.msra.mxu0 %v96
  %202 = vmatprep.subr.mxu0 0.0
  %203 = vmatpush1.msra.mxu0 %v97
  %204 = vmatprep.subr.mxu0 0.0
  %205 = vmatpush1.msra.mxu0 %v98
  %206 = vmatprep.subr.mxu0 0.0
  %207 = vmatpush1.msra.mxu0 %v99
  %208 = vmatprep.subr.mxu0 0.0
  %209 = vmatpush1.msra.mxu0 %v100
  %210 = vmatprep.subr.mxu0 0.0
  %211 = vmatpush1.msra.mxu0 0.0
  %212 = vmatprep.subr.mxu0 0.0
  %213 = vmatpush1.msra.mxu0 0.0
  %214 = vmatprep.subr.mxu0 0.0
  %215 = vmatpush1.msra.mxu0 0.0
  %216 = vmatprep.subr.mxu0 0.0
  %217 = vmatpush1.msra.mxu0 0.0
  %218 = vmatprep.subr.mxu0 0.0
  %219 = vmatpush1.msra.mxu0 0.0
  %220 = vmatprep.subr.mxu0 0.0
  %221 = vmatpush1.msra.mxu0 0.0
  %222 = vmatprep.subr.mxu0 0.0
  %223 = vmatpush1.msra.mxu0 0.0
  %224 = vmatprep.subr.mxu0 0.0
  %225 = vmatpush1.msra.mxu0 0.0
  %226 = vmatprep.subr.mxu0 0.0
  %227 = vmatpush1.msra.mxu0 0.0
  %228 = vmatprep.subr.mxu0 0.0
  %229 = vmatpush1.msra.mxu0 0.0
  %230 = vmatprep.subr.mxu0 0.0
  %231 = vmatpush1.msra.mxu0 0.0
  %232 = vmatprep.subr.mxu0 0.0
  %233 = vmatpush1.msra.mxu0 0.0
  %234 = vmatprep.subr.mxu0 0.0
  %235 = vmatpush1.msra.mxu0 0.0
  %236 = vmatprep.subr.mxu0 0.0
  %237 = vmatpush1.msra.mxu0 0.0
  %238 = vmatprep.subr.mxu0 0.0
  %239 = vmatpush1.msra.mxu0 0.0
  %240 = vmatprep.subr.mxu0 0.0
  %241 = vmatpush1.msra.mxu0 0.0
  %242 = vmatprep.subr.mxu0 0.0
  %243 = vmatpush1.msra.mxu0 0.0
  %244 = vmatprep.subr.mxu0 0.0
  %245 = vmatpush1.msra.mxu0 0.0
  %246 = vmatprep.subr.mxu0 0.0
  %247 = vmatpush1.msra.mxu0 0.0
  %248 = vmatprep.subr.mxu0 0.0
  %249 = vmatpush1.msra.mxu0 0.0
  %250 = vmatprep.mubr.f32.mxu0 0.0
  %251 = vmatmul.mubr.f32.gmra.mrb[0].mxu0 %v103
  %v252 = vpop.f32.mrb[0].mxu0
  %v253 = vadd.f32 0.0, %v252
  %v254 = vpop.f32.mrb[0].mxu0
  %255 = vmatprep.mubr.f32.mxu0 0.0
  %256 = vmatmul.mubr.f32.gmra.mrb[0].mxu0 %v106
  %v257 = vpop.f32.mrb[0].mxu0
  %v258 = vadd.f32 0.0, %v257
  %v259 = vpop.f32.mrb[0].mxu0
  %260 = vmatprep.mubr.f32.mxu0 0.0
  %261 = vmatmul.mubr.f32.gmra.mrb[0].mxu0 %v109
  %v262 = vpop.f32.mrb[0].mxu0
  %v263 = vadd.f32 0.0, %v262
  %v264 = vpop.f32.mrb[0].mxu0
  %265 = vmatprep.mubr.f32.mxu0 0.0
  %266 = vmatmul.mubr.f32.gmra.mrb[0].mxu0 %v112
  %v267 = vpop.f32.mrb[0].mxu0
  %v268 = vadd.f32 0.0, %v267
  %v269 = vpop.f32.mrb[0].mxu0
  %270 = vmatprep.mubr.f32.mxu0 0.0
  %271 = vmatmul.mubr.f32.gmra.mrb[0].mxu0 %v115
  %v272 = vpop.f32.mrb[0].mxu0
  %v273 = vadd.f32 0.0, %v272
  %v274 = vpop.f32.mrb[0].mxu0
  %275 = vmatprep.mubr.f32.mxu0 0.0
  %276 = vmatmul.mubr.f32.gmra.mrb[0].mxu0 %v118
  %v277 = vpop.f32.mrb[0].mxu0
  %v278 = vadd.f32 0.0, %v277
  %v279 = vpop.f32.mrb[0].mxu0
  %280 = vmatprep.mubr.f32.mxu0 0.0
  %281 = vmatmul.mubr.f32.gmra.mrb[0].mxu0 %v121
  %v282 = vpop.f32.mrb[0].mxu0
  %v283 = vadd.f32 0.0, %v282
  %v284 = vpop.f32.mrb[0].mxu0
  %285 = vmatprep.mubr.f32.mxu0 0.0
  %286 = vmatmul.mubr.f32.gmra.mrb[0].mxu0 %v124
  %v287 = vpop.f32.mrb[0].mxu0
  %v288 = vadd.f32 0.0, %v287
  %v289 = vpop.f32.mrb[0].mxu0
  %290 = vmatprep.mubr.f32.mxu0 0.0
  %291 = vmatmul.mubr.f32.gmra.mrb[0].mxu0 %v127
  %v292 = vpop.f32.mrb[0].mxu0
  %v293 = vadd.f32 0.0, %v292
  %v294 = vpop.f32.mrb[0].mxu0
  %295 = vmatprep.mubr.f32.mxu0 0.0
  %296 = vmatmul.mubr.f32.gmra.mrb[0].mxu0 %v130
  %v297 = vpop.f32.mrb[0].mxu0
  %v298 = vadd.f32 0.0, %v297
  %v299 = vpop.f32.mrb[0].mxu0
  %300 = vmatprep.mubr.f32.mxu0 0.0
  %301 = vmatmul.mubr.f32.gmra.mrb[0].mxu0 %v133
  %v302 = vpop.f32.mrb[0].mxu0
  %v303 = vadd.f32 0.0, %v302
  %v304 = vpop.f32.mrb[0].mxu0
  %305 = vmatprep.mubr.f32.mxu0 0.0
  %306 = vmatmul.mubr.f32.gmra.mrb[0].mxu0 %v136
  %v307 = vpop.f32.mrb[0].mxu0
  %v308 = vadd.f32 0.0, %v307
  %v309 = vpop.f32.mrb[0].mxu0
  %310 = vmatprep.mubr.f32.mxu0 0.0
  %311 = vmatmul.mubr.f32.gmra.mrb[0].mxu0 %v139
  %v312 = vpop.f32.mrb[0].mxu0
  %v313 = vadd.f32 0.0, %v312
  %v314 = vpop.f32.mrb[0].mxu0
  %315 = vmatprep.mubr.f32.mxu0 0.0
  %316 = vmatmul.mubr.f32.gmra.mrb[0].mxu0 %v142
  %v317 = vpop.f32.mrb[0].mxu0
  %v318 = vadd.f32 0.0, %v317
  %v319 = vpop.f32.mrb[0].mxu0
  %320 = vmatprep.mubr.f32.mxu0 0.0
  %321 = vmatmul.mubr.f32.gmra.mrb[0].mxu0 %v145
  %v322 = vpop.f32.mrb[0].mxu0
  %v323 = vadd.f32 0.0, %v322
  %v324 = vpop.f32.mrb[0].mxu0
  %325 = vmatprep.mubr.f32.mxu0 0.0
  %326 = vmatmul.mubr.f32.gmra.mrb[0].mxu0 %v148
  %v327 = vpop.f32.mrb[0].mxu0
  %v328 = vadd.f32 0.0, %v327
  %v329 = vpop.f32.mrb[0].mxu0
  %330 = vmatprep.mubr.f32.mxu0 0.0
  %331 = vmatmul.mubr.f32.gmra.mrb[0].mxu0 %v151
  %v332 = vpop.f32.mrb[0].mxu0
  %v333 = vadd.f32 0.0, %v332
  %v334 = vpop.f32.mrb[0].mxu0
  %335 = vmatprep.mubr.f32.mxu0 0.0
  %336 = vmatmul.mubr.f32.gmra.mrb[0].mxu0 %v154
  %v337 = vpop.f32.mrb[0].mxu0
  %v338 = vadd.f32 0.0, %v337
  %v339 = vpop.f32.mrb[0].mxu0
  %340 = vmatprep.mubr.f32.mxu0 0.0
  %341 = vmatmul.mubr.f32.gmra.mrb[0].mxu0 %v157
  %v342 = vpop.f32.mrb[0].mxu0
  %v343 = vadd.f32 0.0, %v342
  %v344 = vpop.f32.mrb[0].mxu0
  %345 = vmatprep.mubr.f32.mxu0 0.0
  %346 = vmatmul.mubr.f32.gmra.mrb[0].mxu0 %v160
  %v347 = vpop.f32.mrb[0].mxu0
  %v348 = vadd.f32 0.0, %v347
  %v349 = vpop.f32.mrb[0].mxu0
  %350 = vmatprep.mubr.f32.mxu0 0.0
  %351 = vmatmul.mubr.f32.gmra.mrb[0].mxu0 %v163
  %v352 = vpop.f32.mrb[0].mxu0
  %v353 = vadd.f32 0.0, %v352
  %v354 = vpop.f32.mrb[0].mxu0
  %355 = vmatprep.mubr.f32.mxu0 0.0
  %356 = vmatmul.mubr.f32.gmra.mrb[0].mxu0 %v166
  %v357 = vpop.f32.mrb[0].mxu0
  %v358 = vadd.f32 0.0, %v357
  %v359 = vpop.f32.mrb[0].mxu0
  %360 = vmatprep.mubr.f32.mxu0 0.0
  %361 = vmatmul.mubr.f32.gmra.mrb[0].mxu0 %v169
  %v362 = vpop.f32.mrb[0].mxu0
  %v363 = vadd.f32 0.0, %v362
  %v364 = vpop.f32.mrb[0].mxu0
  %365 = vmatprep.mubr.f32.mxu0 0.0
  %366 = vmatmul.mubr.f32.gmra.mrb[0].mxu0 %v172
  %v367 = vpop.f32.mrb[0].mxu0
  %v368 = vadd.f32 0.0, %v367
  %v369 = vpop.f32.mrb[0].mxu0
  %370 = vmatprep.mubr.f32.mxu0 0.0
  %371 = vmatmul.mubr.f32.gmra.mrb[0].mxu0 %v175
  %v372 = vpop.f32.mrb[0].mxu0
  %v373 = vadd.f32 0.0, %v372
  %v374 = vpop.f32.mrb[0].mxu0
  %375 = vmatprep.mubr.f32.mxu0 0.0
  %376 = vmatmul.mubr.f32.gmra.mrb[0].mxu0 %v178
  %v377 = vpop.f32.mrb[0].mxu0
  %v378 = vadd.f32 0.0, %v377
  %v379 = vpop.f32.mrb[0].mxu0
  %380 = vmatprep.mubr.f32.mxu0 0.0
  %381 = vmatmul.mubr.f32.gmra.mrb[0].mxu0 %v181
  %v382 = vpop.f32.mrb[0].mxu0
  %v383 = vadd.f32 0.0, %v382
  %v384 = vpop.f32.mrb[0].mxu0
  %385 = vmatprep.mubr.f32.mxu0 0.0
  %386 = vmatmul.mubr.f32.gmra.mrb[0].mxu0 %v184
  %v387 = vpop.f32.mrb[0].mxu0
  %v388 = vadd.f32 0.0, %v387
  %v389 = vpop.f32.mrb[0].mxu0
  %390 = vdwg.mxu0
  %v392 = vsel %vm101, %v44, 0
  %394 = vmatprep.subr.mxu0 0.0
  %395 = vmatpush1.msra.mxu0 %v76
  %396 = vmatprep.subr.mxu0 0.0
  %397 = vmatpush1.msra.mxu0 %v77
  %398 = vmatprep.subr.mxu0 0.0
  %399 = vmatpush1.msra.mxu0 %v78
  %400 = vmatprep.subr.mxu0 0.0
  %401 = vmatpush1.msra.mxu0 %v79
  %402 = vmatprep.subr.mxu0 0.0
  %403 = vmatpush1.msra.mxu0 %v80
  %404 = vmatprep.subr.mxu0 0.0
  %405 = vmatpush1.msra.mxu0 %v81
  %406 = vmatprep.subr.mxu0 0.0
  %407 = vmatpush1.msra.mxu0 %v82
  %408 = vmatprep.subr.mxu0 0.0
  %409 = vmatpush1.msra.mxu0 %v83
  %410 = vmatprep.subr.mxu0 0.0
  %411 = vmatpush1.msra.mxu0 %v84
  %412 = vmatprep.subr.mxu0 0.0
  %413 = vmatpush1.msra.mxu0 %v85
  %414 = vmatprep.subr.mxu0 0.0
  %415 = vmatpush1.msra.mxu0 %v86
  %416 = vmatprep.subr.mxu0 0.0
  %417 = vmatpush1.msra.mxu0 %v87
  %418 = vmatprep.subr.mxu0 0.0
  %419 = vmatpush1.msra.mxu0 0.0
  %420 = vmatprep.subr.mxu0 0.0
  %421 = vmatpush1.msra.mxu0 0.0
  %422 = vmatprep.subr.mxu0 0.0
  %423 = vmatpush1.msra.mxu0 0.0
  %424 = vmatprep.subr.mxu0 0.0
  %425 = vmatpush1.msra.mxu0 0.0
  %426 = vmatprep.subr.mxu0 0.0
  %427 = vmatpush1.msra.mxu0 0.0
  %428 = vmatprep.subr.mxu0 0.0
  %429 = vmatpush1.msra.mxu0 0.0
  %430 = vmatprep.subr.mxu0 0.0
  %431 = vmatpush1.msra.mxu0 0.0
  %432 = vmatprep.subr.mxu0 0.0
  %433 = vmatpush1.msra.mxu0 0.0
  %434 = vmatprep.subr.mxu0 0.0
  %435 = vmatpush1.msra.mxu0 0.0
  %436 = vmatprep.subr.mxu0 0.0
  %437 = vmatpush1.msra.mxu0 0.0
  %438 = vmatprep.subr.mxu0 0.0
  %439 = vmatpush1.msra.mxu0 0.0
  %440 = vmatprep.subr.mxu0 0.0
  %441 = vmatpush1.msra.mxu0 0.0
  %442 = vmatprep.subr.mxu0 0.0
  %443 = vmatpush1.msra.mxu0 0.0
  %444 = vmatprep.subr.mxu0 0.0
  %445 = vmatpush1.msra.mxu0 0.0
  %446 = vmatprep.subr.mxu0 0.0
  %447 = vmatpush1.msra.mxu0 0.0
  %448 = vmatprep.subr.mxu0 0.0
  %449 = vmatpush1.msra.mxu0 0.0
  %450 = vmatprep.subr.mxu0 0.0
  %451 = vmatpush1.msra.mxu0 0.0
  %452 = vmatprep.subr.mxu0 0.0
  %453 = vmatpush1.msra.mxu0 0.0
  %454 = vmatprep.subr.mxu0 0.0
  %455 = vmatpush1.msra.mxu0 0.0
  %456 = vmatprep.subr.mxu0 0.0
  %457 = vmatpush1.msra.mxu0 0.0
  %458 = vmatprep.mubr.f32.mxu0 0.0
  %459 = vmatmul.mubr.f32.gmra.mrb[0].mxu0 %v392
  %v460 = vpop.f32.mrb[0].mxu0
  %v461 = vadd.f32 %v253, %v460
  %v462 = vpop.f32.mrb[0].mxu0
  %463 = vmatprep.mubr.f32.mxu0 0.0
  %464 = vmatmul.mubr.f32.gmra.mrb[0].mxu0 %v103
  %v465 = vpop.f32.mrb[0].mxu0
  %v466 = vadd.f32 %v258, %v465
  %v467 = vpop.f32.mrb[0].mxu0
  %468 = vmatprep.mubr.f32.mxu0 0.0
  %469 = vmatmul.mubr.f32.gmra.mrb[0].mxu0 %v106
  %v470 = vpop.f32.mrb[0].mxu0
  %v471 = vadd.f32 %v263, %v470
  %v472 = vpop.f32.mrb[0].mxu0
  %473 = vmatprep.mubr.f32.mxu0 0.0
  %474 = vmatmul.mubr.f32.gmra.mrb[0].mxu0 %v109
  %v475 = vpop.f32.mrb[0].mxu0
  %v476 = vadd.f32 %v268, %v475
  %v477 = vpop.f32.mrb[0].mxu0
  %478 = vmatprep.mubr.f32.mxu0 0.0
  %479 = vmatmul.mubr.f32.gmra.mrb[0].mxu0 %v112
  %v480 = vpop.f32.mrb[0].mxu0
  %v481 = vadd.f32 %v273, %v480
  %v482 = vpop.f32.mrb[0].mxu0
  %483 = vmatprep.mubr.f32.mxu0 0.0
  %484 = vmatmul.mubr.f32.gmra.mrb[0].mxu0 %v115
  %v485 = vpop.f32.mrb[0].mxu0
  %v486 = vadd.f32 %v278, %v485
  %v487 = vpop.f32.mrb[0].mxu0
  %488 = vmatprep.mubr.f32.mxu0 0.0
  %489 = vmatmul.mubr.f32.gmra.mrb[0].mxu0 %v118
  %v490 = vpop.f32.mrb[0].mxu0
  %v491 = vadd.f32 %v283, %v490
  %v492 = vpop.f32.mrb[0].mxu0
  %493 = vmatprep.mubr.f32.mxu0 0.0
  %494 = vmatmul.mubr.f32.gmra.mrb[0].mxu0 %v121
  %v495 = vpop.f32.mrb[0].mxu0
  %v496 = vadd.f32 %v288, %v495
  %v497 = vpop.f32.mrb[0].mxu0
  %498 = vmatprep.mubr.f32.mxu0 0.0
  %499 = vmatmul.mubr.f32.gmra.mrb[0].mxu0 %v124
  %v500 = vpop.f32.mrb[0].mxu0
  %v501 = vadd.f32 %v293, %v500
  %v502 = vpop.f32.mrb[0].mxu0
  %503 = vmatprep.mubr.f32.mxu0 0.0
  %504 = vmatmul.mubr.f32.gmra.mrb[0].mxu0 %v127
  %v505 = vpop.f32.mrb[0].mxu0
  %v506 = vadd.f32 %v298, %v505
  %v507 = vpop.f32.mrb[0].mxu0
  %508 = vmatprep.mubr.f32.mxu0 0.0
  %509 = vmatmul.mubr.f32.gmra.mrb[0].mxu0 %v130
  %v510 = vpop.f32.mrb[0].mxu0
  %v511 = vadd.f32 %v303, %v510
  %v512 = vpop.f32.mrb[0].mxu0
  %513 = vmatprep.mubr.f32.mxu0 0.0
  %514 = vmatmul.mubr.f32.gmra.mrb[0].mxu0 %v133
  %v515 = vpop.f32.mrb[0].mxu0
  %v516 = vadd.f32 %v308, %v515
  %v517 = vpop.f32.mrb[0].mxu0
  %518 = vmatprep.mubr.f32.mxu0 0.0
  %519 = vmatmul.mubr.f32.gmra.mrb[0].mxu0 %v136
  %v520 = vpop.f32.mrb[0].mxu0
  %v521 = vadd.f32 %v313, %v520
  %v522 = vpop.f32.mrb[0].mxu0
  %523 = vmatprep.mubr.f32.mxu0 0.0
  %524 = vmatmul.mubr.f32.gmra.mrb[0].mxu0 %v139
  %v525 = vpop.f32.mrb[0].mxu0
  %v526 = vadd.f32 %v318, %v525
  %v527 = vpop.f32.mrb[0].mxu0
  %528 = vmatprep.mubr.f32.mxu0 0.0
  %529 = vmatmul.mubr.f32.gmra.mrb[0].mxu0 %v142
  %v530 = vpop.f32.mrb[0].mxu0
  %v531 = vadd.f32 %v323, %v530
  %v532 = vpop.f32.mrb[0].mxu0
  %533 = vmatprep.mubr.f32.mxu0 0.0
  %534 = vmatmul.mubr.f32.gmra.mrb[0].mxu0 %v145
  %v535 = vpop.f32.mrb[0].mxu0
  %v536 = vadd.f32 %v328, %v535
  %v537 = vpop.f32.mrb[0].mxu0
  %538 = vmatprep.mubr.f32.mxu0 0.0
  %539 = vmatmul.mubr.f32.gmra.mrb[0].mxu0 %v148
  %v540 = vpop.f32.mrb[0].mxu0
  %v541 = vadd.f32 %v333, %v540
  %v542 = vpop.f32.mrb[0].mxu0
  %543 = vmatprep.mubr.f32.mxu0 0.0
  %544 = vmatmul.mubr.f32.gmra.mrb[0].mxu0 %v151
  %v545 = vpop.f32.mrb[0].mxu0
  %v546 = vadd.f32 %v338, %v545
  %v547 = vpop.f32.mrb[0].mxu0
  %548 = vmatprep.mubr.f32.mxu0 0.0
  %549 = vmatmul.mubr.f32.gmra.mrb[0].mxu0 %v154
  %v550 = vpop.f32.mrb[0].mxu0
  %v551 = vadd.f32 %v343, %v550
  %v552 = vpop.f32.mrb[0].mxu0
  %553 = vmatprep.mubr.f32.mxu0 0.0
  %554 = vmatmul.mubr.f32.gmra.mrb[0].mxu0 %v157
  %v555 = vpop.f32.mrb[0].mxu0
  %v556 = vadd.f32 %v348, %v555
  %v557 = vpop.f32.mrb[0].mxu0
  %558 = vmatprep.mubr.f32.mxu0 0.0
  %559 = vmatmul.mubr.f32.gmra.mrb[0].mxu0 %v160
  %v560 = vpop.f32.mrb[0].mxu0
  %v561 = vadd.f32 %v353, %v560
  %v562 = vpop.f32.mrb[0].mxu0
  %563 = vmatprep.mubr.f32.mxu0 0.0
  %564 = vmatmul.mubr.f32.gmra.mrb[0].mxu0 %v163
  %v565 = vpop.f32.mrb[0].mxu0
  %v566 = vadd.f32 %v358, %v565
  %v567 = vpop.f32.mrb[0].mxu0
  %568 = vmatprep.mubr.f32.mxu0 0.0
  %569 = vmatmul.mubr.f32.gmra.mrb[0].mxu0 %v166
  %v570 = vpop.f32.mrb[0].mxu0
  %v571 = vadd.f32 %v363, %v570
  %v572 = vpop.f32.mrb[0].mxu0
  %573 = vmatprep.mubr.f32.mxu0 0.0
  %574 = vmatmul.mubr.f32.gmra.mrb[0].mxu0 %v169
  %v575 = vpop.f32.mrb[0].mxu0
  %v576 = vadd.f32 %v368, %v575
  %v577 = vpop.f32.mrb[0].mxu0
  %578 = vmatprep.mubr.f32.mxu0 0.0
  %579 = vmatmul.mubr.f32.gmra.mrb[0].mxu0 %v172
  %v580 = vpop.f32.mrb[0].mxu0
  %v581 = vadd.f32 %v373, %v580
  %v582 = vpop.f32.mrb[0].mxu0
  %583 = vmatprep.mubr.f32.mxu0 0.0
  %584 = vmatmul.mubr.f32.gmra.mrb[0].mxu0 %v175
  %v585 = vpop.f32.mrb[0].mxu0
  %v586 = vadd.f32 %v378, %v585
  %v587 = vpop.f32.mrb[0].mxu0
  %588 = vmatprep.mubr.f32.mxu0 0.0
  %589 = vmatmul.mubr.f32.gmra.mrb[0].mxu0 %v178
  %v590 = vpop.f32.mrb[0].mxu0
  %v591 = vadd.f32 %v383, %v590
  %v592 = vpop.f32.mrb[0].mxu0
  %593 = vmatprep.mubr.f32.mxu0 0.0
  %594 = vmatmul.mubr.f32.gmra.mrb[0].mxu0 %v181
  %v595 = vpop.f32.mrb[0].mxu0
  %v596 = vadd.f32 %v388, %v595
  %v597 = vpop.f32.mrb[0].mxu0
  %598 = vdwg.mxu0
  %s599 = scalar_lea.vmem %s1, 192
  %v600 = vld [vmem:[%s599] sm:$0xff]
  %v601 = vld [vmem:[%s599 + $0x8] sm:$0xff]
  %v602 = vld [vmem:[%s599 + $0x10] sm:$0xff]
  %v603 = vld [vmem:[%s599 + $0x18] sm:$0xff]
  %v604 = vld [vmem:[%s599 + $0x20] sm:$0xff]
  %v605 = vld [vmem:[%s599 + $0x28] sm:$0xff]
  %v606 = vld [vmem:[%s599 + $0x30] sm:$0xff]
  %v607 = vld [vmem:[%s599 + $0x38] sm:$0xff]
  %v608 = vld [vmem:[%s599 + $0x40] sm:$0xff]
  %v609 = vld [vmem:[%s599 + $0x48] sm:$0xff]
  %v610 = vld [vmem:[%s599 + $0x50] sm:$0xff]
  %v611 = vld [vmem:[%s599 + $0x58] sm:$0xff]
  %v613 = vsel %vm101, %v73, 0
  %615 = vmatprep.subr.mxu0 0.0
  %616 = vmatpush1.msra.mxu0 %v600
  %617 = vmatprep.subr.mxu0 0.0
  %618 = vmatpush1.msra.mxu0 %v601
  %619 = vmatprep.subr.mxu0 0.0
  %620 = vmatpush1.msra.mxu0 %v602
  %621 = vmatprep.subr.mxu0 0.0
  %622 = vmatpush1.msra.mxu0 %v603
  %623 = vmatprep.subr.mxu0 0.0
  %624 = vmatpush1.msra.mxu0 %v604
  %625 = vmatprep.subr.mxu0 0.0
  %626 = vmatpush1.msra.mxu0 %v605
  %627 = vmatprep.subr.mxu0 0.0
  %628 = vmatpush1.msra.mxu0 %v606
  %629 = vmatprep.subr.mxu0 0.0
  %630 = vmatpush1.msra.mxu0 %v607
  %631 = vmatprep.subr.mxu0 0.0
  %632 = vmatpush1.msra.mxu0 %v608
  %633 = vmatprep.subr.mxu0 0.0
  %634 = vmatpush1.msra.mxu0 %v609
  %635 = vmatprep.subr.mxu0 0.0
  %636 = vmatpush1.msra.mxu0 %v610
  %637 = vmatprep.subr.mxu0 0.0
  %638 = vmatpush1.msra.mxu0 %v611
  %639 = vmatprep.subr.mxu0 0.0
  %640 = vmatpush1.msra.mxu0 0.0
  %641 = vmatprep.subr.mxu0 0.0
  %642 = vmatpush1.msra.mxu0 0.0
  %643 = vmatprep.subr.mxu0 0.0
  %644 = vmatpush1.msra.mxu0 0.0
  %645 = vmatprep.subr.mxu0 0.0
  %646 = vmatpush1.msra.mxu0 0.0
  %647 = vmatprep.subr.mxu0 0.0
  %648 = vmatpush1.msra.mxu0 0.0
  %649 = vmatprep.subr.mxu0 0.0
  %650 = vmatpush1.msra.mxu0 0.0
  %651 = vmatprep.subr.mxu0 0.0
  %652 = vmatpush1.msra.mxu0 0.0
  %653 = vmatprep.subr.mxu0 0.0
  %654 = vmatpush1.msra.mxu0 0.0
  %655 = vmatprep.subr.mxu0 0.0
  %656 = vmatpush1.msra.mxu0 0.0
  %657 = vmatprep.subr.mxu0 0.0
  %658 = vmatpush1.msra.mxu0 0.0
  %659 = vmatprep.subr.mxu0 0.0
  %660 = vmatpush1.msra.mxu0 0.0
  %661 = vmatprep.subr.mxu0 0.0
  %662 = vmatpush1.msra.mxu0 0.0
  %663 = vmatprep.subr.mxu0 0.0
  %664 = vmatpush1.msra.mxu0 0.0
  %665 = vmatprep.subr.mxu0 0.0
  %666 = vmatpush1.msra.mxu0 0.0
  %667 = vmatprep.subr.mxu0 0.0
  %668 = vmatpush1.msra.mxu0 0.0
  %669 = vmatprep.subr.mxu0 0.0
  %670 = vmatpush1.msra.mxu0 0.0
  %671 = vmatprep.subr.mxu0 0.0
  %672 = vmatpush1.msra.mxu0 0.0
  %673 = vmatprep.subr.mxu0 0.0
  %674 = vmatpush1.msra.mxu0 0.0
  %675 = vmatprep.subr.mxu0 0.0
  %676 = vmatpush1.msra.mxu0 0.0
  %677 = vmatprep.subr.mxu0 0.0
  %678 = vmatpush1.msra.mxu0 0.0
  %679 = vmatprep.mubr.f32.mxu0 0.0
  %680 = vmatmul.mubr.f32.gmra.mrb[0].mxu0 %v106
  %v681 = vpop.f32.mrb[0].mxu0
  %v682 = vadd.f32 0.0, %v681
  %v683 = vpop.f32.mrb[0].mxu0
  %684 = vmatprep.mubr.f32.mxu0 0.0
  %685 = vmatmul.mubr.f32.gmra.mrb[0].mxu0 %v109
  %v686 = vpop.f32.mrb[0].mxu0
  %v687 = vadd.f32 0.0, %v686
  %v688 = vpop.f32.mrb[0].mxu0
  %689 = vmatprep.mubr.f32.mxu0 0.0
  %690 = vmatmul.mubr.f32.gmra.mrb[0].mxu0 %v112
  %v691 = vpop.f32.mrb[0].mxu0
  %v692 = vadd.f32 0.0, %v691
  %v693 = vpop.f32.mrb[0].mxu0
  %694 = vmatprep.mubr.f32.mxu0 0.0
  %695 = vmatmul.mubr.f32.gmra.mrb[0].mxu0 %v115
  %v696 = vpop.f32.mrb[0].mxu0
  %v697 = vadd.f32 0.0, %v696
  %v698 = vpop.f32.mrb[0].mxu0
  %699 = vmatprep.mubr.f32.mxu0 0.0
  %700 = vmatmul.mubr.f32.gmra.mrb[0].mxu0 %v118
  %v701 = vpop.f32.mrb[0].mxu0
  %v702 = vadd.f32 0.0, %v701
  %v703 = vpop.f32.mrb[0].mxu0
  %704 = vmatprep.mubr.f32.mxu0 0.0
  %705 = vmatmul.mubr.f32.gmra.mrb[0].mxu0 %v121
  %v706 = vpop.f32.mrb[0].mxu0
  %v707 = vadd.f32 0.0, %v706
  %v708 = vpop.f32.mrb[0].mxu0
  %709 = vmatprep.mubr.f32.mxu0 0.0
  %710 = vmatmul.mubr.f32.gmra.mrb[0].mxu0 %v124
  %v711 = vpop.f32.mrb[0].mxu0
  %v712 = vadd.f32 0.0, %v711
  %v713 = vpop.f32.mrb[0].mxu0
  %714 = vmatprep.mubr.f32.mxu0 0.0
  %715 = vmatmul.mubr.f32.gmra.mrb[0].mxu0 %v127
  %v716 = vpop.f32.mrb[0].mxu0
  %v717 = vadd.f32 0.0, %v716
  %v718 = vpop.f32.mrb[0].mxu0
  %719 = vmatprep.mubr.f32.mxu0 0.0
  %720 = vmatmul.mubr.f32.gmra.mrb[0].mxu0 %v130
  %v721 = vpop.f32.mrb[0].mxu0
  %v722 = vadd.f32 0.0, %v721
  %v723 = vpop.f32.mrb[0].mxu0
  %724 = vmatprep.mubr.f32.mxu0 0.0
  %725 = vmatmul.mubr.f32.gmra.mrb[0].mxu0 %v133
  %v726 = vpop.f32.mrb[0].mxu0
  %v727 = vadd.f32 0.0, %v726
  %v728 = vpop.f32.mrb[0].mxu0
  %729 = vmatprep.mubr.f32.mxu0 0.0
  %730 = vmatmul.mubr.f32.gmra.mrb[0].mxu0 %v136
  %v731 = vpop.f32.mrb[0].mxu0
  %v732 = vadd.f32 0.0, %v731
  %v733 = vpop.f32.mrb[0].mxu0
  %734 = vmatprep.mubr.f32.mxu0 0.0
  %735 = vmatmul.mubr.f32.gmra.mrb[0].mxu0 %v139
  %v736 = vpop.f32.mrb[0].mxu0
  %v737 = vadd.f32 0.0, %v736
  %v738 = vpop.f32.mrb[0].mxu0
  %739 = vmatprep.mubr.f32.mxu0 0.0
  %740 = vmatmul.mubr.f32.gmra.mrb[0].mxu0 %v142
  %v741 = vpop.f32.mrb[0].mxu0
  %v742 = vadd.f32 0.0, %v741
  %v743 = vpop.f32.mrb[0].mxu0
  %744 = vmatprep.mubr.f32.mxu0 0.0
  %745 = vmatmul.mubr.f32.gmra.mrb[0].mxu0 %v145
  %v746 = vpop.f32.mrb[0].mxu0
  %v747 = vadd.f32 0.0, %v746
  %v748 = vpop.f32.mrb[0].mxu0
  %749 = vmatprep.mubr.f32.mxu0 0.0
  %750 = vmatmul.mubr.f32.gmra.mrb[0].mxu0 %v148
  %v751 = vpop.f32.mrb[0].mxu0
  %v752 = vadd.f32 0.0, %v751
  %v753 = vpop.f32.mrb[0].mxu0
  %754 = vmatprep.mubr.f32.mxu0 0.0
  %755 = vmatmul.mubr.f32.gmra.mrb[0].mxu0 %v151
  %v756 = vpop.f32.mrb[0].mxu0
  %v757 = vadd.f32 0.0, %v756
  %v758 = vpop.f32.mrb[0].mxu0
  %759 = vmatprep.mubr.f32.mxu0 0.0
  %760 = vmatmul.mubr.f32.gmra.mrb[0].mxu0 %v154
  %v761 = vpop.f32.mrb[0].mxu0
  %v762 = vadd.f32 0.0, %v761
  %v763 = vpop.f32.mrb[0].mxu0
  %764 = vmatprep.mubr.f32.mxu0 0.0
  %765 = vmatmul.mubr.f32.gmra.mrb[0].mxu0 %v157
  %v766 = vpop.f32.mrb[0].mxu0
  %v767 = vadd.f32 0.0, %v766
  %v768 = vpop.f32.mrb[0].mxu0
  %769 = vmatprep.mubr.f32.mxu0 0.0
  %770 = vmatmul.mubr.f32.gmra.mrb[0].mxu0 %v160
  %v771 = vpop.f32.mrb[0].mxu0
  %v772 = vadd.f32 0.0, %v771
  %v773 = vpop.f32.mrb[0].mxu0
  %774 = vmatprep.mubr.f32.mxu0 0.0
  %775 = vmatmul.mubr.f32.gmra.mrb[0].mxu0 %v163
  %v776 = vpop.f32.mrb[0].mxu0
  %v777 = vadd.f32 0.0, %v776
  %v778 = vpop.f32.mrb[0].mxu0
  %779 = vmatprep.mubr.f32.mxu0 0.0
  %780 = vmatmul.mubr.f32.gmra.mrb[0].mxu0 %v166
  %v781 = vpop.f32.mrb[0].mxu0
  %v782 = vadd.f32 0.0, %v781
  %v783 = vpop.f32.mrb[0].mxu0
  %784 = vmatprep.mubr.f32.mxu0 0.0
  %785 = vmatmul.mubr.f32.gmra.mrb[0].mxu0 %v169
  %v786 = vpop.f32.mrb[0].mxu0
  %v787 = vadd.f32 0.0, %v786
  %v788 = vpop.f32.mrb[0].mxu0
  %789 = vmatprep.mubr.f32.mxu0 0.0
  %790 = vmatmul.mubr.f32.gmra.mrb[0].mxu0 %v172
  %v791 = vpop.f32.mrb[0].mxu0
  %v792 = vadd.f32 0.0, %v791
  %v793 = vpop.f32.mrb[0].mxu0
  %794 = vmatprep.mubr.f32.mxu0 0.0
  %795 = vmatmul.mubr.f32.gmra.mrb[0].mxu0 %v175
  %v796 = vpop.f32.mrb[0].mxu0
  %v797 = vadd.f32 0.0, %v796
  %v798 = vpop.f32.mrb[0].mxu0
  %799 = vmatprep.mubr.f32.mxu0 0.0
  %800 = vmatmul.mubr.f32.gmra.mrb[0].mxu0 %v178
  %v801 = vpop.f32.mrb[0].mxu0
  %v802 = vadd.f32 0.0, %v801
  %v803 = vpop.f32.mrb[0].mxu0
  %804 = vmatprep.mubr.f32.mxu0 0.0
  %805 = vmatmul.mubr.f32.gmra.mrb[0].mxu0 %v181
  %v806 = vpop.f32.mrb[0].mxu0
  %v807 = vadd.f32 0.0, %v806
  %v808 = vpop.f32.mrb[0].mxu0
  %809 = vmatprep.mubr.f32.mxu0 0.0
  %810 = vmatmul.mubr.f32.gmra.mrb[0].mxu0 %v184
  %v811 = vpop.f32.mrb[0].mxu0
  %v812 = vadd.f32 0.0, %v811
  %v813 = vpop.f32.mrb[0].mxu0
  %814 = vmatprep.mubr.f32.mxu0 0.0
  %815 = vmatmul.mubr.f32.gmra.mrb[0].mxu0 %v613
  %v816 = vpop.f32.mrb[0].mxu0
  %v817 = vadd.f32 0.0, %v816
  %v818 = vpop.f32.mrb[0].mxu0
  %819 = vdwg.mxu0
  %v820 = vadd.f32 %v461, %v682
  %v821 = vadd.f32 %v466, %v687
  %v822 = vadd.f32 %v471, %v692
  %v823 = vadd.f32 %v476, %v697
  %v824 = vadd.f32 %v481, %v702
  %v825 = vadd.f32 %v486, %v707
  %v826 = vadd.f32 %v491, %v712
  %v827 = vadd.f32 %v496, %v717
  %v828 = vadd.f32 %v501, %v722
  %v829 = vadd.f32 %v506, %v727
  %v830 = vadd.f32 %v511, %v732
  %v831 = vadd.f32 %v516, %v737
  %v832 = vadd.f32 %v521, %v742
  %v833 = vadd.f32 %v526, %v747
  %v834 = vadd.f32 %v531, %v752
  %v835 = vadd.f32 %v536, %v757
  %v836 = vadd.f32 %v541, %v762
  %v837 = vadd.f32 %v546, %v767
  %v838 = vadd.f32 %v551, %v772
  %v839 = vadd.f32 %v556, %v777
  %v840 = vadd.f32 %v561, %v782
  %v841 = vadd.f32 %v566, %v787
  %v842 = vadd.f32 %v571, %v792
  %v843 = vadd.f32 %v576, %v797
  %v844 = vadd.f32 %v581, %v802
  %v845 = vadd.f32 %v586, %v807
  %v846 = vadd.f32 %v591, %v812
  %v847 = vadd.f32 %v596, %v817
  %s848 = scalar_lea.vmem %s1, 288
  %v849 = vld [vmem:[%s848] sm:$0xff]
  %v850 = vld [vmem:[%s848 + $0x8] sm:$0xff]
  %v851 = vld [vmem:[%s848 + $0x10] sm:$0xff]
  %v852 = vld [vmem:[%s848 + $0x18] sm:$0xff]
  %v853 = vld [vmem:[%s848 + $0x20] sm:$0xff]
  %v854 = vld [vmem:[%s848 + $0x28] sm:$0xff]
  %v855 = vld [vmem:[%s848 + $0x30] sm:$0xff]
  %v856 = vld [vmem:[%s848 + $0x38] sm:$0xff]
  %v857 = vld [vmem:[%s848 + $0x40] sm:$0xff]
  %v858 = vld [vmem:[%s848 + $0x48] sm:$0xff]
  %v859 = vld [vmem:[%s848 + $0x50] sm:$0xff]
  %v860 = vld [vmem:[%s848 + $0x58] sm:$0xff]
  %v862 = vsel %vm101, %v74, 0
  %864 = vmatprep.subr.mxu0 0.0
  %865 = vmatpush1.msra.mxu0 %v849
  %866 = vmatprep.subr.mxu0 0.0
  %867 = vmatpush1.msra.mxu0 %v850
  %868 = vmatprep.subr.mxu0 0.0
  %869 = vmatpush1.msra.mxu0 %v851
  %870 = vmatprep.subr.mxu0 0.0
  %871 = vmatpush1.msra.mxu0 %v852
  %872 = vmatprep.subr.mxu0 0.0
  %873 = vmatpush1.msra.mxu0 %v853
  %874 = vmatprep.subr.mxu0 0.0
  %875 = vmatpush1.msra.mxu0 %v854
  %876 = vmatprep.subr.mxu0 0.0
  %877 = vmatpush1.msra.mxu0 %v855
  %878 = vmatprep.subr.mxu0 0.0
  %879 = vmatpush1.msra.mxu0 %v856
  %880 = vmatprep.subr.mxu0 0.0
  %881 = vmatpush1.msra.mxu0 %v857
  %882 = vmatprep.subr.mxu0 0.0
  %883 = vmatpush1.msra.mxu0 %v858
  %884 = vmatprep.subr.mxu0 0.0
  %885 = vmatpush1.msra.mxu0 %v859
  %886 = vmatprep.subr.mxu0 0.0
  %887 = vmatpush1.msra.mxu0 %v860
  %888 = vmatprep.subr.mxu0 0.0
  %889 = vmatpush1.msra.mxu0 0.0
  %890 = vmatprep.subr.mxu0 0.0
  %891 = vmatpush1.msra.mxu0 0.0
  %892 = vmatprep.subr.mxu0 0.0
  %893 = vmatpush1.msra.mxu0 0.0
  %894 = vmatprep.subr.mxu0 0.0
  %895 = vmatpush1.msra.mxu0 0.0
  %896 = vmatprep.subr.mxu0 0.0
  %897 = vmatpush1.msra.mxu0 0.0
  %898 = vmatprep.subr.mxu0 0.0
  %899 = vmatpush1.msra.mxu0 0.0
  %900 = vmatprep.subr.mxu0 0.0
  %901 = vmatpush1.msra.mxu0 0.0
  %902 = vmatprep.subr.mxu0 0.0
  %903 = vmatpush1.msra.mxu0 0.0
  %904 = vmatprep.subr.mxu0 0.0
  %905 = vmatpush1.msra.mxu0 0.0
  %906 = vmatprep.subr.mxu0 0.0
  %907 = vmatpush1.msra.mxu0 0.0
  %908 = vmatprep.subr.mxu0 0.0
  %909 = vmatpush1.msra.mxu0 0.0
  %910 = vmatprep.subr.mxu0 0.0
  %911 = vmatpush1.msra.mxu0 0.0
  %912 = vmatprep.subr.mxu0 0.0
  %913 = vmatpush1.msra.mxu0 0.0
  %914 = vmatprep.subr.mxu0 0.0
  %915 = vmatpush1.msra.mxu0 0.0
  %916 = vmatprep.subr.mxu0 0.0
  %917 = vmatpush1.msra.mxu0 0.0
  %918 = vmatprep.subr.mxu0 0.0
  %919 = vmatpush1.msra.mxu0 0.0
  %920 = vmatprep.subr.mxu0 0.0
  %921 = vmatpush1.msra.mxu0 0.0
  %922 = vmatprep.subr.mxu0 0.0
  %923 = vmatpush1.msra.mxu0 0.0
  %924 = vmatprep.subr.mxu0 0.0
  %925 = vmatpush1.msra.mxu0 0.0
  %926 = vmatprep.subr.mxu0 0.0
  %927 = vmatpush1.msra.mxu0 0.0
  %928 = vmatprep.mubr.f32.mxu0 0.0
  %929 = vmatmul.mubr.f32.gmra.mrb[0].mxu0 %v109
  %v930 = vpop.f32.mrb[0].mxu0
  %v931 = vadd.f32 0.0, %v930
  %v932 = vpop.f32.mrb[0].mxu0
  %933 = vmatprep.mubr.f32.mxu0 0.0
  %934 = vmatmul.mubr.f32.gmra.mrb[0].mxu0 %v112
  %v935 = vpop.f32.mrb[0].mxu0
  %v936 = vadd.f32 0.0, %v935
  %v937 = vpop.f32.mrb[0].mxu0
  %938 = vmatprep.mubr.f32.mxu0 0.0
  %939 = vmatmul.mubr.f32.gmra.mrb[0].mxu0 %v115
  %v940 = vpop.f32.mrb[0].mxu0
  %v941 = vadd.f32 0.0, %v940
  %v942 = vpop.f32.mrb[0].mxu0
  %943 = vmatprep.mubr.f32.mxu0 0.0
  %944 = vmatmul.mubr.f32.gmra.mrb[0].mxu0 %v118
  %v945 = vpop.f32.mrb[0].mxu0
  %v946 = vadd.f32 0.0, %v945
  %v947 = vpop.f32.mrb[0].mxu0
  %948 = vmatprep.mubr.f32.mxu0 0.0
  %949 = vmatmul.mubr.f32.gmra.mrb[0].mxu0 %v121
  %v950 = vpop.f32.mrb[0].mxu0
  %v951 = vadd.f32 0.0, %v950
  %v952 = vpop.f32.mrb[0].mxu0
  %953 = vmatprep.mubr.f32.mxu0 0.0
  %954 = vmatmul.mubr.f32.gmra.mrb[0].mxu0 %v124
  %v955 = vpop.f32.mrb[0].mxu0
  %v956 = vadd.f32 0.0, %v955
  %v957 = vpop.f32.mrb[0].mxu0
  %958 = vmatprep.mubr.f32.mxu0 0.0
  %959 = vmatmul.mubr.f32.gmra.mrb[0].mxu0 %v127
  %v960 = vpop.f32.mrb[0].mxu0
  %v961 = vadd.f32 0.0, %v960
  %v962 = vpop.f32.mrb[0].mxu0
  %963 = vmatprep.mubr.f32.mxu0 0.0
  %964 = vmatmul.mubr.f32.gmra.mrb[0].mxu0 %v130
  %v965 = vpop.f32.mrb[0].mxu0
  %v966 = vadd.f32 0.0, %v965
  %v967 = vpop.f32.mrb[0].mxu0
  %968 = vmatprep.mubr.f32.mxu0 0.0
  %969 = vmatmul.mubr.f32.gmra.mrb[0].mxu0 %v133
  %v970 = vpop.f32.mrb[0].mxu0
  %v971 = vadd.f32 0.0, %v970
  %v972 = vpop.f32.mrb[0].mxu0
  %973 = vmatprep.mubr.f32.mxu0 0.0
  %974 = vmatmul.mubr.f32.gmra.mrb[0].mxu0 %v136
  %v975 = vpop.f32.mrb[0].mxu0
  %v976 = vadd.f32 0.0, %v975
  %v977 = vpop.f32.mrb[0].mxu0
  %978 = vmatprep.mubr.f32.mxu0 0.0
  %979 = vmatmul.mubr.f32.gmra.mrb[0].mxu0 %v139
  %v980 = vpop.f32.mrb[0].mxu0
  %v981 = vadd.f32 0.0, %v980
  %v982 = vpop.f32.mrb[0].mxu0
  %983 = vmatprep.mubr.f32.mxu0 0.0
  %984 = vmatmul.mubr.f32.gmra.mrb[0].mxu0 %v142
  %v985 = vpop.f32.mrb[0].mxu0
  %v986 = vadd.f32 0.0, %v985
  %v987 = vpop.f32.mrb[0].mxu0
  %988 = vmatprep.mubr.f32.mxu0 0.0
  %989 = vmatmul.mubr.f32.gmra.mrb[0].mxu0 %v145
  %v990 = vpop.f32.mrb[0].mxu0
  %v991 = vadd.f32 0.0, %v990
  %v992 = vpop.f32.mrb[0].mxu0
  %993 = vmatprep.mubr.f32.mxu0 0.0
  %994 = vmatmul.mubr.f32.gmra.mrb[0].mxu0 %v148
  %v995 = vpop.f32.mrb[0].mxu0
  %v996 = vadd.f32 0.0, %v995
  %v997 = vpop.f32.mrb[0].mxu0
  %998 = vmatprep.mubr.f32.mxu0 0.0
  %999 = vmatmul.mubr.f32.gmra.mrb[0].mxu0 %v151
  %v1000 = vpop.f32.mrb[0].mxu0
  %v1001 = vadd.f32 0.0, %v1000
  %v1002 = vpop.f32.mrb[0].mxu0
  %1003 = vmatprep.mubr.f32.mxu0 0.0
  %1004 = vmatmul.mubr.f32.gmra.mrb[0].mxu0 %v154
  %v1005 = vpop.f32.mrb[0].mxu0
  %v1006 = vadd.f32 0.0, %v1005
  %v1007 = vpop.f32.mrb[0].mxu0
  %1008 = vmatprep.mubr.f32.mxu0 0.0
  %1009 = vmatmul.mubr.f32.gmra.mrb[0].mxu0 %v157
  %v1010 = vpop.f32.mrb[0].mxu0
  %v1011 = vadd.f32 0.0, %v1010
  %v1012 = vpop.f32.mrb[0].mxu0
  %1013 = vmatprep.mubr.f32.mxu0 0.0
  %1014 = vmatmul.mubr.f32.gmra.mrb[0].mxu0 %v160
  %v1015 = vpop.f32.mrb[0].mxu0
  %v1016 = vadd.f32 0.0, %v1015
  %v1017 = vpop.f32.mrb[0].mxu0
  %1018 = vmatprep.mubr.f32.mxu0 0.0
  %1019 = vmatmul.mubr.f32.gmra.mrb[0].mxu0 %v163
  %v1020 = vpop.f32.mrb[0].mxu0
  %v1021 = vadd.f32 0.0, %v1020
  %v1022 = vpop.f32.mrb[0].mxu0
  %1023 = vmatprep.mubr.f32.mxu0 0.0
  %1024 = vmatmul.mubr.f32.gmra.mrb[0].mxu0 %v166
  %v1025 = vpop.f32.mrb[0].mxu0
  %v1026 = vadd.f32 0.0, %v1025
  %v1027 = vpop.f32.mrb[0].mxu0
  %1028 = vmatprep.mubr.f32.mxu0 0.0
  %1029 = vmatmul.mubr.f32.gmra.mrb[0].mxu0 %v169
  %v1030 = vpop.f32.mrb[0].mxu0
  %v1031 = vadd.f32 0.0, %v1030
  %v1032 = vpop.f32.mrb[0].mxu0
  %1033 = vmatprep.mubr.f32.mxu0 0.0
  %1034 = vmatmul.mubr.f32.gmra.mrb[0].mxu0 %v172
  %v1035 = vpop.f32.mrb[0].mxu0
  %v1036 = vadd.f32 0.0, %v1035
  %v1037 = vpop.f32.mrb[0].mxu0
  %1038 = vmatprep.mubr.f32.mxu0 0.0
  %1039 = vmatmul.mubr.f32.gmra.mrb[0].mxu0 %v175
  %v1040 = vpop.f32.mrb[0].mxu0
  %v1041 = vadd.f32 0.0, %v1040
  %v1042 = vpop.f32.mrb[0].mxu0
  %1043 = vmatprep.mubr.f32.mxu0 0.0
  %1044 = vmatmul.mubr.f32.gmra.mrb[0].mxu0 %v178
  %v1045 = vpop.f32.mrb[0].mxu0
  %v1046 = vadd.f32 0.0, %v1045
  %v1047 = vpop.f32.mrb[0].mxu0
  %1048 = vmatprep.mubr.f32.mxu0 0.0
  %1049 = vmatmul.mubr.f32.gmra.mrb[0].mxu0 %v181
  %v1050 = vpop.f32.mrb[0].mxu0
  %v1051 = vadd.f32 0.0, %v1050
  %v1052 = vpop.f32.mrb[0].mxu0
  %1053 = vmatprep.mubr.f32.mxu0 0.0
  %1054 = vmatmul.mubr.f32.gmra.mrb[0].mxu0 %v184
  %v1055 = vpop.f32.mrb[0].mxu0
  %v1056 = vadd.f32 0.0, %v1055
  %v1057 = vpop.f32.mrb[0].mxu0
  %1058 = vmatprep.mubr.f32.mxu0 0.0
  %1059 = vmatmul.mubr.f32.gmra.mrb[0].mxu0 %v613
  %v1060 = vpop.f32.mrb[0].mxu0
  %v1061 = vadd.f32 0.0, %v1060
  %v1062 = vpop.f32.mrb[0].mxu0
  %1063 = vmatprep.mubr.f32.mxu0 0.0
  %1064 = vmatmul.mubr.f32.gmra.mrb[0].mxu0 %v862
  %v1065 = vpop.f32.mrb[0].mxu0
  %v1066 = vadd.f32 0.0, %v1065
  %v1067 = vpop.f32.mrb[0].mxu0
  %1068 = vdwg.mxu0
  %v1069 = vadd.f32 %v820, %v931
  %v1070 = vadd.f32 %v821, %v936
  %v1071 = vadd.f32 %v822, %v941
  %v1072 = vadd.f32 %v823, %v946
  %v1073 = vadd.f32 %v824, %v951
  %v1074 = vadd.f32 %v825, %v956
  %v1075 = vadd.f32 %v826, %v961
  %v1076 = vadd.f32 %v827, %v966
  %v1077 = vadd.f32 %v828, %v971
  %v1078 = vadd.f32 %v829, %v976
  %v1079 = vadd.f32 %v830, %v981
  %v1080 = vadd.f32 %v831, %v986
  %v1081 = vadd.f32 %v832, %v991
  %v1082 = vadd.f32 %v833, %v996
  %v1083 = vadd.f32 %v834, %v1001
  %v1084 = vadd.f32 %v835, %v1006
  %v1085 = vadd.f32 %v836, %v1011
  %v1086 = vadd.f32 %v837, %v1016
  %v1087 = vadd.f32 %v838, %v1021
  %v1088 = vadd.f32 %v839, %v1026
  %v1089 = vadd.f32 %v840, %v1031
  %v1090 = vadd.f32 %v841, %v1036
  %v1091 = vadd.f32 %v842, %v1041
  %v1092 = vadd.f32 %v843, %v1046
  %v1093 = vadd.f32 %v844, %v1051
  %v1094 = vadd.f32 %v845, %v1056
  %v1095 = vadd.f32 %v846, %v1061
  %v1096 = vadd.f32 %v847, %v1066
  %s1097 = scalar_lea.vmem %s1, 384
  %v1098 = vld [vmem:[%s1097] sm:$0xff]
  %v1099 = vld [vmem:[%s1097 + $0x8] sm:$0xff]
  %v1100 = vld [vmem:[%s1097 + $0x10] sm:$0xff]
  %v1101 = vld [vmem:[%s1097 + $0x18] sm:$0xff]
  %v1102 = vld [vmem:[%s1097 + $0x20] sm:$0xff]
  %v1103 = vld [vmem:[%s1097 + $0x28] sm:$0xff]
  %v1104 = vld [vmem:[%s1097 + $0x30] sm:$0xff]
  %v1105 = vld [vmem:[%s1097 + $0x38] sm:$0xff]
  %v1106 = vld [vmem:[%s1097 + $0x40] sm:$0xff]
  %v1107 = vld [vmem:[%s1097 + $0x48] sm:$0xff]
  %v1108 = vld [vmem:[%s1097 + $0x50] sm:$0xff]
  %v1109 = vld [vmem:[%s1097 + $0x58] sm:$0xff]
  %v1111 = vsel %vm101, %v75, 0
  %1113 = vmatprep.subr.mxu0 0.0
  %1114 = vmatpush1.msra.mxu0 %v1098
  %1115 = vmatprep.subr.mxu0 0.0
  %1116 = vmatpush1.msra.mxu0 %v1099
  %1117 = vmatprep.subr.mxu0 0.0
  %1118 = vmatpush1.msra.mxu0 %v1100
  %1119 = vmatprep.subr.mxu0 0.0
  %1120 = vmatpush1.msra.mxu0 %v1101
  %1121 = vmatprep.subr.mxu0 0.0
  %1122 = vmatpush1.msra.mxu0 %v1102
  %1123 = vmatprep.subr.mxu0 0.0
  %1124 = vmatpush1.msra.mxu0 %v1103
  %1125 = vmatprep.subr.mxu0 0.0
  %1126 = vmatpush1.msra.mxu0 %v1104
  %1127 = vmatprep.subr.mxu0 0.0
  %1128 = vmatpush1.msra.mxu0 %v1105
  %1129 = vmatprep.subr.mxu0 0.0
  %1130 = vmatpush1.msra.mxu0 %v1106
  %1131 = vmatprep.subr.mxu0 0.0
  %1132 = vmatpush1.msra.mxu0 %v1107
  %1133 = vmatprep.subr.mxu0 0.0
  %1134 = vmatpush1.msra.mxu0 %v1108
  %1135 = vmatprep.subr.mxu0 0.0
  %1136 = vmatpush1.msra.mxu0 %v1109
  %1137 = vmatprep.subr.mxu0 0.0
  %1138 = vmatpush1.msra.mxu0 0.0
  %1139 = vmatprep.subr.mxu0 0.0
  %1140 = vmatpush1.msra.mxu0 0.0
  %1141 = vmatprep.subr.mxu0 0.0
  %1142 = vmatpush1.msra.mxu0 0.0
  %1143 = vmatprep.subr.mxu0 0.0
  %1144 = vmatpush1.msra.mxu0 0.0
  %1145 = vmatprep.subr.mxu0 0.0
  %1146 = vmatpush1.msra.mxu0 0.0
  %1147 = vmatprep.subr.mxu0 0.0
  %1148 = vmatpush1.msra.mxu0 0.0
  %1149 = vmatprep.subr.mxu0 0.0
  %1150 = vmatpush1.msra.mxu0 0.0
  %1151 = vmatprep.subr.mxu0 0.0
  %1152 = vmatpush1.msra.mxu0 0.0
  %1153 = vmatprep.subr.mxu0 0.0
  %1154 = vmatpush1.msra.mxu0 0.0
  %1155 = vmatprep.subr.mxu0 0.0
  %1156 = vmatpush1.msra.mxu0 0.0
  %1157 = vmatprep.subr.mxu0 0.0
  %1158 = vmatpush1.msra.mxu0 0.0
  %1159 = vmatprep.subr.mxu0 0.0
  %1160 = vmatpush1.msra.mxu0 0.0
  %1161 = vmatprep.subr.mxu0 0.0
  %1162 = vmatpush1.msra.mxu0 0.0
  %1163 = vmatprep.subr.mxu0 0.0
  %1164 = vmatpush1.msra.mxu0 0.0
  %1165 = vmatprep.subr.mxu0 0.0
  %1166 = vmatpush1.msra.mxu0 0.0
  %1167 = vmatprep.subr.mxu0 0.0
  %1168 = vmatpush1.msra.mxu0 0.0
  %1169 = vmatprep.subr.mxu0 0.0
  %1170 = vmatpush1.msra.mxu0 0.0
  %1171 = vmatprep.subr.mxu0 0.0
  %1172 = vmatpush1.msra.mxu0 0.0
  %1173 = vmatprep.subr.mxu0 0.0
  %1174 = vmatpush1.msra.mxu0 0.0
  %1175 = vmatprep.subr.mxu0 0.0
  %1176 = vmatpush1.msra.mxu0 0.0
  %1177 = vmatprep.mubr.f32.mxu0 0.0
  %1178 = vmatmul.mubr.f32.gmra.mrb[0].mxu0 %v112
  %v1179 = vpop.f32.mrb[0].mxu0
  %v1180 = vadd.f32 0.0, %v1179
  %v1181 = vpop.f32.mrb[0].mxu0
  %1182 = vmatprep.mubr.f32.mxu0 0.0
  %1183 = vmatmul.mubr.f32.gmra.mrb[0].mxu0 %v115
  %v1184 = vpop.f32.mrb[0].mxu0
  %v1185 = vadd.f32 0.0, %v1184
  %v1186 = vpop.f32.mrb[0].mxu0
  %1187 = vmatprep.mubr.f32.mxu0 0.0
  %1188 = vmatmul.mubr.f32.gmra.mrb[0].mxu0 %v118
  %v1189 = vpop.f32.mrb[0].mxu0
  %v1190 = vadd.f32 0.0, %v1189
  %v1191 = vpop.f32.mrb[0].mxu0
  %1192 = vmatprep.mubr.f32.mxu0 0.0
  %1193 = vmatmul.mubr.f32.gmra.mrb[0].mxu0 %v121
  %v1194 = vpop.f32.mrb[0].mxu0
  %v1195 = vadd.f32 0.0, %v1194
  %v1196 = vpop.f32.mrb[0].mxu0
  %1197 = vmatprep.mubr.f32.mxu0 0.0
  %1198 = vmatmul.mubr.f32.gmra.mrb[0].mxu0 %v124
  %v1199 = vpop.f32.mrb[0].mxu0
  %v1200 = vadd.f32 0.0, %v1199
  %v1201 = vpop.f32.mrb[0].mxu0
  %1202 = vmatprep.mubr.f32.mxu0 0.0
  %1203 = vmatmul.mubr.f32.gmra.mrb[0].mxu0 %v127
  %v1204 = vpop.f32.mrb[0].mxu0
  %v1205 = vadd.f32 0.0, %v1204
  %v1206 = vpop.f32.mrb[0].mxu0
  %1207 = vmatprep.mubr.f32.mxu0 0.0
  %1208 = vmatmul.mubr.f32.gmra.mrb[0].mxu0 %v130
  %v1209 = vpop.f32.mrb[0].mxu0
  %v1210 = vadd.f32 0.0, %v1209
  %v1211 = vpop.f32.mrb[0].mxu0
  %1212 = vmatprep.mubr.f32.mxu0 0.0
  %1213 = vmatmul.mubr.f32.gmra.mrb[0].mxu0 %v133
  %v1214 = vpop.f32.mrb[0].mxu0
  %v1215 = vadd.f32 0.0, %v1214
  %v1216 = vpop.f32.mrb[0].mxu0
  %1217 = vmatprep.mubr.f32.mxu0 0.0
  %1218 = vmatmul.mubr.f32.gmra.mrb[0].mxu0 %v136
  %v1219 = vpop.f32.mrb[0].mxu0
  %v1220 = vadd.f32 0.0, %v1219
  %v1221 = vpop.f32.mrb[0].mxu0
  %1222 = vmatprep.mubr.f32.mxu0 0.0
  %1223 = vmatmul.mubr.f32.gmra.mrb[0].mxu0 %v139
  %v1224 = vpop.f32.mrb[0].mxu0
  %v1225 = vadd.f32 0.0, %v1224
  %v1226 = vpop.f32.mrb[0].mxu0
  %1227 = vmatprep.mubr.f32.mxu0 0.0
  %1228 = vmatmul.mubr.f32.gmra.mrb[0].mxu0 %v142
  %v1229 = vpop.f32.mrb[0].mxu0
  %v1230 = vadd.f32 0.0, %v1229
  %v1231 = vpop.f32.mrb[0].mxu0
  %1232 = vmatprep.mubr.f32.mxu0 0.0
  %1233 = vmatmul.mubr.f32.gmra.mrb[0].mxu0 %v145
  %v1234 = vpop.f32.mrb[0].mxu0
  %v1235 = vadd.f32 0.0, %v1234
  %v1236 = vpop.f32.mrb[0].mxu0
  %1237 = vmatprep.mubr.f32.mxu0 0.0
  %1238 = vmatmul.mubr.f32.gmra.mrb[0].mxu0 %v148
  %v1239 = vpop.f32.mrb[0].mxu0
  %v1240 = vadd.f32 0.0, %v1239
  %v1241 = vpop.f32.mrb[0].mxu0
  %1242 = vmatprep.mubr.f32.mxu0 0.0
  %1243 = vmatmul.mubr.f32.gmra.mrb[0].mxu0 %v151
  %v1244 = vpop.f32.mrb[0].mxu0
  %v1245 = vadd.f32 0.0, %v1244
  %v1246 = vpop.f32.mrb[0].mxu0
  %1247 = vmatprep.mubr.f32.mxu0 0.0
  %1248 = vmatmul.mubr.f32.gmra.mrb[0].mxu0 %v154
  %v1249 = vpop.f32.mrb[0].mxu0
  %v1250 = vadd.f32 0.0, %v1249
  %v1251 = vpop.f32.mrb[0].mxu0
  %1252 = vmatprep.mubr.f32.mxu0 0.0
  %1253 = vmatmul.mubr.f32.gmra.mrb[0].mxu0 %v157
  %v1254 = vpop.f32.mrb[0].mxu0
  %v1255 = vadd.f32 0.0, %v1254
  %v1256 = vpop.f32.mrb[0].mxu0
  %1257 = vmatprep.mubr.f32.mxu0 0.0
  %1258 = vmatmul.mubr.f32.gmra.mrb[0].mxu0 %v160
  %v1259 = vpop.f32.mrb[0].mxu0
  %v1260 = vadd.f32 0.0, %v1259
  %v1261 = vpop.f32.mrb[0].mxu0
  %1262 = vmatprep.mubr.f32.mxu0 0.0
  %1263 = vmatmul.mubr.f32.gmra.mrb[0].mxu0 %v163
  %v1264 = vpop.f32.mrb[0].mxu0
  %v1265 = vadd.f32 0.0, %v1264
  %v1266 = vpop.f32.mrb[0].mxu0
  %1267 = vmatprep.mubr.f32.mxu0 0.0
  %1268 = vmatmul.mubr.f32.gmra.mrb[0].mxu0 %v166
  %v1269 = vpop.f32.mrb[0].mxu0
  %v1270 = vadd.f32 0.0, %v1269
  %v1271 = vpop.f32.mrb[0].mxu0
  %1272 = vmatprep.mubr.f32.mxu0 0.0
  %1273 = vmatmul.mubr.f32.gmra.mrb[0].mxu0 %v169
  %v1274 = vpop.f32.mrb[0].mxu0
  %v1275 = vadd.f32 0.0, %v1274
  %v1276 = vpop.f32.mrb[0].mxu0
  %1277 = vmatprep.mubr.f32.mxu0 0.0
  %1278 = vmatmul.mubr.f32.gmra.mrb[0].mxu0 %v172
  %v1279 = vpop.f32.mrb[0].mxu0
  %v1280 = vadd.f32 0.0, %v1279
  %v1281 = vpop.f32.mrb[0].mxu0
  %1282 = vmatprep.mubr.f32.mxu0 0.0
  %1283 = vmatmul.mubr.f32.gmra.mrb[0].mxu0 %v175
  %v1284 = vpop.f32.mrb[0].mxu0
  %v1285 = vadd.f32 0.0, %v1284
  %v1286 = vpop.f32.mrb[0].mxu0
  %1287 = vmatprep.mubr.f32.mxu0 0.0
  %1288 = vmatmul.mubr.f32.gmra.mrb[0].mxu0 %v178
  %v1289 = vpop.f32.mrb[0].mxu0
  %v1290 = vadd.f32 0.0, %v1289
  %v1291 = vpop.f32.mrb[0].mxu0
  %1292 = vmatprep.mubr.f32.mxu0 0.0
  %1293 = vmatmul.mubr.f32.gmra.mrb[0].mxu0 %v181
  %v1294 = vpop.f32.mrb[0].mxu0
  %v1295 = vadd.f32 0.0, %v1294
  %v1296 = vpop.f32.mrb[0].mxu0
  %1297 = vmatprep.mubr.f32.mxu0 0.0
  %1298 = vmatmul.mubr.f32.gmra.mrb[0].mxu0 %v184
  %v1299 = vpop.f32.mrb[0].mxu0
  %v1300 = vadd.f32 0.0, %v1299
  %v1301 = vpop.f32.mrb[0].mxu0
  %1302 = vmatprep.mubr.f32.mxu0 0.0
  %1303 = vmatmul.mubr.f32.gmra.mrb[0].mxu0 %v613
  %v1304 = vpop.f32.mrb[0].mxu0
  %v1305 = vadd.f32 0.0, %v1304
  %v1306 = vpop.f32.mrb[0].mxu0
  %1307 = vmatprep.mubr.f32.mxu0 0.0
  %1308 = vmatmul.mubr.f32.gmra.mrb[0].mxu0 %v862
  %v1309 = vpop.f32.mrb[0].mxu0
  %v1310 = vadd.f32 0.0, %v1309
  %v1311 = vpop.f32.mrb[0].mxu0
  %1312 = vmatprep.mubr.f32.mxu0 0.0
  %1313 = vmatmul.mubr.f32.gmra.mrb[0].mxu0 %v1111
  %v1314 = vpop.f32.mrb[0].mxu0
  %v1315 = vadd.f32 0.0, %v1314
  %v1316 = vpop.f32.mrb[0].mxu0
  %1317 = vdwg.mxu0
  %v1318 = vadd.f32 %v1069, %v1180
  %v1319 = vadd.f32 %v1070, %v1185
  %v1320 = vadd.f32 %v1071, %v1190
  %v1321 = vadd.f32 %v1072, %v1195
  %v1322 = vadd.f32 %v1073, %v1200
  %v1323 = vadd.f32 %v1074, %v1205
  %v1324 = vadd.f32 %v1075, %v1210
  %v1325 = vadd.f32 %v1076, %v1215
  %v1326 = vadd.f32 %v1077, %v1220
  %v1327 = vadd.f32 %v1078, %v1225
  %v1328 = vadd.f32 %v1079, %v1230
  %v1329 = vadd.f32 %v1080, %v1235
  %v1330 = vadd.f32 %v1081, %v1240
  %v1331 = vadd.f32 %v1082, %v1245
  %v1332 = vadd.f32 %v1083, %v1250
  %v1333 = vadd.f32 %v1084, %v1255
  %v1334 = vadd.f32 %v1085, %v1260
  %v1335 = vadd.f32 %v1086, %v1265
  %v1336 = vadd.f32 %v1087, %v1270
  %v1337 = vadd.f32 %v1088, %v1275
  %v1338 = vadd.f32 %v1089, %v1280
  %v1339 = vadd.f32 %v1090, %v1285
  %v1340 = vadd.f32 %v1091, %v1290
  %v1341 = vadd.f32 %v1092, %v1295
  %v1342 = vadd.f32 %v1093, %v1300
  %v1343 = vadd.f32 %v1094, %v1305
  %v1344 = vadd.f32 %v1095, %v1310
  %v1345 = vadd.f32 %v1096, %v1315
  %v1346 = vld [vmem:[%s2] sm:$0xff]
  %v1347 = vld [vmem:[%s2 + $0x8] sm:$0xff]
  %v1348 = vld [vmem:[%s2 + $0x10] sm:$0xff]
  %v1349 = vld [vmem:[%s2 + $0x18] sm:$0xff]
  %v1350 = vld [vmem:[%s2 + $0x20] sm:$0xff]
  %v1351 = vld [vmem:[%s2 + $0x28] sm:$0xff]
  %v1352 = vld [vmem:[%s2 + $0x30] sm:$0xff]
  %v1353 = vld [vmem:[%s2 + $0x38] sm:$0xff]
  %v1354 = vld [vmem:[%s2 + $0x40] sm:$0xff]
  %v1355 = vld [vmem:[%s2 + $0x48] sm:$0xff]
  %v1356 = vld [vmem:[%s2 + $0x50] sm:$0xff]
  %v1357 = vld [vmem:[%s2 + $0x58] sm:$0xff]
  %s1358 = scalar_lea.vmem %s2, 96
  %v1359 = vld [vmem:[%s1358] sm:$0xff]
  %v1360 = vld [vmem:[%s1358 + $0x8] sm:$0xff]
  %v1361 = vld [vmem:[%s1358 + $0x10] sm:$0xff]
  %v1362 = vld [vmem:[%s1358 + $0x18] sm:$0xff]
  %v1363 = vld [vmem:[%s1358 + $0x20] sm:$0xff]
  %v1364 = vld [vmem:[%s1358 + $0x28] sm:$0xff]
  %v1365 = vld [vmem:[%s1358 + $0x30] sm:$0xff]
  %v1366 = vld [vmem:[%s1358 + $0x38] sm:$0xff]
  %v1367 = vld [vmem:[%s1358 + $0x40] sm:$0xff]
  %v1368 = vld [vmem:[%s1358 + $0x48] sm:$0xff]
  %v1369 = vld [vmem:[%s1358 + $0x50] sm:$0xff]
  %v1370 = vld [vmem:[%s1358 + $0x58] sm:$0xff]
  %1371 = vmatprep.subr.mxu0 0.0
  %1372 = vmatpush1.msra.mxu0 %v1359
  %1373 = vmatprep.subr.mxu0 0.0
  %1374 = vmatpush1.msra.mxu0 %v1360
  %1375 = vmatprep.subr.mxu0 0.0
  %1376 = vmatpush1.msra.mxu0 %v1361
  %1377 = vmatprep.subr.mxu0 0.0
  %1378 = vmatpush1.msra.mxu0 %v1362
  %1379 = vmatprep.subr.mxu0 0.0
  %1380 = vmatpush1.msra.mxu0 %v1363
  %1381 = vmatprep.subr.mxu0 0.0
  %1382 = vmatpush1.msra.mxu0 %v1364
  %1383 = vmatprep.subr.mxu0 0.0
  %1384 = vmatpush1.msra.mxu0 %v1365
  %1385 = vmatprep.subr.mxu0 0.0
  %1386 = vmatpush1.msra.mxu0 %v1366
  %1387 = vmatprep.subr.mxu0 0.0
  %1388 = vmatpush1.msra.mxu0 %v1367
  %1389 = vmatprep.subr.mxu0 0.0
  %1390 = vmatpush1.msra.mxu0 %v1368
  %1391 = vmatprep.subr.mxu0 0.0
  %1392 = vmatpush1.msra.mxu0 %v1369
  %1393 = vmatprep.subr.mxu0 0.0
  %1394 = vmatpush1.msra.mxu0 %v1370
  %1395 = vmatprep.subr.mxu0 0.0
  %1396 = vmatpush1.msra.mxu0 0.0
  %1397 = vmatprep.subr.mxu0 0.0
  %1398 = vmatpush1.msra.mxu0 0.0
  %1399 = vmatprep.subr.mxu0 0.0
  %1400 = vmatpush1.msra.mxu0 0.0
  %1401 = vmatprep.subr.mxu0 0.0
  %1402 = vmatpush1.msra.mxu0 0.0
  %1403 = vmatprep.subr.mxu0 0.0
  %1404 = vmatpush1.msra.mxu0 0.0
  %1405 = vmatprep.subr.mxu0 0.0
  %1406 = vmatpush1.msra.mxu0 0.0
  %1407 = vmatprep.subr.mxu0 0.0
  %1408 = vmatpush1.msra.mxu0 0.0
  %1409 = vmatprep.subr.mxu0 0.0
  %1410 = vmatpush1.msra.mxu0 0.0
  %1411 = vmatprep.subr.mxu0 0.0
  %1412 = vmatpush1.msra.mxu0 0.0
  %1413 = vmatprep.subr.mxu0 0.0
  %1414 = vmatpush1.msra.mxu0 0.0
  %1415 = vmatprep.subr.mxu0 0.0
  %1416 = vmatpush1.msra.mxu0 0.0
  %1417 = vmatprep.subr.mxu0 0.0
  %1418 = vmatpush1.msra.mxu0 0.0
  %1419 = vmatprep.subr.mxu0 0.0
  %1420 = vmatpush1.msra.mxu0 0.0
  %1421 = vmatprep.subr.mxu0 0.0
  %1422 = vmatpush1.msra.mxu0 0.0
  %1423 = vmatprep.subr.mxu0 0.0
  %1424 = vmatpush1.msra.mxu0 0.0
  %1425 = vmatprep.subr.mxu0 0.0
  %1426 = vmatpush1.msra.mxu0 0.0
  %1427 = vmatprep.subr.mxu0 0.0
  %1428 = vmatpush1.msra.mxu0 0.0
  %1429 = vmatprep.subr.mxu0 0.0
  %1430 = vmatpush1.msra.mxu0 0.0
  %1431 = vmatprep.subr.mxu0 0.0
  %1432 = vmatpush1.msra.mxu0 0.0
  %1433 = vmatprep.subr.mxu0 0.0
  %1434 = vmatpush1.msra.mxu0 0.0
  %1435 = vmatprep.mubr.f32.mxu0 0.0
  %1436 = vmatmul.mubr.f32.gmra.mrb[0].mxu0 %v103
  %v1437 = vpop.f32.mrb[0].mxu0
  %v1438 = vadd.f32 0.0, %v1437
  %v1439 = vpop.f32.mrb[0].mxu0
  %1440 = vmatprep.mubr.f32.mxu0 0.0
  %1441 = vmatmul.mubr.f32.gmra.mrb[0].mxu0 %v106
  %v1442 = vpop.f32.mrb[0].mxu0
  %v1443 = vadd.f32 0.0, %v1442
  %v1444 = vpop.f32.mrb[0].mxu0
  %1445 = vmatprep.mubr.f32.mxu0 0.0
  %1446 = vmatmul.mubr.f32.gmra.mrb[0].mxu0 %v109
  %v1447 = vpop.f32.mrb[0].mxu0
  %v1448 = vadd.f32 0.0, %v1447
  %v1449 = vpop.f32.mrb[0].mxu0
  %1450 = vmatprep.mubr.f32.mxu0 0.0
  %1451 = vmatmul.mubr.f32.gmra.mrb[0].mxu0 %v112
  %v1452 = vpop.f32.mrb[0].mxu0
  %v1453 = vadd.f32 0.0, %v1452
  %v1454 = vpop.f32.mrb[0].mxu0
  %1455 = vmatprep.mubr.f32.mxu0 0.0
  %1456 = vmatmul.mubr.f32.gmra.mrb[0].mxu0 %v115
  %v1457 = vpop.f32.mrb[0].mxu0
  %v1458 = vadd.f32 0.0, %v1457
  %v1459 = vpop.f32.mrb[0].mxu0
  %1460 = vmatprep.mubr.f32.mxu0 0.0
  %1461 = vmatmul.mubr.f32.gmra.mrb[0].mxu0 %v118
  %v1462 = vpop.f32.mrb[0].mxu0
  %v1463 = vadd.f32 0.0, %v1462
  %v1464 = vpop.f32.mrb[0].mxu0
  %1465 = vmatprep.mubr.f32.mxu0 0.0
  %1466 = vmatmul.mubr.f32.gmra.mrb[0].mxu0 %v121
  %v1467 = vpop.f32.mrb[0].mxu0
  %v1468 = vadd.f32 0.0, %v1467
  %v1469 = vpop.f32.mrb[0].mxu0
  %1470 = vmatprep.mubr.f32.mxu0 0.0
  %1471 = vmatmul.mubr.f32.gmra.mrb[0].mxu0 %v124
  %v1472 = vpop.f32.mrb[0].mxu0
  %v1473 = vadd.f32 0.0, %v1472
  %v1474 = vpop.f32.mrb[0].mxu0
  %1475 = vmatprep.mubr.f32.mxu0 0.0
  %1476 = vmatmul.mubr.f32.gmra.mrb[0].mxu0 %v127
  %v1477 = vpop.f32.mrb[0].mxu0
  %v1478 = vadd.f32 0.0, %v1477
  %v1479 = vpop.f32.mrb[0].mxu0
  %1480 = vmatprep.mubr.f32.mxu0 0.0
  %1481 = vmatmul.mubr.f32.gmra.mrb[0].mxu0 %v130
  %v1482 = vpop.f32.mrb[0].mxu0
  %v1483 = vadd.f32 0.0, %v1482
  %v1484 = vpop.f32.mrb[0].mxu0
  %1485 = vmatprep.mubr.f32.mxu0 0.0
  %1486 = vmatmul.mubr.f32.gmra.mrb[0].mxu0 %v133
  %v1487 = vpop.f32.mrb[0].mxu0
  %v1488 = vadd.f32 0.0, %v1487
  %v1489 = vpop.f32.mrb[0].mxu0
  %1490 = vmatprep.mubr.f32.mxu0 0.0
  %1491 = vmatmul.mubr.f32.gmra.mrb[0].mxu0 %v136
  %v1492 = vpop.f32.mrb[0].mxu0
  %v1493 = vadd.f32 0.0, %v1492
  %v1494 = vpop.f32.mrb[0].mxu0
  %1495 = vmatprep.mubr.f32.mxu0 0.0
  %1496 = vmatmul.mubr.f32.gmra.mrb[0].mxu0 %v139
  %v1497 = vpop.f32.mrb[0].mxu0
  %v1498 = vadd.f32 0.0, %v1497
  %v1499 = vpop.f32.mrb[0].mxu0
  %1500 = vmatprep.mubr.f32.mxu0 0.0
  %1501 = vmatmul.mubr.f32.gmra.mrb[0].mxu0 %v142
  %v1502 = vpop.f32.mrb[0].mxu0
  %v1503 = vadd.f32 0.0, %v1502
  %v1504 = vpop.f32.mrb[0].mxu0
  %1505 = vmatprep.mubr.f32.mxu0 0.0
  %1506 = vmatmul.mubr.f32.gmra.mrb[0].mxu0 %v145
  %v1507 = vpop.f32.mrb[0].mxu0
  %v1508 = vadd.f32 0.0, %v1507
  %v1509 = vpop.f32.mrb[0].mxu0
  %1510 = vmatprep.mubr.f32.mxu0 0.0
  %1511 = vmatmul.mubr.f32.gmra.mrb[0].mxu0 %v148
  %v1512 = vpop.f32.mrb[0].mxu0
  %v1513 = vadd.f32 0.0, %v1512
  %v1514 = vpop.f32.mrb[0].mxu0
  %1515 = vmatprep.mubr.f32.mxu0 0.0
  %1516 = vmatmul.mubr.f32.gmra.mrb[0].mxu0 %v151
  %v1517 = vpop.f32.mrb[0].mxu0
  %v1518 = vadd.f32 0.0, %v1517
  %v1519 = vpop.f32.mrb[0].mxu0
  %1520 = vmatprep.mubr.f32.mxu0 0.0
  %1521 = vmatmul.mubr.f32.gmra.mrb[0].mxu0 %v154
  %v1522 = vpop.f32.mrb[0].mxu0
  %v1523 = vadd.f32 0.0, %v1522
  %v1524 = vpop.f32.mrb[0].mxu0
  %1525 = vmatprep.mubr.f32.mxu0 0.0
  %1526 = vmatmul.mubr.f32.gmra.mrb[0].mxu0 %v157
  %v1527 = vpop.f32.mrb[0].mxu0
  %v1528 = vadd.f32 0.0, %v1527
  %v1529 = vpop.f32.mrb[0].mxu0
  %1530 = vmatprep.mubr.f32.mxu0 0.0
  %1531 = vmatmul.mubr.f32.gmra.mrb[0].mxu0 %v160
  %v1532 = vpop.f32.mrb[0].mxu0
  %v1533 = vadd.f32 0.0, %v1532
  %v1534 = vpop.f32.mrb[0].mxu0
  %1535 = vmatprep.mubr.f32.mxu0 0.0
  %1536 = vmatmul.mubr.f32.gmra.mrb[0].mxu0 %v163
  %v1537 = vpop.f32.mrb[0].mxu0
  %v1538 = vadd.f32 0.0, %v1537
  %v1539 = vpop.f32.mrb[0].mxu0
  %1540 = vmatprep.mubr.f32.mxu0 0.0
  %1541 = vmatmul.mubr.f32.gmra.mrb[0].mxu0 %v166
  %v1542 = vpop.f32.mrb[0].mxu0
  %v1543 = vadd.f32 0.0, %v1542
  %v1544 = vpop.f32.mrb[0].mxu0
  %1545 = vmatprep.mubr.f32.mxu0 0.0
  %1546 = vmatmul.mubr.f32.gmra.mrb[0].mxu0 %v169
  %v1547 = vpop.f32.mrb[0].mxu0
  %v1548 = vadd.f32 0.0, %v1547
  %v1549 = vpop.f32.mrb[0].mxu0
  %1550 = vmatprep.mubr.f32.mxu0 0.0
  %1551 = vmatmul.mubr.f32.gmra.mrb[0].mxu0 %v172
  %v1552 = vpop.f32.mrb[0].mxu0
  %v1553 = vadd.f32 0.0, %v1552
  %v1554 = vpop.f32.mrb[0].mxu0
  %1555 = vmatprep.mubr.f32.mxu0 0.0
  %1556 = vmatmul.mubr.f32.gmra.mrb[0].mxu0 %v175
  %v1557 = vpop.f32.mrb[0].mxu0
  %v1558 = vadd.f32 0.0, %v1557
  %v1559 = vpop.f32.mrb[0].mxu0
  %1560 = vmatprep.mubr.f32.mxu0 0.0
  %1561 = vmatmul.mubr.f32.gmra.mrb[0].mxu0 %v178
  %v1562 = vpop.f32.mrb[0].mxu0
  %v1563 = vadd.f32 0.0, %v1562
  %v1564 = vpop.f32.mrb[0].mxu0
  %1565 = vmatprep.mubr.f32.mxu0 0.0
  %1566 = vmatmul.mubr.f32.gmra.mrb[0].mxu0 %v181
  %v1567 = vpop.f32.mrb[0].mxu0
  %v1568 = vadd.f32 0.0, %v1567
  %v1569 = vpop.f32.mrb[0].mxu0
  %1570 = vmatprep.mubr.f32.mxu0 0.0
  %1571 = vmatmul.mubr.f32.gmra.mrb[0].mxu0 %v184
  %v1572 = vpop.f32.mrb[0].mxu0
  %v1573 = vadd.f32 0.0, %v1572
  %v1574 = vpop.f32.mrb[0].mxu0
  %1575 = vdwg.mxu0
  %1576 = vmatprep.subr.mxu0 0.0
  %1577 = vmatpush1.msra.mxu0 %v1346
  %1578 = vmatprep.subr.mxu0 0.0
  %1579 = vmatpush1.msra.mxu0 %v1347
  %1580 = vmatprep.subr.mxu0 0.0
  %1581 = vmatpush1.msra.mxu0 %v1348
  %1582 = vmatprep.subr.mxu0 0.0
  %1583 = vmatpush1.msra.mxu0 %v1349
  %1584 = vmatprep.subr.mxu0 0.0
  %1585 = vmatpush1.msra.mxu0 %v1350
  %1586 = vmatprep.subr.mxu0 0.0
  %1587 = vmatpush1.msra.mxu0 %v1351
  %1588 = vmatprep.subr.mxu0 0.0
  %1589 = vmatpush1.msra.mxu0 %v1352
  %1590 = vmatprep.subr.mxu0 0.0
  %1591 = vmatpush1.msra.mxu0 %v1353
  %1592 = vmatprep.subr.mxu0 0.0
  %1593 = vmatpush1.msra.mxu0 %v1354
  %1594 = vmatprep.subr.mxu0 0.0
  %1595 = vmatpush1.msra.mxu0 %v1355
  %1596 = vmatprep.subr.mxu0 0.0
  %1597 = vmatpush1.msra.mxu0 %v1356
  %1598 = vmatprep.subr.mxu0 0.0
  %1599 = vmatpush1.msra.mxu0 %v1357
  %1600 = vmatprep.subr.mxu0 0.0
  %1601 = vmatpush1.msra.mxu0 0.0
  %1602 = vmatprep.subr.mxu0 0.0
  %1603 = vmatpush1.msra.mxu0 0.0
  %1604 = vmatprep.subr.mxu0 0.0
  %1605 = vmatpush1.msra.mxu0 0.0
  %1606 = vmatprep.subr.mxu0 0.0
  %1607 = vmatpush1.msra.mxu0 0.0
  %1608 = vmatprep.subr.mxu0 0.0
  %1609 = vmatpush1.msra.mxu0 0.0
  %1610 = vmatprep.subr.mxu0 0.0
  %1611 = vmatpush1.msra.mxu0 0.0
  %1612 = vmatprep.subr.mxu0 0.0
  %1613 = vmatpush1.msra.mxu0 0.0
  %1614 = vmatprep.subr.mxu0 0.0
  %1615 = vmatpush1.msra.mxu0 0.0
  %1616 = vmatprep.subr.mxu0 0.0
  %1617 = vmatpush1.msra.mxu0 0.0
  %1618 = vmatprep.subr.mxu0 0.0
  %1619 = vmatpush1.msra.mxu0 0.0
  %1620 = vmatprep.subr.mxu0 0.0
  %1621 = vmatpush1.msra.mxu0 0.0
  %1622 = vmatprep.subr.mxu0 0.0
  %1623 = vmatpush1.msra.mxu0 0.0
  %1624 = vmatprep.subr.mxu0 0.0
  %1625 = vmatpush1.msra.mxu0 0.0
  %1626 = vmatprep.subr.mxu0 0.0
  %1627 = vmatpush1.msra.mxu0 0.0
  %1628 = vmatprep.subr.mxu0 0.0
  %1629 = vmatpush1.msra.mxu0 0.0
  %1630 = vmatprep.subr.mxu0 0.0
  %1631 = vmatpush1.msra.mxu0 0.0
  %1632 = vmatprep.subr.mxu0 0.0
  %1633 = vmatpush1.msra.mxu0 0.0
  %1634 = vmatprep.subr.mxu0 0.0
  %1635 = vmatpush1.msra.mxu0 0.0
  %1636 = vmatprep.subr.mxu0 0.0
  %1637 = vmatpush1.msra.mxu0 0.0
  %1638 = vmatprep.subr.mxu0 0.0
  %1639 = vmatpush1.msra.mxu0 0.0
  %1640 = vmatprep.mubr.f32.mxu0 0.0
  %1641 = vmatmul.mubr.f32.gmra.mrb[0].mxu0 %v392
  %v1642 = vpop.f32.mrb[0].mxu0
  %v1643 = vadd.f32 %v1438, %v1642
  %v1644 = vpop.f32.mrb[0].mxu0
  %1645 = vmatprep.mubr.f32.mxu0 0.0
  %1646 = vmatmul.mubr.f32.gmra.mrb[0].mxu0 %v103
  %v1647 = vpop.f32.mrb[0].mxu0
  %v1648 = vadd.f32 %v1443, %v1647
  %v1649 = vpop.f32.mrb[0].mxu0
  %1650 = vmatprep.mubr.f32.mxu0 0.0
  %1651 = vmatmul.mubr.f32.gmra.mrb[0].mxu0 %v106
  %v1652 = vpop.f32.mrb[0].mxu0
  %v1653 = vadd.f32 %v1448, %v1652
  %v1654 = vpop.f32.mrb[0].mxu0
  %1655 = vmatprep.mubr.f32.mxu0 0.0
  %1656 = vmatmul.mubr.f32.gmra.mrb[0].mxu0 %v109
  %v1657 = vpop.f32.mrb[0].mxu0
  %v1658 = vadd.f32 %v1453, %v1657
  %v1659 = vpop.f32.mrb[0].mxu0
  %1660 = vmatprep.mubr.f32.mxu0 0.0
  %1661 = vmatmul.mubr.f32.gmra.mrb[0].mxu0 %v112
  %v1662 = vpop.f32.mrb[0].mxu0
  %v1663 = vadd.f32 %v1458, %v1662
  %v1664 = vpop.f32.mrb[0].mxu0
  %1665 = vmatprep.mubr.f32.mxu0 0.0
  %1666 = vmatmul.mubr.f32.gmra.mrb[0].mxu0 %v115
  %v1667 = vpop.f32.mrb[0].mxu0
  %v1668 = vadd.f32 %v1463, %v1667
  %v1669 = vpop.f32.mrb[0].mxu0
  %1670 = vmatprep.mubr.f32.mxu0 0.0
  %1671 = vmatmul.mubr.f32.gmra.mrb[0].mxu0 %v118
  %v1672 = vpop.f32.mrb[0].mxu0
  %v1673 = vadd.f32 %v1468, %v1672
  %v1674 = vpop.f32.mrb[0].mxu0
  %1675 = vmatprep.mubr.f32.mxu0 0.0
  %1676 = vmatmul.mubr.f32.gmra.mrb[0].mxu0 %v121
  %v1677 = vpop.f32.mrb[0].mxu0
  %v1678 = vadd.f32 %v1473, %v1677
  %v1679 = vpop.f32.mrb[0].mxu0
  %1680 = vmatprep.mubr.f32.mxu0 0.0
  %1681 = vmatmul.mubr.f32.gmra.mrb[0].mxu0 %v124
  %v1682 = vpop.f32.mrb[0].mxu0
  %v1683 = vadd.f32 %v1478, %v1682
  %v1684 = vpop.f32.mrb[0].mxu0
  %1685 = vmatprep.mubr.f32.mxu0 0.0
  %1686 = vmatmul.mubr.f32.gmra.mrb[0].mxu0 %v127
  %v1687 = vpop.f32.mrb[0].mxu0
  %v1688 = vadd.f32 %v1483, %v1687
  %v1689 = vpop.f32.mrb[0].mxu0
  %1690 = vmatprep.mubr.f32.mxu0 0.0
  %1691 = vmatmul.mubr.f32.gmra.mrb[0].mxu0 %v130
  %v1692 = vpop.f32.mrb[0].mxu0
  %v1693 = vadd.f32 %v1488, %v1692
  %v1694 = vpop.f32.mrb[0].mxu0
  %1695 = vmatprep.mubr.f32.mxu0 0.0
  %1696 = vmatmul.mubr.f32.gmra.mrb[0].mxu0 %v133
  %v1697 = vpop.f32.mrb[0].mxu0
  %v1698 = vadd.f32 %v1493, %v1697
  %v1699 = vpop.f32.mrb[0].mxu0
  %1700 = vmatprep.mubr.f32.mxu0 0.0
  %1701 = vmatmul.mubr.f32.gmra.mrb[0].mxu0 %v136
  %v1702 = vpop.f32.mrb[0].mxu0
  %v1703 = vadd.f32 %v1498, %v1702
  %v1704 = vpop.f32.mrb[0].mxu0
  %1705 = vmatprep.mubr.f32.mxu0 0.0
  %1706 = vmatmul.mubr.f32.gmra.mrb[0].mxu0 %v139
  %v1707 = vpop.f32.mrb[0].mxu0
  %v1708 = vadd.f32 %v1503, %v1707
  %v1709 = vpop.f32.mrb[0].mxu0
  %1710 = vmatprep.mubr.f32.mxu0 0.0
  %1711 = vmatmul.mubr.f32.gmra.mrb[0].mxu0 %v142
  %v1712 = vpop.f32.mrb[0].mxu0
  %v1713 = vadd.f32 %v1508, %v1712
  %v1714 = vpop.f32.mrb[0].mxu0
  %1715 = vmatprep.mubr.f32.mxu0 0.0
  %1716 = vmatmul.mubr.f32.gmra.mrb[0].mxu0 %v145
  %v1717 = vpop.f32.mrb[0].mxu0
  %v1718 = vadd.f32 %v1513, %v1717
  %v1719 = vpop.f32.mrb[0].mxu0
  %1720 = vmatprep.mubr.f32.mxu0 0.0
  %1721 = vmatmul.mubr.f32.gmra.mrb[0].mxu0 %v148
  %v1722 = vpop.f32.mrb[0].mxu0
  %v1723 = vadd.f32 %v1518, %v1722
  %v1724 = vpop.f32.mrb[0].mxu0
  %1725 = vmatprep.mubr.f32.mxu0 0.0
  %1726 = vmatmul.mubr.f32.gmra.mrb[0].mxu0 %v151
  %v1727 = vpop.f32.mrb[0].mxu0
  %v1728 = vadd.f32 %v1523, %v1727
  %v1729 = vpop.f32.mrb[0].mxu0
  %1730 = vmatprep.mubr.f32.mxu0 0.0
  %1731 = vmatmul.mubr.f32.gmra.mrb[0].mxu0 %v154
  %v1732 = vpop.f32.mrb[0].mxu0
  %v1733 = vadd.f32 %v1528, %v1732
  %v1734 = vpop.f32.mrb[0].mxu0
  %1735 = vmatprep.mubr.f32.mxu0 0.0
  %1736 = vmatmul.mubr.f32.gmra.mrb[0].mxu0 %v157
  %v1737 = vpop.f32.mrb[0].mxu0
  %v1738 = vadd.f32 %v1533, %v1737
  %v1739 = vpop.f32.mrb[0].mxu0
  %1740 = vmatprep.mubr.f32.mxu0 0.0
  %1741 = vmatmul.mubr.f32.gmra.mrb[0].mxu0 %v160
  %v1742 = vpop.f32.mrb[0].mxu0
  %v1743 = vadd.f32 %v1538, %v1742
  %v1744 = vpop.f32.mrb[0].mxu0
  %1745 = vmatprep.mubr.f32.mxu0 0.0
  %1746 = vmatmul.mubr.f32.gmra.mrb[0].mxu0 %v163
  %v1747 = vpop.f32.mrb[0].mxu0
  %v1748 = vadd.f32 %v1543, %v1747
  %v1749 = vpop.f32.mrb[0].mxu0
  %1750 = vmatprep.mubr.f32.mxu0 0.0
  %1751 = vmatmul.mubr.f32.gmra.mrb[0].mxu0 %v166
  %v1752 = vpop.f32.mrb[0].mxu0
  %v1753 = vadd.f32 %v1548, %v1752
  %v1754 = vpop.f32.mrb[0].mxu0
  %1755 = vmatprep.mubr.f32.mxu0 0.0
  %1756 = vmatmul.mubr.f32.gmra.mrb[0].mxu0 %v169
  %v1757 = vpop.f32.mrb[0].mxu0
  %v1758 = vadd.f32 %v1553, %v1757
  %v1759 = vpop.f32.mrb[0].mxu0
  %1760 = vmatprep.mubr.f32.mxu0 0.0
  %1761 = vmatmul.mubr.f32.gmra.mrb[0].mxu0 %v172
  %v1762 = vpop.f32.mrb[0].mxu0
  %v1763 = vadd.f32 %v1558, %v1762
  %v1764 = vpop.f32.mrb[0].mxu0
  %1765 = vmatprep.mubr.f32.mxu0 0.0
  %1766 = vmatmul.mubr.f32.gmra.mrb[0].mxu0 %v175
  %v1767 = vpop.f32.mrb[0].mxu0
  %v1768 = vadd.f32 %v1563, %v1767
  %v1769 = vpop.f32.mrb[0].mxu0
  %1770 = vmatprep.mubr.f32.mxu0 0.0
  %1771 = vmatmul.mubr.f32.gmra.mrb[0].mxu0 %v178
  %v1772 = vpop.f32.mrb[0].mxu0
  %v1773 = vadd.f32 %v1568, %v1772
  %v1774 = vpop.f32.mrb[0].mxu0
  %1775 = vmatprep.mubr.f32.mxu0 0.0
  %1776 = vmatmul.mubr.f32.gmra.mrb[0].mxu0 %v181
  %v1777 = vpop.f32.mrb[0].mxu0
  %v1778 = vadd.f32 %v1573, %v1777
  %v1779 = vpop.f32.mrb[0].mxu0
  %1780 = vdwg.mxu0
  %s1781 = scalar_lea.vmem %s2, 192
  %v1782 = vld [vmem:[%s1781] sm:$0xff]
  %v1783 = vld [vmem:[%s1781 + $0x8] sm:$0xff]
  %v1784 = vld [vmem:[%s1781 + $0x10] sm:$0xff]
  %v1785 = vld [vmem:[%s1781 + $0x18] sm:$0xff]
  %v1786 = vld [vmem:[%s1781 + $0x20] sm:$0xff]
  %v1787 = vld [vmem:[%s1781 + $0x28] sm:$0xff]
  %v1788 = vld [vmem:[%s1781 + $0x30] sm:$0xff]
  %v1789 = vld [vmem:[%s1781 + $0x38] sm:$0xff]
  %v1790 = vld [vmem:[%s1781 + $0x40] sm:$0xff]
  %v1791 = vld [vmem:[%s1781 + $0x48] sm:$0xff]
  %v1792 = vld [vmem:[%s1781 + $0x50] sm:$0xff]
  %v1793 = vld [vmem:[%s1781 + $0x58] sm:$0xff]
  %1794 = vmatprep.subr.mxu0 0.0
  %1795 = vmatpush1.msra.mxu0 %v1782
  %1796 = vmatprep.subr.mxu0 0.0
  %1797 = vmatpush1.msra.mxu0 %v1783
  %1798 = vmatprep.subr.mxu0 0.0
  %1799 = vmatpush1.msra.mxu0 %v1784
  %1800 = vmatprep.subr.mxu0 0.0
  %1801 = vmatpush1.msra.mxu0 %v1785
  %1802 = vmatprep.subr.mxu0 0.0
  %1803 = vmatpush1.msra.mxu0 %v1786
  %1804 = vmatprep.subr.mxu0 0.0
  %1805 = vmatpush1.msra.mxu0 %v1787
  %1806 = vmatprep.subr.mxu0 0.0
  %1807 = vmatpush1.msra.mxu0 %v1788
  %1808 = vmatprep.subr.mxu0 0.0
  %1809 = vmatpush1.msra.mxu0 %v1789
  %1810 = vmatprep.subr.mxu0 0.0
  %1811 = vmatpush1.msra.mxu0 %v1790
  %1812 = vmatprep.subr.mxu0 0.0
  %1813 = vmatpush1.msra.mxu0 %v1791
  %1814 = vmatprep.subr.mxu0 0.0
  %1815 = vmatpush1.msra.mxu0 %v1792
  %1816 = vmatprep.subr.mxu0 0.0
  %1817 = vmatpush1.msra.mxu0 %v1793
  %1818 = vmatprep.subr.mxu0 0.0
  %1819 = vmatpush1.msra.mxu0 0.0
  %1820 = vmatprep.subr.mxu0 0.0
  %1821 = vmatpush1.msra.mxu0 0.0
  %1822 = vmatprep.subr.mxu0 0.0
  %1823 = vmatpush1.msra.mxu0 0.0
  %1824 = vmatprep.subr.mxu0 0.0
  %1825 = vmatpush1.msra.mxu0 0.0
  %1826 = vmatprep.subr.mxu0 0.0
  %1827 = vmatpush1.msra.mxu0 0.0
  %1828 = vmatprep.subr.mxu0 0.0
  %1829 = vmatpush1.msra.mxu0 0.0
  %1830 = vmatprep.subr.mxu0 0.0
  %1831 = vmatpush1.msra.mxu0 0.0
  %1832 = vmatprep.subr.mxu0 0.0
  %1833 = vmatpush1.msra.mxu0 0.0
  %1834 = vmatprep.subr.mxu0 0.0
  %1835 = vmatpush1.msra.mxu0 0.0
  %1836 = vmatprep.subr.mxu0 0.0
  %1837 = vmatpush1.msra.mxu0 0.0
  %1838 = vmatprep.subr.mxu0 0.0
  %1839 = vmatpush1.msra.mxu0 0.0
  %1840 = vmatprep.subr.mxu0 0.0
  %1841 = vmatpush1.msra.mxu0 0.0
  %1842 = vmatprep.subr.mxu0 0.0
  %1843 = vmatpush1.msra.mxu0 0.0
  %1844 = vmatprep.subr.mxu0 0.0
  %1845 = vmatpush1.msra.mxu0 0.0
  %1846 = vmatprep.subr.mxu0 0.0
  %1847 = vmatpush1.msra.mxu0 0.0
  %1848 = vmatprep.subr.mxu0 0.0
  %1849 = vmatpush1.msra.mxu0 0.0
  %1850 = vmatprep.subr.mxu0 0.0
  %1851 = vmatpush1.msra.mxu0 0.0
  %1852 = vmatprep.subr.mxu0 0.0
  %1853 = vmatpush1.msra.mxu0 0.0
  %1854 = vmatprep.subr.mxu0 0.0
  %1855 = vmatpush1.msra.mxu0 0.0
  %1856 = vmatprep.subr.mxu0 0.0
  %1857 = vmatpush1.msra.mxu0 0.0
  %1858 = vmatprep.mubr.f32.mxu0 0.0
  %1859 = vmatmul.mubr.f32.gmra.mrb[0].mxu0 %v106
  %v1860 = vpop.f32.mrb[0].mxu0
  %v1861 = vadd.f32 0.0, %v1860
  %v1862 = vpop.f32.mrb[0].mxu0
  %1863 = vmatprep.mubr.f32.mxu0 0.0
  %1864 = vmatmul.mubr.f32.gmra.mrb[0].mxu0 %v109
  %v1865 = vpop.f32.mrb[0].mxu0
  %v1866 = vadd.f32 0.0, %v1865
  %v1867 = vpop.f32.mrb[0].mxu0
  %1868 = vmatprep.mubr.f32.mxu0 0.0
  %1869 = vmatmul.mubr.f32.gmra.mrb[0].mxu0 %v112
  %v1870 = vpop.f32.mrb[0].mxu0
  %v1871 = vadd.f32 0.0, %v1870
  %v1872 = vpop.f32.mrb[0].mxu0
  %1873 = vmatprep.mubr.f32.mxu0 0.0
  %1874 = vmatmul.mubr.f32.gmra.mrb[0].mxu0 %v115
  %v1875 = vpop.f32.mrb[0].mxu0
  %v1876 = vadd.f32 0.0, %v1875
  %v1877 = vpop.f32.mrb[0].mxu0
  %1878 = vmatprep.mubr.f32.mxu0 0.0
  %1879 = vmatmul.mubr.f32.gmra.mrb[0].mxu0 %v118
  %v1880 = vpop.f32.mrb[0].mxu0
  %v1881 = vadd.f32 0.0, %v1880
  %v1882 = vpop.f32.mrb[0].mxu0
  %1883 = vmatprep.mubr.f32.mxu0 0.0
  %1884 = vmatmul.mubr.f32.gmra.mrb[0].mxu0 %v121
  %v1885 = vpop.f32.mrb[0].mxu0
  %v1886 = vadd.f32 0.0, %v1885
  %v1887 = vpop.f32.mrb[0].mxu0
  %1888 = vmatprep.mubr.f32.mxu0 0.0
  %1889 = vmatmul.mubr.f32.gmra.mrb[0].mxu0 %v124
  %v1890 = vpop.f32.mrb[0].mxu0
  %v1891 = vadd.f32 0.0, %v1890
  %v1892 = vpop.f32.mrb[0].mxu0
  %1893 = vmatprep.mubr.f32.mxu0 0.0
  %1894 = vmatmul.mubr.f32.gmra.mrb[0].mxu0 %v127
  %v1895 = vpop.f32.mrb[0].mxu0
  %v1896 = vadd.f32 0.0, %v1895
  %v1897 = vpop.f32.mrb[0].mxu0
  %1898 = vmatprep.mubr.f32.mxu0 0.0
  %1899 = vmatmul.mubr.f32.gmra.mrb[0].mxu0 %v130
  %v1900 = vpop.f32.mrb[0].mxu0
  %v1901 = vadd.f32 0.0, %v1900
  %v1902 = vpop.f32.mrb[0].mxu0
  %1903 = vmatprep.mubr.f32.mxu0 0.0
  %1904 = vmatmul.mubr.f32.gmra.mrb[0].mxu0 %v133
  %v1905 = vpop.f32.mrb[0].mxu0
  %v1906 = vadd.f32 0.0, %v1905
  %v1907 = vpop.f32.mrb[0].mxu0
  %1908 = vmatprep.mubr.f32.mxu0 0.0
  %1909 = vmatmul.mubr.f32.gmra.mrb[0].mxu0 %v136
  %v1910 = vpop.f32.mrb[0].mxu0
  %v1911 = vadd.f32 0.0, %v1910
  %v1912 = vpop.f32.mrb[0].mxu0
  %1913 = vmatprep.mubr.f32.mxu0 0.0
  %1914 = vmatmul.mubr.f32.gmra.mrb[0].mxu0 %v139
  %v1915 = vpop.f32.mrb[0].mxu0
  %v1916 = vadd.f32 0.0, %v1915
  %v1917 = vpop.f32.mrb[0].mxu0
  %1918 = vmatprep.mubr.f32.mxu0 0.0
  %1919 = vmatmul.mubr.f32.gmra.mrb[0].mxu0 %v142
  %v1920 = vpop.f32.mrb[0].mxu0
  %v1921 = vadd.f32 0.0, %v1920
  %v1922 = vpop.f32.mrb[0].mxu0
  %1923 = vmatprep.mubr.f32.mxu0 0.0
  %1924 = vmatmul.mubr.f32.gmra.mrb[0].mxu0 %v145
  %v1925 = vpop.f32.mrb[0].mxu0
  %v1926 = vadd.f32 0.0, %v1925
  %v1927 = vpop.f32.mrb[0].mxu0
  %1928 = vmatprep.mubr.f32.mxu0 0.0
  %1929 = vmatmul.mubr.f32.gmra.mrb[0].mxu0 %v148
  %v1930 = vpop.f32.mrb[0].mxu0
  %v1931 = vadd.f32 0.0, %v1930
  %v1932 = vpop.f32.mrb[0].mxu0
  %1933 = vmatprep.mubr.f32.mxu0 0.0
  %1934 = vmatmul.mubr.f32.gmra.mrb[0].mxu0 %v151
  %v1935 = vpop.f32.mrb[0].mxu0
  %v1936 = vadd.f32 0.0, %v1935
  %v1937 = vpop.f32.mrb[0].mxu0
  %1938 = vmatprep.mubr.f32.mxu0 0.0
  %1939 = vmatmul.mubr.f32.gmra.mrb[0].mxu0 %v154
  %v1940 = vpop.f32.mrb[0].mxu0
  %v1941 = vadd.f32 0.0, %v1940
  %v1942 = vpop.f32.mrb[0].mxu0
  %1943 = vmatprep.mubr.f32.mxu0 0.0
  %1944 = vmatmul.mubr.f32.gmra.mrb[0].mxu0 %v157
  %v1945 = vpop.f32.mrb[0].mxu0
  %v1946 = vadd.f32 0.0, %v1945
  %v1947 = vpop.f32.mrb[0].mxu0
  %1948 = vmatprep.mubr.f32.mxu0 0.0
  %1949 = vmatmul.mubr.f32.gmra.mrb[0].mxu0 %v160
  %v1950 = vpop.f32.mrb[0].mxu0
  %v1951 = vadd.f32 0.0, %v1950
  %v1952 = vpop.f32.mrb[0].mxu0
  %1953 = vmatprep.mubr.f32.mxu0 0.0
  %1954 = vmatmul.mubr.f32.gmra.mrb[0].mxu0 %v163
  %v1955 = vpop.f32.mrb[0].mxu0
  %v1956 = vadd.f32 0.0, %v1955
  %v1957 = vpop.f32.mrb[0].mxu0
  %1958 = vmatprep.mubr.f32.mxu0 0.0
  %1959 = vmatmul.mubr.f32.gmra.mrb[0].mxu0 %v166
  %v1960 = vpop.f32.mrb[0].mxu0
  %v1961 = vadd.f32 0.0, %v1960
  %v1962 = vpop.f32.mrb[0].mxu0
  %1963 = vmatprep.mubr.f32.mxu0 0.0
  %1964 = vmatmul.mubr.f32.gmra.mrb[0].mxu0 %v169
  %v1965 = vpop.f32.mrb[0].mxu0
  %v1966 = vadd.f32 0.0, %v1965
  %v1967 = vpop.f32.mrb[0].mxu0
  %1968 = vmatprep.mubr.f32.mxu0 0.0
  %1969 = vmatmul.mubr.f32.gmra.mrb[0].mxu0 %v172
  %v1970 = vpop.f32.mrb[0].mxu0
  %v1971 = vadd.f32 0.0, %v1970
  %v1972 = vpop.f32.mrb[0].mxu0
  %1973 = vmatprep.mubr.f32.mxu0 0.0
  %1974 = vmatmul.mubr.f32.gmra.mrb[0].mxu0 %v175
  %v1975 = vpop.f32.mrb[0].mxu0
  %v1976 = vadd.f32 0.0, %v1975
  %v1977 = vpop.f32.mrb[0].mxu0
  %1978 = vmatprep.mubr.f32.mxu0 0.0
  %1979 = vmatmul.mubr.f32.gmra.mrb[0].mxu0 %v178
  %v1980 = vpop.f32.mrb[0].mxu0
  %v1981 = vadd.f32 0.0, %v1980
  %v1982 = vpop.f32.mrb[0].mxu0
  %1983 = vmatprep.mubr.f32.mxu0 0.0
  %1984 = vmatmul.mubr.f32.gmra.mrb[0].mxu0 %v181
  %v1985 = vpop.f32.mrb[0].mxu0
  %v1986 = vadd.f32 0.0, %v1985
  %v1987 = vpop.f32.mrb[0].mxu0
  %1988 = vmatprep.mubr.f32.mxu0 0.0
  %1989 = vmatmul.mubr.f32.gmra.mrb[0].mxu0 %v184
  %v1990 = vpop.f32.mrb[0].mxu0
  %v1991 = vadd.f32 0.0, %v1990
  %v1992 = vpop.f32.mrb[0].mxu0
  %1993 = vmatprep.mubr.f32.mxu0 0.0
  %1994 = vmatmul.mubr.f32.gmra.mrb[0].mxu0 %v613
  %v1995 = vpop.f32.mrb[0].mxu0
  %v1996 = vadd.f32 0.0, %v1995
  %v1997 = vpop.f32.mrb[0].mxu0
  %1998 = vdwg.mxu0
  %v1999 = vadd.f32 %v1643, %v1861
  %v2000 = vadd.f32 %v1648, %v1866
  %v2001 = vadd.f32 %v1653, %v1871
  %v2002 = vadd.f32 %v1658, %v1876
  %v2003 = vadd.f32 %v1663, %v1881
  %v2004 = vadd.f32 %v1668, %v1886
  %v2005 = vadd.f32 %v1673, %v1891
  %v2006 = vadd.f32 %v1678, %v1896
  %v2007 = vadd.f32 %v1683, %v1901
  %v2008 = vadd.f32 %v1688, %v1906
  %v2009 = vadd.f32 %v1693, %v1911
  %v2010 = vadd.f32 %v1698, %v1916
  %v2011 = vadd.f32 %v1703, %v1921
  %v2012 = vadd.f32 %v1708, %v1926
  %v2013 = vadd.f32 %v1713, %v1931
  %v2014 = vadd.f32 %v1718, %v1936
  %v2015 = vadd.f32 %v1723, %v1941
  %v2016 = vadd.f32 %v1728, %v1946
  %v2017 = vadd.f32 %v1733, %v1951
  %v2018 = vadd.f32 %v1738, %v1956
  %v2019 = vadd.f32 %v1743, %v1961
  %v2020 = vadd.f32 %v1748, %v1966
  %v2021 = vadd.f32 %v1753, %v1971
  %v2022 = vadd.f32 %v1758, %v1976
  %v2023 = vadd.f32 %v1763, %v1981
  %v2024 = vadd.f32 %v1768, %v1986
  %v2025 = vadd.f32 %v1773, %v1991
  %v2026 = vadd.f32 %v1778, %v1996
  %s2027 = scalar_lea.vmem %s2, 288
  %v2028 = vld [vmem:[%s2027] sm:$0xff]
  %v2029 = vld [vmem:[%s2027 + $0x8] sm:$0xff]
  %v2030 = vld [vmem:[%s2027 + $0x10] sm:$0xff]
  %v2031 = vld [vmem:[%s2027 + $0x18] sm:$0xff]
  %v2032 = vld [vmem:[%s2027 + $0x20] sm:$0xff]
  %v2033 = vld [vmem:[%s2027 + $0x28] sm:$0xff]
  %v2034 = vld [vmem:[%s2027 + $0x30] sm:$0xff]
  %v2035 = vld [vmem:[%s2027 + $0x38] sm:$0xff]
  %v2036 = vld [vmem:[%s2027 + $0x40] sm:$0xff]
  %v2037 = vld [vmem:[%s2027 + $0x48] sm:$0xff]
  %v2038 = vld [vmem:[%s2027 + $0x50] sm:$0xff]
  %v2039 = vld [vmem:[%s2027 + $0x58] sm:$0xff]
  %2040 = vmatprep.subr.mxu0 0.0
  %2041 = vmatpush1.msra.mxu0 %v2028
  %2042 = vmatprep.subr.mxu0 0.0
  %2043 = vmatpush1.msra.mxu0 %v2029
  %2044 = vmatprep.subr.mxu0 0.0
  %2045 = vmatpush1.msra.mxu0 %v2030
  %2046 = vmatprep.subr.mxu0 0.0
  %2047 = vmatpush1.msra.mxu0 %v2031
  %2048 = vmatprep.subr.mxu0 0.0
  %2049 = vmatpush1.msra.mxu0 %v2032
  %2050 = vmatprep.subr.mxu0 0.0
  %2051 = vmatpush1.msra.mxu0 %v2033
  %2052 = vmatprep.subr.mxu0 0.0
  %2053 = vmatpush1.msra.mxu0 %v2034
  %2054 = vmatprep.subr.mxu0 0.0
  %2055 = vmatpush1.msra.mxu0 %v2035
  %2056 = vmatprep.subr.mxu0 0.0
  %2057 = vmatpush1.msra.mxu0 %v2036
  %2058 = vmatprep.subr.mxu0 0.0
  %2059 = vmatpush1.msra.mxu0 %v2037
  %2060 = vmatprep.subr.mxu0 0.0
  %2061 = vmatpush1.msra.mxu0 %v2038
  %2062 = vmatprep.subr.mxu0 0.0
  %2063 = vmatpush1.msra.mxu0 %v2039
  %2064 = vmatprep.subr.mxu0 0.0
  %2065 = vmatpush1.msra.mxu0 0.0
  %2066 = vmatprep.subr.mxu0 0.0
  %2067 = vmatpush1.msra.mxu0 0.0
  %2068 = vmatprep.subr.mxu0 0.0
  %2069 = vmatpush1.msra.mxu0 0.0
  %2070 = vmatprep.subr.mxu0 0.0
  %2071 = vmatpush1.msra.mxu0 0.0
  %2072 = vmatprep.subr.mxu0 0.0
  %2073 = vmatpush1.msra.mxu0 0.0
  %2074 = vmatprep.subr.mxu0 0.0
  %2075 = vmatpush1.msra.mxu0 0.0
  %2076 = vmatprep.subr.mxu0 0.0
  %2077 = vmatpush1.msra.mxu0 0.0
  %2078 = vmatprep.subr.mxu0 0.0
  %2079 = vmatpush1.msra.mxu0 0.0
  %2080 = vmatprep.subr.mxu0 0.0
  %2081 = vmatpush1.msra.mxu0 0.0
  %2082 = vmatprep.subr.mxu0 0.0
  %2083 = vmatpush1.msra.mxu0 0.0
  %2084 = vmatprep.subr.mxu0 0.0
  %2085 = vmatpush1.msra.mxu0 0.0
  %2086 = vmatprep.subr.mxu0 0.0
  %2087 = vmatpush1.msra.mxu0 0.0
  %2088 = vmatprep.subr.mxu0 0.0
  %2089 = vmatpush1.msra.mxu0 0.0
  %2090 = vmatprep.subr.mxu0 0.0
  %2091 = vmatpush1.msra.mxu0 0.0
  %2092 = vmatprep.subr.mxu0 0.0
  %2093 = vmatpush1.msra.mxu0 0.0
  %2094 = vmatprep.subr.mxu0 0.0
  %2095 = vmatpush1.msra.mxu0 0.0
  %2096 = vmatprep.subr.mxu0 0.0
  %2097 = vmatpush1.msra.mxu0 0.0
  %2098 = vmatprep.subr.mxu0 0.0
  %2099 = vmatpush1.msra.mxu0 0.0
  %2100 = vmatprep.subr.mxu0 0.0
  %2101 = vmatpush1.msra.mxu0 0.0
  %2102 = vmatprep.subr.mxu0 0.0
  %2103 = vmatpush1.msra.mxu0 0.0
  %2104 = vmatprep.mubr.f32.mxu0 0.0
  %2105 = vmatmul.mubr.f32.gmra.mrb[0].mxu0 %v109
  %v2106 = vpop.f32.mrb[0].mxu0
  %v2107 = vadd.f32 0.0, %v2106
  %v2108 = vpop.f32.mrb[0].mxu0
  %2109 = vmatprep.mubr.f32.mxu0 0.0
  %2110 = vmatmul.mubr.f32.gmra.mrb[0].mxu0 %v112
  %v2111 = vpop.f32.mrb[0].mxu0
  %v2112 = vadd.f32 0.0, %v2111
  %v2113 = vpop.f32.mrb[0].mxu0
  %2114 = vmatprep.mubr.f32.mxu0 0.0
  %2115 = vmatmul.mubr.f32.gmra.mrb[0].mxu0 %v115
  %v2116 = vpop.f32.mrb[0].mxu0
  %v2117 = vadd.f32 0.0, %v2116
  %v2118 = vpop.f32.mrb[0].mxu0
  %2119 = vmatprep.mubr.f32.mxu0 0.0
  %2120 = vmatmul.mubr.f32.gmra.mrb[0].mxu0 %v118
  %v2121 = vpop.f32.mrb[0].mxu0
  %v2122 = vadd.f32 0.0, %v2121
  %v2123 = vpop.f32.mrb[0].mxu0
  %2124 = vmatprep.mubr.f32.mxu0 0.0
  %2125 = vmatmul.mubr.f32.gmra.mrb[0].mxu0 %v121
  %v2126 = vpop.f32.mrb[0].mxu0
  %v2127 = vadd.f32 0.0, %v2126
  %v2128 = vpop.f32.mrb[0].mxu0
  %2129 = vmatprep.mubr.f32.mxu0 0.0
  %2130 = vmatmul.mubr.f32.gmra.mrb[0].mxu0 %v124
  %v2131 = vpop.f32.mrb[0].mxu0
  %v2132 = vadd.f32 0.0, %v2131
  %v2133 = vpop.f32.mrb[0].mxu0
  %2134 = vmatprep.mubr.f32.mxu0 0.0
  %2135 = vmatmul.mubr.f32.gmra.mrb[0].mxu0 %v127
  %v2136 = vpop.f32.mrb[0].mxu0
  %v2137 = vadd.f32 0.0, %v2136
  %v2138 = vpop.f32.mrb[0].mxu0
  %2139 = vmatprep.mubr.f32.mxu0 0.0
  %2140 = vmatmul.mubr.f32.gmra.mrb[0].mxu0 %v130
  %v2141 = vpop.f32.mrb[0].mxu0
  %v2142 = vadd.f32 0.0, %v2141
  %v2143 = vpop.f32.mrb[0].mxu0
  %2144 = vmatprep.mubr.f32.mxu0 0.0
  %2145 = vmatmul.mubr.f32.gmra.mrb[0].mxu0 %v133
  %v2146 = vpop.f32.mrb[0].mxu0
  %v2147 = vadd.f32 0.0, %v2146
  %v2148 = vpop.f32.mrb[0].mxu0
  %2149 = vmatprep.mubr.f32.mxu0 0.0
  %2150 = vmatmul.mubr.f32.gmra.mrb[0].mxu0 %v136
  %v2151 = vpop.f32.mrb[0].mxu0
  %v2152 = vadd.f32 0.0, %v2151
  %v2153 = vpop.f32.mrb[0].mxu0
  %2154 = vmatprep.mubr.f32.mxu0 0.0
  %2155 = vmatmul.mubr.f32.gmra.mrb[0].mxu0 %v139
  %v2156 = vpop.f32.mrb[0].mxu0
  %v2157 = vadd.f32 0.0, %v2156
  %v2158 = vpop.f32.mrb[0].mxu0
  %2159 = vmatprep.mubr.f32.mxu0 0.0
  %2160 = vmatmul.mubr.f32.gmra.mrb[0].mxu0 %v142
  %v2161 = vpop.f32.mrb[0].mxu0
  %v2162 = vadd.f32 0.0, %v2161
  %v2163 = vpop.f32.mrb[0].mxu0
  %2164 = vmatprep.mubr.f32.mxu0 0.0
  %2165 = vmatmul.mubr.f32.gmra.mrb[0].mxu0 %v145
  %v2166 = vpop.f32.mrb[0].mxu0
  %v2167 = vadd.f32 0.0, %v2166
  %v2168 = vpop.f32.mrb[0].mxu0
  %2169 = vmatprep.mubr.f32.mxu0 0.0
  %2170 = vmatmul.mubr.f32.gmra.mrb[0].mxu0 %v148
  %v2171 = vpop.f32.mrb[0].mxu0
  %v2172 = vadd.f32 0.0, %v2171
  %v2173 = vpop.f32.mrb[0].mxu0
  %2174 = vmatprep.mubr.f32.mxu0 0.0
  %2175 = vmatmul.mubr.f32.gmra.mrb[0].mxu0 %v151
  %v2176 = vpop.f32.mrb[0].mxu0
  %v2177 = vadd.f32 0.0, %v2176
  %v2178 = vpop.f32.mrb[0].mxu0
  %2179 = vmatprep.mubr.f32.mxu0 0.0
  %2180 = vmatmul.mubr.f32.gmra.mrb[0].mxu0 %v154
  %v2181 = vpop.f32.mrb[0].mxu0
  %v2182 = vadd.f32 0.0, %v2181
  %v2183 = vpop.f32.mrb[0].mxu0
  %2184 = vmatprep.mubr.f32.mxu0 0.0
  %2185 = vmatmul.mubr.f32.gmra.mrb[0].mxu0 %v157
  %v2186 = vpop.f32.mrb[0].mxu0
  %v2187 = vadd.f32 0.0, %v2186
  %v2188 = vpop.f32.mrb[0].mxu0
  %2189 = vmatprep.mubr.f32.mxu0 0.0
  %2190 = vmatmul.mubr.f32.gmra.mrb[0].mxu0 %v160
  %v2191 = vpop.f32.mrb[0].mxu0
  %v2192 = vadd.f32 0.0, %v2191
  %v2193 = vpop.f32.mrb[0].mxu0
  %2194 = vmatprep.mubr.f32.mxu0 0.0
  %2195 = vmatmul.mubr.f32.gmra.mrb[0].mxu0 %v163
  %v2196 = vpop.f32.mrb[0].mxu0
  %v2197 = vadd.f32 0.0, %v2196
  %v2198 = vpop.f32.mrb[0].mxu0
  %2199 = vmatprep.mubr.f32.mxu0 0.0
  %2200 = vmatmul.mubr.f32.gmra.mrb[0].mxu0 %v166
  %v2201 = vpop.f32.mrb[0].mxu0
  %v2202 = vadd.f32 0.0, %v2201
  %v2203 = vpop.f32.mrb[0].mxu0
  %2204 = vmatprep.mubr.f32.mxu0 0.0
  %2205 = vmatmul.mubr.f32.gmra.mrb[0].mxu0 %v169
  %v2206 = vpop.f32.mrb[0].mxu0
  %v2207 = vadd.f32 0.0, %v2206
  %v2208 = vpop.f32.mrb[0].mxu0
  %2209 = vmatprep.mubr.f32.mxu0 0.0
  %2210 = vmatmul.mubr.f32.gmra.mrb[0].mxu0 %v172
  %v2211 = vpop.f32.mrb[0].mxu0
  %v2212 = vadd.f32 0.0, %v2211
  %v2213 = vpop.f32.mrb[0].mxu0
  %2214 = vmatprep.mubr.f32.mxu0 0.0
  %2215 = vmatmul.mubr.f32.gmra.mrb[0].mxu0 %v175
  %v2216 = vpop.f32.mrb[0].mxu0
  %v2217 = vadd.f32 0.0, %v2216
  %v2218 = vpop.f32.mrb[0].mxu0
  %2219 = vmatprep.mubr.f32.mxu0 0.0
  %2220 = vmatmul.mubr.f32.gmra.mrb[0].mxu0 %v178
  %v2221 = vpop.f32.mrb[0].mxu0
  %v2222 = vadd.f32 0.0, %v2221
  %v2223 = vpop.f32.mrb[0].mxu0
  %2224 = vmatprep.mubr.f32.mxu0 0.0
  %2225 = vmatmul.mubr.f32.gmra.mrb[0].mxu0 %v181
  %v2226 = vpop.f32.mrb[0].mxu0
  %v2227 = vadd.f32 0.0, %v2226
  %v2228 = vpop.f32.mrb[0].mxu0
  %2229 = vmatprep.mubr.f32.mxu0 0.0
  %2230 = vmatmul.mubr.f32.gmra.mrb[0].mxu0 %v184
  %v2231 = vpop.f32.mrb[0].mxu0
  %v2232 = vadd.f32 0.0, %v2231
  %v2233 = vpop.f32.mrb[0].mxu0
  %2234 = vmatprep.mubr.f32.mxu0 0.0
  %2235 = vmatmul.mubr.f32.gmra.mrb[0].mxu0 %v613
  %v2236 = vpop.f32.mrb[0].mxu0
  %v2237 = vadd.f32 0.0, %v2236
  %v2238 = vpop.f32.mrb[0].mxu0
  %2239 = vmatprep.mubr.f32.mxu0 0.0
  %2240 = vmatmul.mubr.f32.gmra.mrb[0].mxu0 %v862
  %v2241 = vpop.f32.mrb[0].mxu0
  %v2242 = vadd.f32 0.0, %v2241
  %v2243 = vpop.f32.mrb[0].mxu0
  %2244 = vdwg.mxu0
  %v2245 = vadd.f32 %v1999, %v2107
  %v2246 = vadd.f32 %v2000, %v2112
  %v2247 = vadd.f32 %v2001, %v2117
  %v2248 = vadd.f32 %v2002, %v2122
  %v2249 = vadd.f32 %v2003, %v2127
  %v2250 = vadd.f32 %v2004, %v2132
  %v2251 = vadd.f32 %v2005, %v2137
  %v2252 = vadd.f32 %v2006, %v2142
  %v2253 = vadd.f32 %v2007, %v2147
  %v2254 = vadd.f32 %v2008, %v2152
  %v2255 = vadd.f32 %v2009, %v2157
  %v2256 = vadd.f32 %v2010, %v2162
  %v2257 = vadd.f32 %v2011, %v2167
  %v2258 = vadd.f32 %v2012, %v2172
  %v2259 = vadd.f32 %v2013, %v2177
  %v2260 = vadd.f32 %v2014, %v2182
  %v2261 = vadd.f32 %v2015, %v2187
  %v2262 = vadd.f32 %v2016, %v2192
  %v2263 = vadd.f32 %v2017, %v2197
  %v2264 = vadd.f32 %v2018, %v2202
  %v2265 = vadd.f32 %v2019, %v2207
  %v2266 = vadd.f32 %v2020, %v2212
  %v2267 = vadd.f32 %v2021, %v2217
  %v2268 = vadd.f32 %v2022, %v2222
  %v2269 = vadd.f32 %v2023, %v2227
  %v2270 = vadd.f32 %v2024, %v2232
  %v2271 = vadd.f32 %v2025, %v2237
  %v2272 = vadd.f32 %v2026, %v2242
  %s2273 = scalar_lea.vmem %s2, 384
  %v2274 = vld [vmem:[%s2273] sm:$0xff]
  %v2275 = vld [vmem:[%s2273 + $0x8] sm:$0xff]
  %v2276 = vld [vmem:[%s2273 + $0x10] sm:$0xff]
  %v2277 = vld [vmem:[%s2273 + $0x18] sm:$0xff]
  %v2278 = vld [vmem:[%s2273 + $0x20] sm:$0xff]
  %v2279 = vld [vmem:[%s2273 + $0x28] sm:$0xff]
  %v2280 = vld [vmem:[%s2273 + $0x30] sm:$0xff]
  %v2281 = vld [vmem:[%s2273 + $0x38] sm:$0xff]
  %v2282 = vld [vmem:[%s2273 + $0x40] sm:$0xff]
  %v2283 = vld [vmem:[%s2273 + $0x48] sm:$0xff]
  %v2284 = vld [vmem:[%s2273 + $0x50] sm:$0xff]
  %v2285 = vld [vmem:[%s2273 + $0x58] sm:$0xff]
  %2286 = vmatprep.subr.mxu0 0.0
  %2287 = vmatpush1.msra.mxu0 %v2274
  %2288 = vmatprep.subr.mxu0 0.0
  %2289 = vmatpush1.msra.mxu0 %v2275
  %2290 = vmatprep.subr.mxu0 0.0
  %2291 = vmatpush1.msra.mxu0 %v2276
  %2292 = vmatprep.subr.mxu0 0.0
  %2293 = vmatpush1.msra.mxu0 %v2277
  %2294 = vmatprep.subr.mxu0 0.0
  %2295 = vmatpush1.msra.mxu0 %v2278
  %2296 = vmatprep.subr.mxu0 0.0
  %2297 = vmatpush1.msra.mxu0 %v2279
  %2298 = vmatprep.subr.mxu0 0.0
  %2299 = vmatpush1.msra.mxu0 %v2280
  %2300 = vmatprep.subr.mxu0 0.0
  %2301 = vmatpush1.msra.mxu0 %v2281
  %2302 = vmatprep.subr.mxu0 0.0
  %2303 = vmatpush1.msra.mxu0 %v2282
  %2304 = vmatprep.subr.mxu0 0.0
  %2305 = vmatpush1.msra.mxu0 %v2283
  %2306 = vmatprep.subr.mxu0 0.0
  %2307 = vmatpush1.msra.mxu0 %v2284
  %2308 = vmatprep.subr.mxu0 0.0
  %2309 = vmatpush1.msra.mxu0 %v2285
  %2310 = vmatprep.subr.mxu0 0.0
  %2311 = vmatpush1.msra.mxu0 0.0
  %2312 = vmatprep.subr.mxu0 0.0
  %2313 = vmatpush1.msra.mxu0 0.0
  %2314 = vmatprep.subr.mxu0 0.0
  %2315 = vmatpush1.msra.mxu0 0.0
  %2316 = vmatprep.subr.mxu0 0.0
  %2317 = vmatpush1.msra.mxu0 0.0
  %2318 = vmatprep.subr.mxu0 0.0
  %2319 = vmatpush1.msra.mxu0 0.0
  %2320 = vmatprep.subr.mxu0 0.0
  %2321 = vmatpush1.msra.mxu0 0.0
  %2322 = vmatprep.subr.mxu0 0.0
  %2323 = vmatpush1.msra.mxu0 0.0
  %2324 = vmatprep.subr.mxu0 0.0
  %2325 = vmatpush1.msra.mxu0 0.0
  %2326 = vmatprep.subr.mxu0 0.0
  %2327 = vmatpush1.msra.mxu0 0.0
  %2328 = vmatprep.subr.mxu0 0.0
  %2329 = vmatpush1.msra.mxu0 0.0
  %2330 = vmatprep.subr.mxu0 0.0
  %2331 = vmatpush1.msra.mxu0 0.0
  %2332 = vmatprep.subr.mxu0 0.0
  %2333 = vmatpush1.msra.mxu0 0.0
  %2334 = vmatprep.subr.mxu0 0.0
  %2335 = vmatpush1.msra.mxu0 0.0
  %2336 = vmatprep.subr.mxu0 0.0
  %2337 = vmatpush1.msra.mxu0 0.0
  %2338 = vmatprep.subr.mxu0 0.0
  %2339 = vmatpush1.msra.mxu0 0.0
  %2340 = vmatprep.subr.mxu0 0.0
  %2341 = vmatpush1.msra.mxu0 0.0
  %2342 = vmatprep.subr.mxu0 0.0
  %2343 = vmatpush1.msra.mxu0 0.0
  %2344 = vmatprep.subr.mxu0 0.0
  %2345 = vmatpush1.msra.mxu0 0.0
  %2346 = vmatprep.subr.mxu0 0.0
  %2347 = vmatpush1.msra.mxu0 0.0
  %2348 = vmatprep.subr.mxu0 0.0
  %2349 = vmatpush1.msra.mxu0 0.0
  %2350 = vmatprep.mubr.f32.mxu0 0.0
  %2351 = vmatmul.mubr.f32.gmra.mrb[0].mxu0 %v112
  %v2352 = vpop.f32.mrb[0].mxu0
  %v2353 = vadd.f32 0.0, %v2352
  %v2354 = vpop.f32.mrb[0].mxu0
  %2355 = vmatprep.mubr.f32.mxu0 0.0
  %2356 = vmatmul.mubr.f32.gmra.mrb[0].mxu0 %v115
  %v2357 = vpop.f32.mrb[0].mxu0
  %v2358 = vadd.f32 0.0, %v2357
  %v2359 = vpop.f32.mrb[0].mxu0
  %2360 = vmatprep.mubr.f32.mxu0 0.0
  %2361 = vmatmul.mubr.f32.gmra.mrb[0].mxu0 %v118
  %v2362 = vpop.f32.mrb[0].mxu0
  %v2363 = vadd.f32 0.0, %v2362
  %v2364 = vpop.f32.mrb[0].mxu0
  %2365 = vmatprep.mubr.f32.mxu0 0.0
  %2366 = vmatmul.mubr.f32.gmra.mrb[0].mxu0 %v121
  %v2367 = vpop.f32.mrb[0].mxu0
  %v2368 = vadd.f32 0.0, %v2367
  %v2369 = vpop.f32.mrb[0].mxu0
  %2370 = vmatprep.mubr.f32.mxu0 0.0
  %2371 = vmatmul.mubr.f32.gmra.mrb[0].mxu0 %v124
  %v2372 = vpop.f32.mrb[0].mxu0
  %v2373 = vadd.f32 0.0, %v2372
  %v2374 = vpop.f32.mrb[0].mxu0
  %2375 = vmatprep.mubr.f32.mxu0 0.0
  %2376 = vmatmul.mubr.f32.gmra.mrb[0].mxu0 %v127
  %v2377 = vpop.f32.mrb[0].mxu0
  %v2378 = vadd.f32 0.0, %v2377
  %v2379 = vpop.f32.mrb[0].mxu0
  %2380 = vmatprep.mubr.f32.mxu0 0.0
  %2381 = vmatmul.mubr.f32.gmra.mrb[0].mxu0 %v130
  %v2382 = vpop.f32.mrb[0].mxu0
  %v2383 = vadd.f32 0.0, %v2382
  %v2384 = vpop.f32.mrb[0].mxu0
  %2385 = vmatprep.mubr.f32.mxu0 0.0
  %2386 = vmatmul.mubr.f32.gmra.mrb[0].mxu0 %v133
  %v2387 = vpop.f32.mrb[0].mxu0
  %v2388 = vadd.f32 0.0, %v2387
  %v2389 = vpop.f32.mrb[0].mxu0
  %2390 = vmatprep.mubr.f32.mxu0 0.0
  %2391 = vmatmul.mubr.f32.gmra.mrb[0].mxu0 %v136
  %v2392 = vpop.f32.mrb[0].mxu0
  %v2393 = vadd.f32 0.0, %v2392
  %v2394 = vpop.f32.mrb[0].mxu0
  %2395 = vmatprep.mubr.f32.mxu0 0.0
  %2396 = vmatmul.mubr.f32.gmra.mrb[0].mxu0 %v139
  %v2397 = vpop.f32.mrb[0].mxu0
  %v2398 = vadd.f32 0.0, %v2397
  %v2399 = vpop.f32.mrb[0].mxu0
  %2400 = vmatprep.mubr.f32.mxu0 0.0
  %2401 = vmatmul.mubr.f32.gmra.mrb[0].mxu0 %v142
  %v2402 = vpop.f32.mrb[0].mxu0
  %v2403 = vadd.f32 0.0, %v2402
  %v2404 = vpop.f32.mrb[0].mxu0
  %2405 = vmatprep.mubr.f32.mxu0 0.0
  %2406 = vmatmul.mubr.f32.gmra.mrb[0].mxu0 %v145
  %v2407 = vpop.f32.mrb[0].mxu0
  %v2408 = vadd.f32 0.0, %v2407
  %v2409 = vpop.f32.mrb[0].mxu0
  %2410 = vmatprep.mubr.f32.mxu0 0.0
  %2411 = vmatmul.mubr.f32.gmra.mrb[0].mxu0 %v148
  %v2412 = vpop.f32.mrb[0].mxu0
  %v2413 = vadd.f32 0.0, %v2412
  %v2414 = vpop.f32.mrb[0].mxu0
  %2415 = vmatprep.mubr.f32.mxu0 0.0
  %2416 = vmatmul.mubr.f32.gmra.mrb[0].mxu0 %v151
  %v2417 = vpop.f32.mrb[0].mxu0
  %v2418 = vadd.f32 0.0, %v2417
  %v2419 = vpop.f32.mrb[0].mxu0
  %2420 = vmatprep.mubr.f32.mxu0 0.0
  %2421 = vmatmul.mubr.f32.gmra.mrb[0].mxu0 %v154
  %v2422 = vpop.f32.mrb[0].mxu0
  %v2423 = vadd.f32 0.0, %v2422
  %v2424 = vpop.f32.mrb[0].mxu0
  %2425 = vmatprep.mubr.f32.mxu0 0.0
  %2426 = vmatmul.mubr.f32.gmra.mrb[0].mxu0 %v157
  %v2427 = vpop.f32.mrb[0].mxu0
  %v2428 = vadd.f32 0.0, %v2427
  %v2429 = vpop.f32.mrb[0].mxu0
  %2430 = vmatprep.mubr.f32.mxu0 0.0
  %2431 = vmatmul.mubr.f32.gmra.mrb[0].mxu0 %v160
  %v2432 = vpop.f32.mrb[0].mxu0
  %v2433 = vadd.f32 0.0, %v2432
  %v2434 = vpop.f32.mrb[0].mxu0
  %2435 = vmatprep.mubr.f32.mxu0 0.0
  %2436 = vmatmul.mubr.f32.gmra.mrb[0].mxu0 %v163
  %v2437 = vpop.f32.mrb[0].mxu0
  %v2438 = vadd.f32 0.0, %v2437
  %v2439 = vpop.f32.mrb[0].mxu0
  %2440 = vmatprep.mubr.f32.mxu0 0.0
  %2441 = vmatmul.mubr.f32.gmra.mrb[0].mxu0 %v166
  %v2442 = vpop.f32.mrb[0].mxu0
  %v2443 = vadd.f32 0.0, %v2442
  %v2444 = vpop.f32.mrb[0].mxu0
  %2445 = vmatprep.mubr.f32.mxu0 0.0
  %2446 = vmatmul.mubr.f32.gmra.mrb[0].mxu0 %v169
  %v2447 = vpop.f32.mrb[0].mxu0
  %v2448 = vadd.f32 0.0, %v2447
  %v2449 = vpop.f32.mrb[0].mxu0
  %2450 = vmatprep.mubr.f32.mxu0 0.0
  %2451 = vmatmul.mubr.f32.gmra.mrb[0].mxu0 %v172
  %v2452 = vpop.f32.mrb[0].mxu0
  %v2453 = vadd.f32 0.0, %v2452
  %v2454 = vpop.f32.mrb[0].mxu0
  %2455 = vmatprep.mubr.f32.mxu0 0.0
  %2456 = vmatmul.mubr.f32.gmra.mrb[0].mxu0 %v175
  %v2457 = vpop.f32.mrb[0].mxu0
  %v2458 = vadd.f32 0.0, %v2457
  %v2459 = vpop.f32.mrb[0].mxu0
  %2460 = vmatprep.mubr.f32.mxu0 0.0
  %2461 = vmatmul.mubr.f32.gmra.mrb[0].mxu0 %v178
  %v2462 = vpop.f32.mrb[0].mxu0
  %v2463 = vadd.f32 0.0, %v2462
  %v2464 = vpop.f32.mrb[0].mxu0
  %2465 = vmatprep.mubr.f32.mxu0 0.0
  %2466 = vmatmul.mubr.f32.gmra.mrb[0].mxu0 %v181
  %v2467 = vpop.f32.mrb[0].mxu0
  %v2468 = vadd.f32 0.0, %v2467
  %v2469 = vpop.f32.mrb[0].mxu0
  %2470 = vmatprep.mubr.f32.mxu0 0.0
  %2471 = vmatmul.mubr.f32.gmra.mrb[0].mxu0 %v184
  %v2472 = vpop.f32.mrb[0].mxu0
  %v2473 = vadd.f32 0.0, %v2472
  %v2474 = vpop.f32.mrb[0].mxu0
  %2475 = vmatprep.mubr.f32.mxu0 0.0
  %2476 = vmatmul.mubr.f32.gmra.mrb[0].mxu0 %v613
  %v2477 = vpop.f32.mrb[0].mxu0
  %v2478 = vadd.f32 0.0, %v2477
  %v2479 = vpop.f32.mrb[0].mxu0
  %2480 = vmatprep.mubr.f32.mxu0 0.0
  %2481 = vmatmul.mubr.f32.gmra.mrb[0].mxu0 %v862
  %v2482 = vpop.f32.mrb[0].mxu0
  %v2483 = vadd.f32 0.0, %v2482
  %v2484 = vpop.f32.mrb[0].mxu0
  %2485 = vmatprep.mubr.f32.mxu0 0.0
  %2486 = vmatmul.mubr.f32.gmra.mrb[0].mxu0 %v1111
  %v2487 = vpop.f32.mrb[0].mxu0
  %v2488 = vadd.f32 0.0, %v2487
  %v2489 = vpop.f32.mrb[0].mxu0
  %2490 = vdwg.mxu0
  %v2491 = vadd.f32 %v2245, %v2353
  %v2492 = vadd.f32 %v2246, %v2358
  %v2493 = vadd.f32 %v2247, %v2363
  %v2494 = vadd.f32 %v2248, %v2368
  %v2495 = vadd.f32 %v2249, %v2373
  %v2496 = vadd.f32 %v2250, %v2378
  %v2497 = vadd.f32 %v2251, %v2383
  %v2498 = vadd.f32 %v2252, %v2388
  %v2499 = vadd.f32 %v2253, %v2393
  %v2500 = vadd.f32 %v2254, %v2398
  %v2501 = vadd.f32 %v2255, %v2403
  %v2502 = vadd.f32 %v2256, %v2408
  %v2503 = vadd.f32 %v2257, %v2413
  %v2504 = vadd.f32 %v2258, %v2418
  %v2505 = vadd.f32 %v2259, %v2423
  %v2506 = vadd.f32 %v2260, %v2428
  %v2507 = vadd.f32 %v2261, %v2433
  %v2508 = vadd.f32 %v2262, %v2438
  %v2509 = vadd.f32 %v2263, %v2443
  %v2510 = vadd.f32 %v2264, %v2448
  %v2511 = vadd.f32 %v2265, %v2453
  %v2512 = vadd.f32 %v2266, %v2458
  %v2513 = vadd.f32 %v2267, %v2463
  %v2514 = vadd.f32 %v2268, %v2468
  %v2515 = vadd.f32 %v2269, %v2473
  %v2516 = vadd.f32 %v2270, %v2478
  %v2517 = vadd.f32 %v2271, %v2483
  %v2518 = vadd.f32 %v2272, %v2488
  %v2519 = vmax.f32 %v1318, %v2491
  %v2520 = vmax.f32 %v1319, %v2492
  %v2521 = vmax.f32 %v1320, %v2493
  %v2522 = vmax.f32 %v1321, %v2494
  %v2523 = vmax.f32 %v1322, %v2495
  %v2524 = vmax.f32 %v1323, %v2496
  %v2525 = vmax.f32 %v1324, %v2497
  %v2526 = vmax.f32 %v1325, %v2498
  %v2527 = vmax.f32 %v1326, %v2499
  %v2528 = vmax.f32 %v1327, %v2500
  %v2529 = vmax.f32 %v1328, %v2501
  %v2530 = vmax.f32 %v1329, %v2502
  %v2531 = vmax.f32 %v1330, %v2503
  %v2532 = vmax.f32 %v1331, %v2504
  %v2533 = vmax.f32 %v1332, %v2505
  %v2534 = vmax.f32 %v1333, %v2506
  %v2535 = vmax.f32 %v1334, %v2507
  %v2536 = vmax.f32 %v1335, %v2508
  %v2537 = vmax.f32 %v1336, %v2509
  %v2538 = vmax.f32 %v1337, %v2510
  %v2539 = vmax.f32 %v1338, %v2511
  %v2540 = vmax.f32 %v1339, %v2512
  %v2541 = vmax.f32 %v1340, %v2513
  %v2542 = vmax.f32 %v1341, %v2514
  %v2543 = vmax.f32 %v1342, %v2515
  %v2544 = vmax.f32 %v1343, %v2516
  %v2545 = vmax.f32 %v1344, %v2517
  %v2546 = vmax.f32 %v1345, %v2518
  %v2547 = vmax.f32 %v2519, %v2520
  %v2548 = vmax.f32 %v2521, %v2522
  %v2549 = vmax.f32 %v2523, %v2524
  %v2550 = vmax.f32 %v2525, %v2526
  %v2551 = vmax.f32 %v2527, %v2528
  %v2552 = vmax.f32 %v2529, %v2530
  %v2553 = vmax.f32 %v2531, %v2532
  %v2554 = vmax.f32 %v2533, %v2534
  %v2555 = vmax.f32 %v2535, %v2536
  %v2556 = vmax.f32 %v2537, %v2538
  %v2557 = vmax.f32 %v2539, %v2540
  %v2558 = vmax.f32 %v2541, %v2542
  %v2559 = vmax.f32 %v2543, %v2544
  %v2560 = vmax.f32 %v2545, %v2546
  %v2561 = vld [vmem:[%s3] sm:$0x1]
  %v2563 = vlaneseq
  %v2564 = vshrl.u32 %v2563, 7
  %v2565 = vsub.s32 0, %v2564
  %v2566 = vrot.slane %v2561, %v2565
  %v2568 = vadd.f32 %v2547, %v2566
  %v2569 = vadd.f32 %v2548, %v2566
  %v2570 = vadd.f32 %v2549, %v2566
  %v2571 = vadd.f32 %v2550, %v2566
  %v2572 = vadd.f32 %v2551, %v2566
  %v2573 = vadd.f32 %v2552, %v2566
  %v2574 = vadd.f32 %v2553, %v2566
  %v2575 = vadd.f32 %v2554, %v2566
  %v2576 = vadd.f32 %v2555, %v2566
  %v2577 = vadd.f32 %v2556, %v2566
  %v2578 = vadd.f32 %v2557, %v2566
  %v2579 = vadd.f32 %v2558, %v2566
  %v2580 = vadd.f32 %v2559, %v2566
  %v2581 = vadd.f32 %v2560, %v2566
  %v2582 = vmax.f32 %v2568, 0.0
  %v2583 = vmax.f32 %v2569, 0.0
  %v2584 = vmax.f32 %v2570, 0.0
  %v2585 = vmax.f32 %v2571, 0.0
  %v2586 = vmax.f32 %v2572, 0.0
  %v2587 = vmax.f32 %v2573, 0.0
  %v2588 = vmax.f32 %v2574, 0.0
  %v2589 = vmax.f32 %v2575, 0.0
  %v2590 = vmax.f32 %v2576, 0.0
  %v2591 = vmax.f32 %v2577, 0.0
  %v2592 = vmax.f32 %v2578, 0.0
  %v2593 = vmax.f32 %v2579, 0.0
  %v2594 = vmax.f32 %v2580, 0.0
  %v2595 = vmax.f32 %v2581, 0.0
  %v2596 = vld [vmem:[%s4] sm:$0xff]
  %v2597 = vld [vmem:[%s4 + $0x8] sm:$0xff]
  %v2598 = vld [vmem:[%s4 + $0x10] sm:$0xff]
  %v2599 = vld [vmem:[%s4 + $0x18] sm:$0xff]
  %v2600 = vld [vmem:[%s4 + $0x20] sm:$0xff]
  %v2601 = vld [vmem:[%s4 + $0x28] sm:$0xff]
  %v2602 = vld [vmem:[%s4 + $0x30] sm:$0xff]
  %v2603 = vld [vmem:[%s4 + $0x38] sm:$0xff]
  %v2604 = vld [vmem:[%s4 + $0x40] sm:$0xff]
  %v2605 = vld [vmem:[%s4 + $0x48] sm:$0xff]
  %v2606 = vld [vmem:[%s4 + $0x50] sm:$0xf]
  %s2607 = scalar_lea.vmem %s4, 88
  %v2608 = vld [vmem:[%s2607] sm:$0xff]
  %v2609 = vld [vmem:[%s2607 + $0x8] sm:$0xff]
  %v2610 = vld [vmem:[%s2607 + $0x10] sm:$0xff]
  %v2611 = vld [vmem:[%s2607 + $0x18] sm:$0xff]
  %v2612 = vld [vmem:[%s2607 + $0x20] sm:$0xff]
  %v2613 = vld [vmem:[%s2607 + $0x28] sm:$0xff]
  %v2614 = vld [vmem:[%s2607 + $0x30] sm:$0xff]
  %v2615 = vld [vmem:[%s2607 + $0x38] sm:$0xff]
  %v2616 = vld [vmem:[%s2607 + $0x40] sm:$0xff]
  %v2617 = vld [vmem:[%s2607 + $0x48] sm:$0xff]
  %v2618 = vld [vmem:[%s2607 + $0x50] sm:$0xf]
  %vm2619 = vcmask 687104
  %v2621 = vsel %vm2619, %v2583, 0
  %v2624 = vsel %vm2619, %v2584, 0
  %v2627 = vsel %vm2619, %v2585, 0
  %v2630 = vsel %vm2619, %v2586, 0
  %v2633 = vsel %vm2619, %v2587, 0
  %v2636 = vsel %vm2619, %v2588, 0
  %v2639 = vsel %vm2619, %v2589, 0
  %v2642 = vsel %vm2619, %v2590, 0
  %v2645 = vsel %vm2619, %v2591, 0
  %v2648 = vsel %vm2619, %v2592, 0
  %vm2650 = vcmask 1043456
  %v2652 = vsel %vm2650, %v2618, 0
  %2654 = vmatprep.subr.mxu0 0.0
  %2655 = vmatpush1.msra.mxu0 %v2608
  %2656 = vmatprep.subr.mxu0 0.0
  %2657 = vmatpush1.msra.mxu0 %v2609
  %2658 = vmatprep.subr.mxu0 0.0
  %2659 = vmatpush1.msra.mxu0 %v2610
  %2660 = vmatprep.subr.mxu0 0.0
  %2661 = vmatpush1.msra.mxu0 %v2611
  %2662 = vmatprep.subr.mxu0 0.0
  %2663 = vmatpush1.msra.mxu0 %v2612
  %2664 = vmatprep.subr.mxu0 0.0
  %2665 = vmatpush1.msra.mxu0 %v2613
  %2666 = vmatprep.subr.mxu0 0.0
  %2667 = vmatpush1.msra.mxu0 %v2614
  %2668 = vmatprep.subr.mxu0 0.0
  %2669 = vmatpush1.msra.mxu0 %v2615
  %2670 = vmatprep.subr.mxu0 0.0
  %2671 = vmatpush1.msra.mxu0 %v2616
  %2672 = vmatprep.subr.mxu0 0.0
  %2673 = vmatpush1.msra.mxu0 %v2617
  %2674 = vmatprep.subr.mxu0 0.0
  %2675 = vmatpush1.msra.mxu0 %v2652
  %2676 = vmatprep.subr.mxu0 0.0
  %2677 = vmatpush1.msra.mxu0 0.0
  %2678 = vmatprep.subr.mxu0 0.0
  %2679 = vmatpush1.msra.mxu0 0.0
  %2680 = vmatprep.subr.mxu0 0.0
  %2681 = vmatpush1.msra.mxu0 0.0
  %2682 = vmatprep.subr.mxu0 0.0
  %2683 = vmatpush1.msra.mxu0 0.0
  %2684 = vmatprep.subr.mxu0 0.0
  %2685 = vmatpush1.msra.mxu0 0.0
  %2686 = vmatprep.subr.mxu0 0.0
  %2687 = vmatpush1.msra.mxu0 0.0
  %2688 = vmatprep.subr.mxu0 0.0
  %2689 = vmatpush1.msra.mxu0 0.0
  %2690 = vmatprep.subr.mxu0 0.0
  %2691 = vmatpush1.msra.mxu0 0.0
  %2692 = vmatprep.subr.mxu0 0.0
  %2693 = vmatpush1.msra.mxu0 0.0
  %2694 = vmatprep.subr.mxu0 0.0
  %2695 = vmatpush1.msra.mxu0 0.0
  %2696 = vmatprep.subr.mxu0 0.0
  %2697 = vmatpush1.msra.mxu0 0.0
  %2698 = vmatprep.subr.mxu0 0.0
  %2699 = vmatpush1.msra.mxu0 0.0
  %2700 = vmatprep.subr.mxu0 0.0
  %2701 = vmatpush1.msra.mxu0 0.0
  %2702 = vmatprep.subr.mxu0 0.0
  %2703 = vmatpush1.msra.mxu0 0.0
  %2704 = vmatprep.subr.mxu0 0.0
  %2705 = vmatpush1.msra.mxu0 0.0
  %2706 = vmatprep.subr.mxu0 0.0
  %2707 = vmatpush1.msra.mxu0 0.0
  %2708 = vmatprep.subr.mxu0 0.0
  %2709 = vmatpush1.msra.mxu0 0.0
  %2710 = vmatprep.subr.mxu0 0.0
  %2711 = vmatpush1.msra.mxu0 0.0
  %2712 = vmatprep.subr.mxu0 0.0
  %2713 = vmatpush1.msra.mxu0 0.0
  %2714 = vmatprep.subr.mxu0 0.0
  %2715 = vmatpush1.msra.mxu0 0.0
  %2716 = vmatprep.subr.mxu0 0.0
  %2717 = vmatpush1.msra.mxu0 0.0
  %2718 = vmatprep.mubr.f32.mxu0 0.0
  %2719 = vmatmul.mubr.f32.gmra.mrb[0].mxu0 %v2621
  %v2720 = vpop.f32.mrb[0].mxu0
  %v2721 = vadd.f32 0.0, %v2720
  %v2722 = vpop.f32.mrb[0].mxu0
  %2723 = vmatprep.mubr.f32.mxu0 0.0
  %2724 = vmatmul.mubr.f32.gmra.mrb[0].mxu0 %v2624
  %v2725 = vpop.f32.mrb[0].mxu0
  %v2726 = vadd.f32 0.0, %v2725
  %v2727 = vpop.f32.mrb[0].mxu0
  %2728 = vmatprep.mubr.f32.mxu0 0.0
  %2729 = vmatmul.mubr.f32.gmra.mrb[0].mxu0 %v2627
  %v2730 = vpop.f32.mrb[0].mxu0
  %v2731 = vadd.f32 0.0, %v2730
  %v2732 = vpop.f32.mrb[0].mxu0
  %2733 = vmatprep.mubr.f32.mxu0 0.0
  %2734 = vmatmul.mubr.f32.gmra.mrb[0].mxu0 %v2630
  %v2735 = vpop.f32.mrb[0].mxu0
  %v2736 = vadd.f32 0.0, %v2735
  %v2737 = vpop.f32.mrb[0].mxu0
  %2738 = vmatprep.mubr.f32.mxu0 0.0
  %2739 = vmatmul.mubr.f32.gmra.mrb[0].mxu0 %v2633
  %v2740 = vpop.f32.mrb[0].mxu0
  %v2741 = vadd.f32 0.0, %v2740
  %v2742 = vpop.f32.mrb[0].mxu0
  %2743 = vmatprep.mubr.f32.mxu0 0.0
  %2744 = vmatmul.mubr.f32.gmra.mrb[0].mxu0 %v2636
  %v2745 = vpop.f32.mrb[0].mxu0
  %v2746 = vadd.f32 0.0, %v2745
  %v2747 = vpop.f32.mrb[0].mxu0
  %2748 = vmatprep.mubr.f32.mxu0 0.0
  %2749 = vmatmul.mubr.f32.gmra.mrb[0].mxu0 %v2639
  %v2750 = vpop.f32.mrb[0].mxu0
  %v2751 = vadd.f32 0.0, %v2750
  %v2752 = vpop.f32.mrb[0].mxu0
  %2753 = vmatprep.mubr.f32.mxu0 0.0
  %2754 = vmatmul.mubr.f32.gmra.mrb[0].mxu0 %v2642
  %v2755 = vpop.f32.mrb[0].mxu0
  %v2756 = vadd.f32 0.0, %v2755
  %v2757 = vpop.f32.mrb[0].mxu0
  %2758 = vmatprep.mubr.f32.mxu0 0.0
  %2759 = vmatmul.mubr.f32.gmra.mrb[0].mxu0 %v2645
  %v2760 = vpop.f32.mrb[0].mxu0
  %v2761 = vadd.f32 0.0, %v2760
  %v2762 = vpop.f32.mrb[0].mxu0
  %2763 = vmatprep.mubr.f32.mxu0 0.0
  %2764 = vmatmul.mubr.f32.gmra.mrb[0].mxu0 %v2648
  %v2765 = vpop.f32.mrb[0].mxu0
  %v2766 = vadd.f32 0.0, %v2765
  %v2767 = vpop.f32.mrb[0].mxu0
  %2768 = vdwg.mxu0
  %v2770 = vsel %vm2619, %v2582, 0
  %v2773 = vsel %vm2650, %v2606, 0
  %2775 = vmatprep.subr.mxu0 0.0
  %2776 = vmatpush1.msra.mxu0 %v2596
  %2777 = vmatprep.subr.mxu0 0.0
  %2778 = vmatpush1.msra.mxu0 %v2597
  %2779 = vmatprep.subr.mxu0 0.0
  %2780 = vmatpush1.msra.mxu0 %v2598
  %2781 = vmatprep.subr.mxu0 0.0
  %2782 = vmatpush1.msra.mxu0 %v2599
  %2783 = vmatprep.subr.mxu0 0.0
  %2784 = vmatpush1.msra.mxu0 %v2600
  %2785 = vmatprep.subr.mxu0 0.0
  %2786 = vmatpush1.msra.mxu0 %v2601
  %2787 = vmatprep.subr.mxu0 0.0
  %2788 = vmatpush1.msra.mxu0 %v2602
  %2789 = vmatprep.subr.mxu0 0.0
  %2790 = vmatpush1.msra.mxu0 %v2603
  %2791 = vmatprep.subr.mxu0 0.0
  %2792 = vmatpush1.msra.mxu0 %v2604
  %2793 = vmatprep.subr.mxu0 0.0
  %2794 = vmatpush1.msra.mxu0 %v2605
  %2795 = vmatprep.subr.mxu0 0.0
  %2796 = vmatpush1.msra.mxu0 %v2773
  %2797 = vmatprep.subr.mxu0 0.0
  %2798 = vmatpush1.msra.mxu0 0.0
  %2799 = vmatprep.subr.mxu0 0.0
  %2800 = vmatpush1.msra.mxu0 0.0
  %2801 = vmatprep.subr.mxu0 0.0
  %2802 = vmatpush1.msra.mxu0 0.0
  %2803 = vmatprep.subr.mxu0 0.0
  %2804 = vmatpush1.msra.mxu0 0.0
  %2805 = vmatprep.subr.mxu0 0.0
  %2806 = vmatpush1.msra.mxu0 0.0
  %2807 = vmatprep.subr.mxu0 0.0
  %2808 = vmatpush1.msra.mxu0 0.0
  %2809 = vmatprep.subr.mxu0 0.0
  %2810 = vmatpush1.msra.mxu0 0.0
  %2811 = vmatprep.subr.mxu0 0.0
  %2812 = vmatpush1.msra.mxu0 0.0
  %2813 = vmatprep.subr.mxu0 0.0
  %2814 = vmatpush1.msra.mxu0 0.0
  %2815 = vmatprep.subr.mxu0 0.0
  %2816 = vmatpush1.msra.mxu0 0.0
  %2817 = vmatprep.subr.mxu0 0.0
  %2818 = vmatpush1.msra.mxu0 0.0
  %2819 = vmatprep.subr.mxu0 0.0
  %2820 = vmatpush1.msra.mxu0 0.0
  %2821 = vmatprep.subr.mxu0 0.0
  %2822 = vmatpush1.msra.mxu0 0.0
  %2823 = vmatprep.subr.mxu0 0.0
  %2824 = vmatpush1.msra.mxu0 0.0
  %2825 = vmatprep.subr.mxu0 0.0
  %2826 = vmatpush1.msra.mxu0 0.0
  %2827 = vmatprep.subr.mxu0 0.0
  %2828 = vmatpush1.msra.mxu0 0.0
  %2829 = vmatprep.subr.mxu0 0.0
  %2830 = vmatpush1.msra.mxu0 0.0
  %2831 = vmatprep.subr.mxu0 0.0
  %2832 = vmatpush1.msra.mxu0 0.0
  %2833 = vmatprep.subr.mxu0 0.0
  %2834 = vmatpush1.msra.mxu0 0.0
  %2835 = vmatprep.subr.mxu0 0.0
  %2836 = vmatpush1.msra.mxu0 0.0
  %2837 = vmatprep.subr.mxu0 0.0
  %2838 = vmatpush1.msra.mxu0 0.0
  %2839 = vmatprep.mubr.f32.mxu0 0.0
  %2840 = vmatmul.mubr.f32.gmra.mrb[0].mxu0 %v2770
  %v2841 = vpop.f32.mrb[0].mxu0
  %v2842 = vadd.f32 %v2721, %v2841
  %v2843 = vpop.f32.mrb[0].mxu0
  %2844 = vmatprep.mubr.f32.mxu0 0.0
  %2845 = vmatmul.mubr.f32.gmra.mrb[0].mxu0 %v2621
  %v2846 = vpop.f32.mrb[0].mxu0
  %v2847 = vadd.f32 %v2726, %v2846
  %v2848 = vpop.f32.mrb[0].mxu0
  %2849 = vmatprep.mubr.f32.mxu0 0.0
  %2850 = vmatmul.mubr.f32.gmra.mrb[0].mxu0 %v2624
  %v2851 = vpop.f32.mrb[0].mxu0
  %v2852 = vadd.f32 %v2731, %v2851
  %v2853 = vpop.f32.mrb[0].mxu0
  %2854 = vmatprep.mubr.f32.mxu0 0.0
  %2855 = vmatmul.mubr.f32.gmra.mrb[0].mxu0 %v2627
  %v2856 = vpop.f32.mrb[0].mxu0
  %v2857 = vadd.f32 %v2736, %v2856
  %v2858 = vpop.f32.mrb[0].mxu0
  %2859 = vmatprep.mubr.f32.mxu0 0.0
  %2860 = vmatmul.mubr.f32.gmra.mrb[0].mxu0 %v2630
  %v2861 = vpop.f32.mrb[0].mxu0
  %v2862 = vadd.f32 %v2741, %v2861
  %v2863 = vpop.f32.mrb[0].mxu0
  %2864 = vmatprep.mubr.f32.mxu0 0.0
  %2865 = vmatmul.mubr.f32.gmra.mrb[0].mxu0 %v2633
  %v2866 = vpop.f32.mrb[0].mxu0
  %v2867 = vadd.f32 %v2746, %v2866
  %v2868 = vpop.f32.mrb[0].mxu0
  %2869 = vmatprep.mubr.f32.mxu0 0.0
  %2870 = vmatmul.mubr.f32.gmra.mrb[0].mxu0 %v2636
  %v2871 = vpop.f32.mrb[0].mxu0
  %v2872 = vadd.f32 %v2751, %v2871
  %v2873 = vpop.f32.mrb[0].mxu0
  %2874 = vmatprep.mubr.f32.mxu0 0.0
  %2875 = vmatmul.mubr.f32.gmra.mrb[0].mxu0 %v2639
  %v2876 = vpop.f32.mrb[0].mxu0
  %v2877 = vadd.f32 %v2756, %v2876
  %v2878 = vpop.f32.mrb[0].mxu0
  %2879 = vmatprep.mubr.f32.mxu0 0.0
  %2880 = vmatmul.mubr.f32.gmra.mrb[0].mxu0 %v2642
  %v2881 = vpop.f32.mrb[0].mxu0
  %v2882 = vadd.f32 %v2761, %v2881
  %v2883 = vpop.f32.mrb[0].mxu0
  %2884 = vmatprep.mubr.f32.mxu0 0.0
  %2885 = vmatmul.mubr.f32.gmra.mrb[0].mxu0 %v2645
  %v2886 = vpop.f32.mrb[0].mxu0
  %v2887 = vadd.f32 %v2766, %v2886
  %v2888 = vpop.f32.mrb[0].mxu0
  %2889 = vdwg.mxu0
  %s2890 = scalar_lea.vmem %s4, 176
  %v2891 = vld [vmem:[%s2890] sm:$0xff]
  %v2892 = vld [vmem:[%s2890 + $0x8] sm:$0xff]
  %v2893 = vld [vmem:[%s2890 + $0x10] sm:$0xff]
  %v2894 = vld [vmem:[%s2890 + $0x18] sm:$0xff]
  %v2895 = vld [vmem:[%s2890 + $0x20] sm:$0xff]
  %v2896 = vld [vmem:[%s2890 + $0x28] sm:$0xff]
  %v2897 = vld [vmem:[%s2890 + $0x30] sm:$0xff]
  %v2898 = vld [vmem:[%s2890 + $0x38] sm:$0xff]
  %v2899 = vld [vmem:[%s2890 + $0x40] sm:$0xff]
  %v2900 = vld [vmem:[%s2890 + $0x48] sm:$0xff]
  %v2901 = vld [vmem:[%s2890 + $0x50] sm:$0xf]
  %v2903 = vsel %vm2619, %v2593, 0
  %v2906 = vsel %vm2650, %v2901, 0
  %2908 = vmatprep.subr.mxu0 0.0
  %2909 = vmatpush1.msra.mxu0 %v2891
  %2910 = vmatprep.subr.mxu0 0.0
  %2911 = vmatpush1.msra.mxu0 %v2892
  %2912 = vmatprep.subr.mxu0 0.0
  %2913 = vmatpush1.msra.mxu0 %v2893
  %2914 = vmatprep.subr.mxu0 0.0
  %2915 = vmatpush1.msra.mxu0 %v2894
  %2916 = vmatprep.subr.mxu0 0.0
  %2917 = vmatpush1.msra.mxu0 %v2895
  %2918 = vmatprep.subr.mxu0 0.0
  %2919 = vmatpush1.msra.mxu0 %v2896
  %2920 = vmatprep.subr.mxu0 0.0
  %2921 = vmatpush1.msra.mxu0 %v2897
  %2922 = vmatprep.subr.mxu0 0.0
  %2923 = vmatpush1.msra.mxu0 %v2898
  %2924 = vmatprep.subr.mxu0 0.0
  %2925 = vmatpush1.msra.mxu0 %v2899
  %2926 = vmatprep.subr.mxu0 0.0
  %2927 = vmatpush1.msra.mxu0 %v2900
  %2928 = vmatprep.subr.mxu0 0.0
  %2929 = vmatpush1.msra.mxu0 %v2906
  %2930 = vmatprep.subr.mxu0 0.0
  %2931 = vmatpush1.msra.mxu0 0.0
  %2932 = vmatprep.subr.mxu0 0.0
  %2933 = vmatpush1.msra.mxu0 0.0
  %2934 = vmatprep.subr.mxu0 0.0
  %2935 = vmatpush1.msra.mxu0 0.0
  %2936 = vmatprep.subr.mxu0 0.0
  %2937 = vmatpush1.msra.mxu0 0.0
  %2938 = vmatprep.subr.mxu0 0.0
  %2939 = vmatpush1.msra.mxu0 0.0
  %2940 = vmatprep.subr.mxu0 0.0
  %2941 = vmatpush1.msra.mxu0 0.0
  %2942 = vmatprep.subr.mxu0 0.0
  %2943 = vmatpush1.msra.mxu0 0.0
  %2944 = vmatprep.subr.mxu0 0.0
  %2945 = vmatpush1.msra.mxu0 0.0
  %2946 = vmatprep.subr.mxu0 0.0
  %2947 = vmatpush1.msra.mxu0 0.0
  %2948 = vmatprep.subr.mxu0 0.0
  %2949 = vmatpush1.msra.mxu0 0.0
  %2950 = vmatprep.subr.mxu0 0.0
  %2951 = vmatpush1.msra.mxu0 0.0
  %2952 = vmatprep.subr.mxu0 0.0
  %2953 = vmatpush1.msra.mxu0 0.0
  %2954 = vmatprep.subr.mxu0 0.0
  %2955 = vmatpush1.msra.mxu0 0.0
  %2956 = vmatprep.subr.mxu0 0.0
  %2957 = vmatpush1.msra.mxu0 0.0
  %2958 = vmatprep.subr.mxu0 0.0
  %2959 = vmatpush1.msra.mxu0 0.0
  %2960 = vmatprep.subr.mxu0 0.0
  %2961 = vmatpush1.msra.mxu0 0.0
  %2962 = vmatprep.subr.mxu0 0.0
  %2963 = vmatpush1.msra.mxu0 0.0
  %2964 = vmatprep.subr.mxu0 0.0
  %2965 = vmatpush1.msra.mxu0 0.0
  %2966 = vmatprep.subr.mxu0 0.0
  %2967 = vmatpush1.msra.mxu0 0.0
  %2968 = vmatprep.subr.mxu0 0.0
  %2969 = vmatpush1.msra.mxu0 0.0
  %2970 = vmatprep.subr.mxu0 0.0
  %2971 = vmatpush1.msra.mxu0 0.0
  %2972 = vmatprep.mubr.f32.mxu0 0.0
  %2973 = vmatmul.mubr.f32.gmra.mrb[0].mxu0 %v2624
  %v2974 = vpop.f32.mrb[0].mxu0
  %v2975 = vadd.f32 0.0, %v2974
  %v2976 = vpop.f32.mrb[0].mxu0
  %2977 = vmatprep.mubr.f32.mxu0 0.0
  %2978 = vmatmul.mubr.f32.gmra.mrb[0].mxu0 %v2627
  %v2979 = vpop.f32.mrb[0].mxu0
  %v2980 = vadd.f32 0.0, %v2979
  %v2981 = vpop.f32.mrb[0].mxu0
  %2982 = vmatprep.mubr.f32.mxu0 0.0
  %2983 = vmatmul.mubr.f32.gmra.mrb[0].mxu0 %v2630
  %v2984 = vpop.f32.mrb[0].mxu0
  %v2985 = vadd.f32 0.0, %v2984
  %v2986 = vpop.f32.mrb[0].mxu0
  %2987 = vmatprep.mubr.f32.mxu0 0.0
  %2988 = vmatmul.mubr.f32.gmra.mrb[0].mxu0 %v2633
  %v2989 = vpop.f32.mrb[0].mxu0
  %v2990 = vadd.f32 0.0, %v2989
  %v2991 = vpop.f32.mrb[0].mxu0
  %2992 = vmatprep.mubr.f32.mxu0 0.0
  %2993 = vmatmul.mubr.f32.gmra.mrb[0].mxu0 %v2636
  %v2994 = vpop.f32.mrb[0].mxu0
  %v2995 = vadd.f32 0.0, %v2994
  %v2996 = vpop.f32.mrb[0].mxu0
  %2997 = vmatprep.mubr.f32.mxu0 0.0
  %2998 = vmatmul.mubr.f32.gmra.mrb[0].mxu0 %v2639
  %v2999 = vpop.f32.mrb[0].mxu0
  %v3000 = vadd.f32 0.0, %v2999
  %v3001 = vpop.f32.mrb[0].mxu0
  %3002 = vmatprep.mubr.f32.mxu0 0.0
  %3003 = vmatmul.mubr.f32.gmra.mrb[0].mxu0 %v2642
  %v3004 = vpop.f32.mrb[0].mxu0
  %v3005 = vadd.f32 0.0, %v3004
  %v3006 = vpop.f32.mrb[0].mxu0
  %3007 = vmatprep.mubr.f32.mxu0 0.0
  %3008 = vmatmul.mubr.f32.gmra.mrb[0].mxu0 %v2645
  %v3009 = vpop.f32.mrb[0].mxu0
  %v3010 = vadd.f32 0.0, %v3009
  %v3011 = vpop.f32.mrb[0].mxu0
  %3012 = vmatprep.mubr.f32.mxu0 0.0
  %3013 = vmatmul.mubr.f32.gmra.mrb[0].mxu0 %v2648
  %v3014 = vpop.f32.mrb[0].mxu0
  %v3015 = vadd.f32 0.0, %v3014
  %v3016 = vpop.f32.mrb[0].mxu0
  %3017 = vmatprep.mubr.f32.mxu0 0.0
  %3018 = vmatmul.mubr.f32.gmra.mrb[0].mxu0 %v2903
  %v3019 = vpop.f32.mrb[0].mxu0
  %v3020 = vadd.f32 0.0, %v3019
  %v3021 = vpop.f32.mrb[0].mxu0
  %3022 = vdwg.mxu0
  %v3023 = vadd.f32 %v2842, %v2975
  %v3024 = vadd.f32 %v2847, %v2980
  %v3025 = vadd.f32 %v2852, %v2985
  %v3026 = vadd.f32 %v2857, %v2990
  %v3027 = vadd.f32 %v2862, %v2995
  %v3028 = vadd.f32 %v2867, %v3000
  %v3029 = vadd.f32 %v2872, %v3005
  %v3030 = vadd.f32 %v2877, %v3010
  %v3031 = vadd.f32 %v2882, %v3015
  %v3032 = vadd.f32 %v2887, %v3020
  %s3033 = scalar_lea.vmem %s4, 264
  %v3034 = vld [vmem:[%s3033] sm:$0xff]
  %v3035 = vld [vmem:[%s3033 + $0x8] sm:$0xff]
  %v3036 = vld [vmem:[%s3033 + $0x10] sm:$0xff]
  %v3037 = vld [vmem:[%s3033 + $0x18] sm:$0xff]
  %v3038 = vld [vmem:[%s3033 + $0x20] sm:$0xff]
  %v3039 = vld [vmem:[%s3033 + $0x28] sm:$0xff]
  %v3040 = vld [vmem:[%s3033 + $0x30] sm:$0xff]
  %v3041 = vld [vmem:[%s3033 + $0x38] sm:$0xff]
  %v3042 = vld [vmem:[%s3033 + $0x40] sm:$0xff]
  %v3043 = vld [vmem:[%s3033 + $0x48] sm:$0xff]
  %v3044 = vld [vmem:[%s3033 + $0x50] sm:$0xf]
  %v3046 = vsel %vm2619, %v2594, 0
  %v3049 = vsel %vm2650, %v3044, 0
  %3051 = vmatprep.subr.mxu0 0.0
  %3052 = vmatpush1.msra.mxu0 %v3034
  %3053 = vmatprep.subr.mxu0 0.0
  %3054 = vmatpush1.msra.mxu0 %v3035
  %3055 = vmatprep.subr.mxu0 0.0
  %3056 = vmatpush1.msra.mxu0 %v3036
  %3057 = vmatprep.subr.mxu0 0.0
  %3058 = vmatpush1.msra.mxu0 %v3037
  %3059 = vmatprep.subr.mxu0 0.0
  %3060 = vmatpush1.msra.mxu0 %v3038
  %3061 = vmatprep.subr.mxu0 0.0
  %3062 = vmatpush1.msra.mxu0 %v3039
  %3063 = vmatprep.subr.mxu0 0.0
  %3064 = vmatpush1.msra.mxu0 %v3040
  %3065 = vmatprep.subr.mxu0 0.0
  %3066 = vmatpush1.msra.mxu0 %v3041
  %3067 = vmatprep.subr.mxu0 0.0
  %3068 = vmatpush1.msra.mxu0 %v3042
  %3069 = vmatprep.subr.mxu0 0.0
  %3070 = vmatpush1.msra.mxu0 %v3043
  %3071 = vmatprep.subr.mxu0 0.0
  %3072 = vmatpush1.msra.mxu0 %v3049
  %3073 = vmatprep.subr.mxu0 0.0
  %3074 = vmatpush1.msra.mxu0 0.0
  %3075 = vmatprep.subr.mxu0 0.0
  %3076 = vmatpush1.msra.mxu0 0.0
  %3077 = vmatprep.subr.mxu0 0.0
  %3078 = vmatpush1.msra.mxu0 0.0
  %3079 = vmatprep.subr.mxu0 0.0
  %3080 = vmatpush1.msra.mxu0 0.0
  %3081 = vmatprep.subr.mxu0 0.0
  %3082 = vmatpush1.msra.mxu0 0.0
  %3083 = vmatprep.subr.mxu0 0.0
  %3084 = vmatpush1.msra.mxu0 0.0
  %3085 = vmatprep.subr.mxu0 0.0
  %3086 = vmatpush1.msra.mxu0 0.0
  %3087 = vmatprep.subr.mxu0 0.0
  %3088 = vmatpush1.msra.mxu0 0.0
  %3089 = vmatprep.subr.mxu0 0.0
  %3090 = vmatpush1.msra.mxu0 0.0
  %3091 = vmatprep.subr.mxu0 0.0
  %3092 = vmatpush1.msra.mxu0 0.0
  %3093 = vmatprep.subr.mxu0 0.0
  %3094 = vmatpush1.msra.mxu0 0.0
  %3095 = vmatprep.subr.mxu0 0.0
  %3096 = vmatpush1.msra.mxu0 0.0
  %3097 = vmatprep.subr.mxu0 0.0
  %3098 = vmatpush1.msra.mxu0 0.0
  %3099 = vmatprep.subr.mxu0 0.0
  %3100 = vmatpush1.msra.mxu0 0.0
  %3101 = vmatprep.subr.mxu0 0.0
  %3102 = vmatpush1.msra.mxu0 0.0
  %3103 = vmatprep.subr.mxu0 0.0
  %3104 = vmatpush1.msra.mxu0 0.0
  %3105 = vmatprep.subr.mxu0 0.0
  %3106 = vmatpush1.msra.mxu0 0.0
  %3107 = vmatprep.subr.mxu0 0.0
  %3108 = vmatpush1.msra.mxu0 0.0
  %3109 = vmatprep.subr.mxu0 0.0
  %3110 = vmatpush1.msra.mxu0 0.0
  %3111 = vmatprep.subr.mxu0 0.0
  %3112 = vmatpush1.msra.mxu0 0.0
  %3113 = vmatprep.subr.mxu0 0.0
  %3114 = vmatpush1.msra.mxu0 0.0
  %3115 = vmatprep.mubr.f32.mxu0 0.0
  %3116 = vmatmul.mubr.f32.gmra.mrb[0].mxu0 %v2627
  %v3117 = vpop.f32.mrb[0].mxu0
  %v3118 = vadd.f32 0.0, %v3117
  %v3119 = vpop.f32.mrb[0].mxu0
  %3120 = vmatprep.mubr.f32.mxu0 0.0
  %3121 = vmatmul.mubr.f32.gmra.mrb[0].mxu0 %v2630
  %v3122 = vpop.f32.mrb[0].mxu0
  %v3123 = vadd.f32 0.0, %v3122
  %v3124 = vpop.f32.mrb[0].mxu0
  %3125 = vmatprep.mubr.f32.mxu0 0.0
  %3126 = vmatmul.mubr.f32.gmra.mrb[0].mxu0 %v2633
  %v3127 = vpop.f32.mrb[0].mxu0
  %v3128 = vadd.f32 0.0, %v3127
  %v3129 = vpop.f32.mrb[0].mxu0
  %3130 = vmatprep.mubr.f32.mxu0 0.0
  %3131 = vmatmul.mubr.f32.gmra.mrb[0].mxu0 %v2636
  %v3132 = vpop.f32.mrb[0].mxu0
  %v3133 = vadd.f32 0.0, %v3132
  %v3134 = vpop.f32.mrb[0].mxu0
  %3135 = vmatprep.mubr.f32.mxu0 0.0
  %3136 = vmatmul.mubr.f32.gmra.mrb[0].mxu0 %v2639
  %v3137 = vpop.f32.mrb[0].mxu0
  %v3138 = vadd.f32 0.0, %v3137
  %v3139 = vpop.f32.mrb[0].mxu0
  %3140 = vmatprep.mubr.f32.mxu0 0.0
  %3141 = vmatmul.mubr.f32.gmra.mrb[0].mxu0 %v2642
  %v3142 = vpop.f32.mrb[0].mxu0
  %v3143 = vadd.f32 0.0, %v3142
  %v3144 = vpop.f32.mrb[0].mxu0
  %3145 = vmatprep.mubr.f32.mxu0 0.0
  %3146 = vmatmul.mubr.f32.gmra.mrb[0].mxu0 %v2645
  %v3147 = vpop.f32.mrb[0].mxu0
  %v3148 = vadd.f32 0.0, %v3147
  %v3149 = vpop.f32.mrb[0].mxu0
  %3150 = vmatprep.mubr.f32.mxu0 0.0
  %3151 = vmatmul.mubr.f32.gmra.mrb[0].mxu0 %v2648
  %v3152 = vpop.f32.mrb[0].mxu0
  %v3153 = vadd.f32 0.0, %v3152
  %v3154 = vpop.f32.mrb[0].mxu0
  %3155 = vmatprep.mubr.f32.mxu0 0.0
  %3156 = vmatmul.mubr.f32.gmra.mrb[0].mxu0 %v2903
  %v3157 = vpop.f32.mrb[0].mxu0
  %v3158 = vadd.f32 0.0, %v3157
  %v3159 = vpop.f32.mrb[0].mxu0
  %3160 = vmatprep.mubr.f32.mxu0 0.0
  %3161 = vmatmul.mubr.f32.gmra.mrb[0].mxu0 %v3046
  %v3162 = vpop.f32.mrb[0].mxu0
  %v3163 = vadd.f32 0.0, %v3162
  %v3164 = vpop.f32.mrb[0].mxu0
  %3165 = vdwg.mxu0
  %v3166 = vadd.f32 %v3023, %v3118
  %v3167 = vadd.f32 %v3024, %v3123
  %v3168 = vadd.f32 %v3025, %v3128
  %v3169 = vadd.f32 %v3026, %v3133
  %v3170 = vadd.f32 %v3027, %v3138
  %v3171 = vadd.f32 %v3028, %v3143
  %v3172 = vadd.f32 %v3029, %v3148
  %v3173 = vadd.f32 %v3030, %v3153
  %v3174 = vadd.f32 %v3031, %v3158
  %v3175 = vadd.f32 %v3032, %v3163
  %s3176 = scalar_lea.vmem %s4, 352
  %v3177 = vld [vmem:[%s3176] sm:$0xff]
  %v3178 = vld [vmem:[%s3176 + $0x8] sm:$0xff]
  %v3179 = vld [vmem:[%s3176 + $0x10] sm:$0xff]
  %v3180 = vld [vmem:[%s3176 + $0x18] sm:$0xff]
  %v3181 = vld [vmem:[%s3176 + $0x20] sm:$0xff]
  %v3182 = vld [vmem:[%s3176 + $0x28] sm:$0xff]
  %v3183 = vld [vmem:[%s3176 + $0x30] sm:$0xff]
  %v3184 = vld [vmem:[%s3176 + $0x38] sm:$0xff]
  %v3185 = vld [vmem:[%s3176 + $0x40] sm:$0xff]
  %v3186 = vld [vmem:[%s3176 + $0x48] sm:$0xff]
  %v3187 = vld [vmem:[%s3176 + $0x50] sm:$0xf]
  %v3189 = vsel %vm2619, %v2595, 0
  %v3192 = vsel %vm2650, %v3187, 0
  %3194 = vmatprep.subr.mxu0 0.0
  %3195 = vmatpush1.msra.mxu0 %v3177
  %3196 = vmatprep.subr.mxu0 0.0
  %3197 = vmatpush1.msra.mxu0 %v3178
  %3198 = vmatprep.subr.mxu0 0.0
  %3199 = vmatpush1.msra.mxu0 %v3179
  %3200 = vmatprep.subr.mxu0 0.0
  %3201 = vmatpush1.msra.mxu0 %v3180
  %3202 = vmatprep.subr.mxu0 0.0
  %3203 = vmatpush1.msra.mxu0 %v3181
  %3204 = vmatprep.subr.mxu0 0.0
  %3205 = vmatpush1.msra.mxu0 %v3182
  %3206 = vmatprep.subr.mxu0 0.0
  %3207 = vmatpush1.msra.mxu0 %v3183
  %3208 = vmatprep.subr.mxu0 0.0
  %3209 = vmatpush1.msra.mxu0 %v3184
  %3210 = vmatprep.subr.mxu0 0.0
  %3211 = vmatpush1.msra.mxu0 %v3185
  %3212 = vmatprep.subr.mxu0 0.0
  %3213 = vmatpush1.msra.mxu0 %v3186
  %3214 = vmatprep.subr.mxu0 0.0
  %3215 = vmatpush1.msra.mxu0 %v3192
  %3216 = vmatprep.subr.mxu0 0.0
  %3217 = vmatpush1.msra.mxu0 0.0
  %3218 = vmatprep.subr.mxu0 0.0
  %3219 = vmatpush1.msra.mxu0 0.0
  %3220 = vmatprep.subr.mxu0 0.0
  %3221 = vmatpush1.msra.mxu0 0.0
  %3222 = vmatprep.subr.mxu0 0.0
  %3223 = vmatpush1.msra.mxu0 0.0
  %3224 = vmatprep.subr.mxu0 0.0
  %3225 = vmatpush1.msra.mxu0 0.0
  %3226 = vmatprep.subr.mxu0 0.0
  %3227 = vmatpush1.msra.mxu0 0.0
  %3228 = vmatprep.subr.mxu0 0.0
  %3229 = vmatpush1.msra.mxu0 0.0
  %3230 = vmatprep.subr.mxu0 0.0
  %3231 = vmatpush1.msra.mxu0 0.0
  %3232 = vmatprep.subr.mxu0 0.0
  %3233 = vmatpush1.msra.mxu0 0.0
  %3234 = vmatprep.subr.mxu0 0.0
  %3235 = vmatpush1.msra.mxu0 0.0
  %3236 = vmatprep.subr.mxu0 0.0
  %3237 = vmatpush1.msra.mxu0 0.0
  %3238 = vmatprep.subr.mxu0 0.0
  %3239 = vmatpush1.msra.mxu0 0.0
  %3240 = vmatprep.subr.mxu0 0.0
  %3241 = vmatpush1.msra.mxu0 0.0
  %3242 = vmatprep.subr.mxu0 0.0
  %3243 = vmatpush1.msra.mxu0 0.0
  %3244 = vmatprep.subr.mxu0 0.0
  %3245 = vmatpush1.msra.mxu0 0.0
  %3246 = vmatprep.subr.mxu0 0.0
  %3247 = vmatpush1.msra.mxu0 0.0
  %3248 = vmatprep.subr.mxu0 0.0
  %3249 = vmatpush1.msra.mxu0 0.0
  %3250 = vmatprep.subr.mxu0 0.0
  %3251 = vmatpush1.msra.mxu0 0.0
  %3252 = vmatprep.subr.mxu0 0.0
  %3253 = vmatpush1.msra.mxu0 0.0
  %3254 = vmatprep.subr.mxu0 0.0
  %3255 = vmatpush1.msra.mxu0 0.0
  %3256 = vmatprep.subr.mxu0 0.0
  %3257 = vmatpush1.msra.mxu0 0.0
  %3258 = vmatprep.mubr.f32.mxu0 0.0
  %3259 = vmatmul.mubr.f32.gmra.mrb[0].mxu0 %v2630
  %v3260 = vpop.f32.mrb[0].mxu0
  %v3261 = vadd.f32 0.0, %v3260
  %v3262 = vpop.f32.mrb[0].mxu0
  %3263 = vmatprep.mubr.f32.mxu0 0.0
  %3264 = vmatmul.mubr.f32.gmra.mrb[0].mxu0 %v2633
  %v3265 = vpop.f32.mrb[0].mxu0
  %v3266 = vadd.f32 0.0, %v3265
  %v3267 = vpop.f32.mrb[0].mxu0
  %3268 = vmatprep.mubr.f32.mxu0 0.0
  %3269 = vmatmul.mubr.f32.gmra.mrb[0].mxu0 %v2636
  %v3270 = vpop.f32.mrb[0].mxu0
  %v3271 = vadd.f32 0.0, %v3270
  %v3272 = vpop.f32.mrb[0].mxu0
  %3273 = vmatprep.mubr.f32.mxu0 0.0
  %3274 = vmatmul.mubr.f32.gmra.mrb[0].mxu0 %v2639
  %v3275 = vpop.f32.mrb[0].mxu0
  %v3276 = vadd.f32 0.0, %v3275
  %v3277 = vpop.f32.mrb[0].mxu0
  %3278 = vmatprep.mubr.f32.mxu0 0.0
  %3279 = vmatmul.mubr.f32.gmra.mrb[0].mxu0 %v2642
  %v3280 = vpop.f32.mrb[0].mxu0
  %v3281 = vadd.f32 0.0, %v3280
  %v3282 = vpop.f32.mrb[0].mxu0
  %3283 = vmatprep.mubr.f32.mxu0 0.0
  %3284 = vmatmul.mubr.f32.gmra.mrb[0].mxu0 %v2645
  %v3285 = vpop.f32.mrb[0].mxu0
  %v3286 = vadd.f32 0.0, %v3285
  %v3287 = vpop.f32.mrb[0].mxu0
  %3288 = vmatprep.mubr.f32.mxu0 0.0
  %3289 = vmatmul.mubr.f32.gmra.mrb[0].mxu0 %v2648
  %v3290 = vpop.f32.mrb[0].mxu0
  %v3291 = vadd.f32 0.0, %v3290
  %v3292 = vpop.f32.mrb[0].mxu0
  %3293 = vmatprep.mubr.f32.mxu0 0.0
  %3294 = vmatmul.mubr.f32.gmra.mrb[0].mxu0 %v2903
  %v3295 = vpop.f32.mrb[0].mxu0
  %v3296 = vadd.f32 0.0, %v3295
  %v3297 = vpop.f32.mrb[0].mxu0
  %3298 = vmatprep.mubr.f32.mxu0 0.0
  %3299 = vmatmul.mubr.f32.gmra.mrb[0].mxu0 %v3046
  %v3300 = vpop.f32.mrb[0].mxu0
  %v3301 = vadd.f32 0.0, %v3300
  %v3302 = vpop.f32.mrb[0].mxu0
  %3303 = vmatprep.mubr.f32.mxu0 0.0
  %3304 = vmatmul.mubr.f32.gmra.mrb[0].mxu0 %v3189
  %v3305 = vpop.f32.mrb[0].mxu0
  %v3306 = vadd.f32 0.0, %v3305
  %v3307 = vpop.f32.mrb[0].mxu0
  %3308 = vdwg.mxu0
  %v3309 = vadd.f32 %v3166, %v3261
  %v3310 = vadd.f32 %v3167, %v3266
  %v3311 = vadd.f32 %v3168, %v3271
  %v3312 = vadd.f32 %v3169, %v3276
  %v3313 = vadd.f32 %v3170, %v3281
  %v3314 = vadd.f32 %v3171, %v3286
  %v3315 = vadd.f32 %v3172, %v3291
  %v3316 = vadd.f32 %v3173, %v3296
  %v3317 = vadd.f32 %v3174, %v3301
  %v3318 = vadd.f32 %v3175, %v3306
  %v3319 = vld [vmem:[%s5] sm:$0xff]
  %v3320 = vld [vmem:[%s5 + $0x8] sm:$0xff]
  %v3321 = vld [vmem:[%s5 + $0x10] sm:$0xff]
  %v3322 = vld [vmem:[%s5 + $0x18] sm:$0xff]
  %v3323 = vld [vmem:[%s5 + $0x20] sm:$0xff]
  %v3324 = vld [vmem:[%s5 + $0x28] sm:$0xff]
  %v3325 = vld [vmem:[%s5 + $0x30] sm:$0xff]
  %v3326 = vld [vmem:[%s5 + $0x38] sm:$0xff]
  %v3327 = vld [vmem:[%s5 + $0x40] sm:$0xff]
  %v3328 = vld [vmem:[%s5 + $0x48] sm:$0xff]
  %v3329 = vld [vmem:[%s5 + $0x50] sm:$0xf]
  %s3330 = scalar_lea.vmem %s5, 88
  %v3331 = vld [vmem:[%s3330] sm:$0xff]
  %v3332 = vld [vmem:[%s3330 + $0x8] sm:$0xff]
  %v3333 = vld [vmem:[%s3330 + $0x10] sm:$0xff]
  %v3334 = vld [vmem:[%s3330 + $0x18] sm:$0xff]
  %v3335 = vld [vmem:[%s3330 + $0x20] sm:$0xff]
  %v3336 = vld [vmem:[%s3330 + $0x28] sm:$0xff]
  %v3337 = vld [vmem:[%s3330 + $0x30] sm:$0xff]
  %v3338 = vld [vmem:[%s3330 + $0x38] sm:$0xff]
  %v3339 = vld [vmem:[%s3330 + $0x40] sm:$0xff]
  %v3340 = vld [vmem:[%s3330 + $0x48] sm:$0xff]
  %v3341 = vld [vmem:[%s3330 + $0x50] sm:$0xf]
  %v3343 = vsel %vm2650, %v3341, 0
  %3345 = vmatprep.subr.mxu0 0.0
  %3346 = vmatpush1.msra.mxu0 %v3331
  %3347 = vmatprep.subr.mxu0 0.0
  %3348 = vmatpush1.msra.mxu0 %v3332
  %3349 = vmatprep.subr.mxu0 0.0
  %3350 = vmatpush1.msra.mxu0 %v3333
  %3351 = vmatprep.subr.mxu0 0.0
  %3352 = vmatpush1.msra.mxu0 %v3334
  %3353 = vmatprep.subr.mxu0 0.0
  %3354 = vmatpush1.msra.mxu0 %v3335
  %3355 = vmatprep.subr.mxu0 0.0
  %3356 = vmatpush1.msra.mxu0 %v3336
  %3357 = vmatprep.subr.mxu0 0.0
  %3358 = vmatpush1.msra.mxu0 %v3337
  %3359 = vmatprep.subr.mxu0 0.0
  %3360 = vmatpush1.msra.mxu0 %v3338
  %3361 = vmatprep.subr.mxu0 0.0
  %3362 = vmatpush1.msra.mxu0 %v3339
  %3363 = vmatprep.subr.mxu0 0.0
  %3364 = vmatpush1.msra.mxu0 %v3340
  %3365 = vmatprep.subr.mxu0 0.0
  %3366 = vmatpush1.msra.mxu0 %v3343
  %3367 = vmatprep.subr.mxu0 0.0
  %3368 = vmatpush1.msra.mxu0 0.0
  %3369 = vmatprep.subr.mxu0 0.0
  %3370 = vmatpush1.msra.mxu0 0.0
  %3371 = vmatprep.subr.mxu0 0.0
  %3372 = vmatpush1.msra.mxu0 0.0
  %3373 = vmatprep.subr.mxu0 0.0
  %3374 = vmatpush1.msra.mxu0 0.0
  %3375 = vmatprep.subr.mxu0 0.0
  %3376 = vmatpush1.msra.mxu0 0.0
  %3377 = vmatprep.subr.mxu0 0.0
  %3378 = vmatpush1.msra.mxu0 0.0
  %3379 = vmatprep.subr.mxu0 0.0
  %3380 = vmatpush1.msra.mxu0 0.0
  %3381 = vmatprep.subr.mxu0 0.0
  %3382 = vmatpush1.msra.mxu0 0.0
  %3383 = vmatprep.subr.mxu0 0.0
  %3384 = vmatpush1.msra.mxu0 0.0
  %3385 = vmatprep.subr.mxu0 0.0
  %3386 = vmatpush1.msra.mxu0 0.0
  %3387 = vmatprep.subr.mxu0 0.0
  %3388 = vmatpush1.msra.mxu0 0.0
  %3389 = vmatprep.subr.mxu0 0.0
  %3390 = vmatpush1.msra.mxu0 0.0
  %3391 = vmatprep.subr.mxu0 0.0
  %3392 = vmatpush1.msra.mxu0 0.0
  %3393 = vmatprep.subr.mxu0 0.0
  %3394 = vmatpush1.msra.mxu0 0.0
  %3395 = vmatprep.subr.mxu0 0.0
  %3396 = vmatpush1.msra.mxu0 0.0
  %3397 = vmatprep.subr.mxu0 0.0
  %3398 = vmatpush1.msra.mxu0 0.0
  %3399 = vmatprep.subr.mxu0 0.0
  %3400 = vmatpush1.msra.mxu0 0.0
  %3401 = vmatprep.subr.mxu0 0.0
  %3402 = vmatpush1.msra.mxu0 0.0
  %3403 = vmatprep.subr.mxu0 0.0
  %3404 = vmatpush1.msra.mxu0 0.0
  %3405 = vmatprep.subr.mxu0 0.0
  %3406 = vmatpush1.msra.mxu0 0.0
  %3407 = vmatprep.subr.mxu0 0.0
  %3408 = vmatpush1.msra.mxu0 0.0
  %3409 = vmatprep.mubr.f32.mxu0 0.0
  %3410 = vmatmul.mubr.f32.gmra.mrb[0].mxu0 %v2621
  %v3411 = vpop.f32.mrb[0].mxu0
  %v3412 = vadd.f32 0.0, %v3411
  %v3413 = vpop.f32.mrb[0].mxu0
  %3414 = vmatprep.mubr.f32.mxu0 0.0
  %3415 = vmatmul.mubr.f32.gmra.mrb[0].mxu0 %v2624
  %v3416 = vpop.f32.mrb[0].mxu0
  %v3417 = vadd.f32 0.0, %v3416
  %v3418 = vpop.f32.mrb[0].mxu0
  %3419 = vmatprep.mubr.f32.mxu0 0.0
  %3420 = vmatmul.mubr.f32.gmra.mrb[0].mxu0 %v2627
  %v3421 = vpop.f32.mrb[0].mxu0
  %v3422 = vadd.f32 0.0, %v3421
  %v3423 = vpop.f32.mrb[0].mxu0
  %3424 = vmatprep.mubr.f32.mxu0 0.0
  %3425 = vmatmul.mubr.f32.gmra.mrb[0].mxu0 %v2630
  %v3426 = vpop.f32.mrb[0].mxu0
  %v3427 = vadd.f32 0.0, %v3426
  %v3428 = vpop.f32.mrb[0].mxu0
  %3429 = vmatprep.mubr.f32.mxu0 0.0
  %3430 = vmatmul.mubr.f32.gmra.mrb[0].mxu0 %v2633
  %v3431 = vpop.f32.mrb[0].mxu0
  %v3432 = vadd.f32 0.0, %v3431
  %v3433 = vpop.f32.mrb[0].mxu0
  %3434 = vmatprep.mubr.f32.mxu0 0.0
  %3435 = vmatmul.mubr.f32.gmra.mrb[0].mxu0 %v2636
  %v3436 = vpop.f32.mrb[0].mxu0
  %v3437 = vadd.f32 0.0, %v3436
  %v3438 = vpop.f32.mrb[0].mxu0
  %3439 = vmatprep.mubr.f32.mxu0 0.0
  %3440 = vmatmul.mubr.f32.gmra.mrb[0].mxu0 %v2639
  %v3441 = vpop.f32.mrb[0].mxu0
  %v3442 = vadd.f32 0.0, %v3441
  %v3443 = vpop.f32.mrb[0].mxu0
  %3444 = vmatprep.mubr.f32.mxu0 0.0
  %3445 = vmatmul.mubr.f32.gmra.mrb[0].mxu0 %v2642
  %v3446 = vpop.f32.mrb[0].mxu0
  %v3447 = vadd.f32 0.0, %v3446
  %v3448 = vpop.f32.mrb[0].mxu0
  %3449 = vmatprep.mubr.f32.mxu0 0.0
  %3450 = vmatmul.mubr.f32.gmra.mrb[0].mxu0 %v2645
  %v3451 = vpop.f32.mrb[0].mxu0
  %v3452 = vadd.f32 0.0, %v3451
  %v3453 = vpop.f32.mrb[0].mxu0
  %3454 = vmatprep.mubr.f32.mxu0 0.0
  %3455 = vmatmul.mubr.f32.gmra.mrb[0].mxu0 %v2648
  %v3456 = vpop.f32.mrb[0].mxu0
  %v3457 = vadd.f32 0.0, %v3456
  %v3458 = vpop.f32.mrb[0].mxu0
  %3459 = vdwg.mxu0
  %v3461 = vsel %vm2650, %v3329, 0
  %3463 = vmatprep.subr.mxu0 0.0
  %3464 = vmatpush1.msra.mxu0 %v3319
  %3465 = vmatprep.subr.mxu0 0.0
  %3466 = vmatpush1.msra.mxu0 %v3320
  %3467 = vmatprep.subr.mxu0 0.0
  %3468 = vmatpush1.msra.mxu0 %v3321
  %3469 = vmatprep.subr.mxu0 0.0
  %3470 = vmatpush1.msra.mxu0 %v3322
  %3471 = vmatprep.subr.mxu0 0.0
  %3472 = vmatpush1.msra.mxu0 %v3323
  %3473 = vmatprep.subr.mxu0 0.0
  %3474 = vmatpush1.msra.mxu0 %v3324
  %3475 = vmatprep.subr.mxu0 0.0
  %3476 = vmatpush1.msra.mxu0 %v3325
  %3477 = vmatprep.subr.mxu0 0.0
  %3478 = vmatpush1.msra.mxu0 %v3326
  %3479 = vmatprep.subr.mxu0 0.0
  %3480 = vmatpush1.msra.mxu0 %v3327
  %3481 = vmatprep.subr.mxu0 0.0
  %3482 = vmatpush1.msra.mxu0 %v3328
  %3483 = vmatprep.subr.mxu0 0.0
  %3484 = vmatpush1.msra.mxu0 %v3461
  %3485 = vmatprep.subr.mxu0 0.0
  %3486 = vmatpush1.msra.mxu0 0.0
  %3487 = vmatprep.subr.mxu0 0.0
  %3488 = vmatpush1.msra.mxu0 0.0
  %3489 = vmatprep.subr.mxu0 0.0
  %3490 = vmatpush1.msra.mxu0 0.0
  %3491 = vmatprep.subr.mxu0 0.0
  %3492 = vmatpush1.msra.mxu0 0.0
  %3493 = vmatprep.subr.mxu0 0.0
  %3494 = vmatpush1.msra.mxu0 0.0
  %3495 = vmatprep.subr.mxu0 0.0
  %3496 = vmatpush1.msra.mxu0 0.0
  %3497 = vmatprep.subr.mxu0 0.0
  %3498 = vmatpush1.msra.mxu0 0.0
  %3499 = vmatprep.subr.mxu0 0.0
  %3500 = vmatpush1.msra.mxu0 0.0
  %3501 = vmatprep.subr.mxu0 0.0
  %3502 = vmatpush1.msra.mxu0 0.0
  %3503 = vmatprep.subr.mxu0 0.0
  %3504 = vmatpush1.msra.mxu0 0.0
  %3505 = vmatprep.subr.mxu0 0.0
  %3506 = vmatpush1.msra.mxu0 0.0
  %3507 = vmatprep.subr.mxu0 0.0
  %3508 = vmatpush1.msra.mxu0 0.0
  %3509 = vmatprep.subr.mxu0 0.0
  %3510 = vmatpush1.msra.mxu0 0.0
  %3511 = vmatprep.subr.mxu0 0.0
  %3512 = vmatpush1.msra.mxu0 0.0
  %3513 = vmatprep.subr.mxu0 0.0
  %3514 = vmatpush1.msra.mxu0 0.0
  %3515 = vmatprep.subr.mxu0 0.0
  %3516 = vmatpush1.msra.mxu0 0.0
  %3517 = vmatprep.subr.mxu0 0.0
  %3518 = vmatpush1.msra.mxu0 0.0
  %3519 = vmatprep.subr.mxu0 0.0
  %3520 = vmatpush1.msra.mxu0 0.0
  %3521 = vmatprep.subr.mxu0 0.0
  %3522 = vmatpush1.msra.mxu0 0.0
  %3523 = vmatprep.subr.mxu0 0.0
  %3524 = vmatpush1.msra.mxu0 0.0
  %3525 = vmatprep.subr.mxu0 0.0
  %3526 = vmatpush1.msra.mxu0 0.0
  %3527 = vmatprep.mubr.f32.mxu0 0.0
  %3528 = vmatmul.mubr.f32.gmra.mrb[0].mxu0 %v2770
  %v3529 = vpop.f32.mrb[0].mxu0
  %v3530 = vadd.f32 %v3412, %v3529
  %v3531 = vpop.f32.mrb[0].mxu0
  %3532 = vmatprep.mubr.f32.mxu0 0.0
  %3533 = vmatmul.mubr.f32.gmra.mrb[0].mxu0 %v2621
  %v3534 = vpop.f32.mrb[0].mxu0
  %v3535 = vadd.f32 %v3417, %v3534
  %v3536 = vpop.f32.mrb[0].mxu0
  %3537 = vmatprep.mubr.f32.mxu0 0.0
  %3538 = vmatmul.mubr.f32.gmra.mrb[0].mxu0 %v2624
  %v3539 = vpop.f32.mrb[0].mxu0
  %v3540 = vadd.f32 %v3422, %v3539
  %v3541 = vpop.f32.mrb[0].mxu0
  %3542 = vmatprep.mubr.f32.mxu0 0.0
  %3543 = vmatmul.mubr.f32.gmra.mrb[0].mxu0 %v2627
  %v3544 = vpop.f32.mrb[0].mxu0
  %v3545 = vadd.f32 %v3427, %v3544
  %v3546 = vpop.f32.mrb[0].mxu0
  %3547 = vmatprep.mubr.f32.mxu0 0.0
  %3548 = vmatmul.mubr.f32.gmra.mrb[0].mxu0 %v2630
  %v3549 = vpop.f32.mrb[0].mxu0
  %v3550 = vadd.f32 %v3432, %v3549
  %v3551 = vpop.f32.mrb[0].mxu0
  %3552 = vmatprep.mubr.f32.mxu0 0.0
  %3553 = vmatmul.mubr.f32.gmra.mrb[0].mxu0 %v2633
  %v3554 = vpop.f32.mrb[0].mxu0
  %v3555 = vadd.f32 %v3437, %v3554
  %v3556 = vpop.f32.mrb[0].mxu0
  %3557 = vmatprep.mubr.f32.mxu0 0.0
  %3558 = vmatmul.mubr.f32.gmra.mrb[0].mxu0 %v2636
  %v3559 = vpop.f32.mrb[0].mxu0
  %v3560 = vadd.f32 %v3442, %v3559
  %v3561 = vpop.f32.mrb[0].mxu0
  %3562 = vmatprep.mubr.f32.mxu0 0.0
  %3563 = vmatmul.mubr.f32.gmra.mrb[0].mxu0 %v2639
  %v3564 = vpop.f32.mrb[0].mxu0
  %v3565 = vadd.f32 %v3447, %v3564
  %v3566 = vpop.f32.mrb[0].mxu0
  %3567 = vmatprep.mubr.f32.mxu0 0.0
  %3568 = vmatmul.mubr.f32.gmra.mrb[0].mxu0 %v2642
  %v3569 = vpop.f32.mrb[0].mxu0
  %v3570 = vadd.f32 %v3452, %v3569
  %v3571 = vpop.f32.mrb[0].mxu0
  %3572 = vmatprep.mubr.f32.mxu0 0.0
  %3573 = vmatmul.mubr.f32.gmra.mrb[0].mxu0 %v2645
  %v3574 = vpop.f32.mrb[0].mxu0
  %v3575 = vadd.f32 %v3457, %v3574
  %v3576 = vpop.f32.mrb[0].mxu0
  %3577 = vdwg.mxu0
  %s3578 = scalar_lea.vmem %s5, 176
  %v3579 = vld [vmem:[%s3578] sm:$0xff]
  %v3580 = vld [vmem:[%s3578 + $0x8] sm:$0xff]
  %v3581 = vld [vmem:[%s3578 + $0x10] sm:$0xff]
  %v3582 = vld [vmem:[%s3578 + $0x18] sm:$0xff]
  %v3583 = vld [vmem:[%s3578 + $0x20] sm:$0xff]
  %v3584 = vld [vmem:[%s3578 + $0x28] sm:$0xff]
  %v3585 = vld [vmem:[%s3578 + $0x30] sm:$0xff]
  %v3586 = vld [vmem:[%s3578 + $0x38] sm:$0xff]
  %v3587 = vld [vmem:[%s3578 + $0x40] sm:$0xff]
  %v3588 = vld [vmem:[%s3578 + $0x48] sm:$0xff]
  %v3589 = vld [vmem:[%s3578 + $0x50] sm:$0xf]
  %v3591 = vsel %vm2650, %v3589, 0
  %3593 = vmatprep.subr.mxu0 0.0
  %3594 = vmatpush1.msra.mxu0 %v3579
  %3595 = vmatprep.subr.mxu0 0.0
  %3596 = vmatpush1.msra.mxu0 %v3580
  %3597 = vmatprep.subr.mxu0 0.0
  %3598 = vmatpush1.msra.mxu0 %v3581
  %3599 = vmatprep.subr.mxu0 0.0
  %3600 = vmatpush1.msra.mxu0 %v3582
  %3601 = vmatprep.subr.mxu0 0.0
  %3602 = vmatpush1.msra.mxu0 %v3583
  %3603 = vmatprep.subr.mxu0 0.0
  %3604 = vmatpush1.msra.mxu0 %v3584
  %3605 = vmatprep.subr.mxu0 0.0
  %3606 = vmatpush1.msra.mxu0 %v3585
  %3607 = vmatprep.subr.mxu0 0.0
  %3608 = vmatpush1.msra.mxu0 %v3586
  %3609 = vmatprep.subr.mxu0 0.0
  %3610 = vmatpush1.msra.mxu0 %v3587
  %3611 = vmatprep.subr.mxu0 0.0
  %3612 = vmatpush1.msra.mxu0 %v3588
  %3613 = vmatprep.subr.mxu0 0.0
  %3614 = vmatpush1.msra.mxu0 %v3591
  %3615 = vmatprep.subr.mxu0 0.0
  %3616 = vmatpush1.msra.mxu0 0.0
  %3617 = vmatprep.subr.mxu0 0.0
  %3618 = vmatpush1.msra.mxu0 0.0
  %3619 = vmatprep.subr.mxu0 0.0
  %3620 = vmatpush1.msra.mxu0 0.0
  %3621 = vmatprep.subr.mxu0 0.0
  %3622 = vmatpush1.msra.mxu0 0.0
  %3623 = vmatprep.subr.mxu0 0.0
  %3624 = vmatpush1.msra.mxu0 0.0
  %3625 = vmatprep.subr.mxu0 0.0
  %3626 = vmatpush1.msra.mxu0 0.0
  %3627 = vmatprep.subr.mxu0 0.0
  %3628 = vmatpush1.msra.mxu0 0.0
  %3629 = vmatprep.subr.mxu0 0.0
  %3630 = vmatpush1.msra.mxu0 0.0
  %3631 = vmatprep.subr.mxu0 0.0
  %3632 = vmatpush1.msra.mxu0 0.0
  %3633 = vmatprep.subr.mxu0 0.0
  %3634 = vmatpush1.msra.mxu0 0.0
  %3635 = vmatprep.subr.mxu0 0.0
  %3636 = vmatpush1.msra.mxu0 0.0
  %3637 = vmatprep.subr.mxu0 0.0
  %3638 = vmatpush1.msra.mxu0 0.0
  %3639 = vmatprep.subr.mxu0 0.0
  %3640 = vmatpush1.msra.mxu0 0.0
  %3641 = vmatprep.subr.mxu0 0.0
  %3642 = vmatpush1.msra.mxu0 0.0
  %3643 = vmatprep.subr.mxu0 0.0
  %3644 = vmatpush1.msra.mxu0 0.0
  %3645 = vmatprep.subr.mxu0 0.0
  %3646 = vmatpush1.msra.mxu0 0.0
  %3647 = vmatprep.subr.mxu0 0.0
  %3648 = vmatpush1.msra.mxu0 0.0
  %3649 = vmatprep.subr.mxu0 0.0
  %3650 = vmatpush1.msra.mxu0 0.0
  %3651 = vmatprep.subr.mxu0 0.0
  %3652 = vmatpush1.msra.mxu0 0.0
  %3653 = vmatprep.subr.mxu0 0.0
  %3654 = vmatpush1.msra.mxu0 0.0
  %3655 = vmatprep.subr.mxu0 0.0
  %3656 = vmatpush1.msra.mxu0 0.0
  %3657 = vmatprep.mubr.f32.mxu0 0.0
  %3658 = vmatmul.mubr.f32.gmra.mrb[0].mxu0 %v2624
  %v3659 = vpop.f32.mrb[0].mxu0
  %v3660 = vadd.f32 0.0, %v3659
  %v3661 = vpop.f32.mrb[0].mxu0
  %3662 = vmatprep.mubr.f32.mxu0 0.0
  %3663 = vmatmul.mubr.f32.gmra.mrb[0].mxu0 %v2627
  %v3664 = vpop.f32.mrb[0].mxu0
  %v3665 = vadd.f32 0.0, %v3664
  %v3666 = vpop.f32.mrb[0].mxu0
  %3667 = vmatprep.mubr.f32.mxu0 0.0
  %3668 = vmatmul.mubr.f32.gmra.mrb[0].mxu0 %v2630
  %v3669 = vpop.f32.mrb[0].mxu0
  %v3670 = vadd.f32 0.0, %v3669
  %v3671 = vpop.f32.mrb[0].mxu0
  %3672 = vmatprep.mubr.f32.mxu0 0.0
  %3673 = vmatmul.mubr.f32.gmra.mrb[0].mxu0 %v2633
  %v3674 = vpop.f32.mrb[0].mxu0
  %v3675 = vadd.f32 0.0, %v3674
  %v3676 = vpop.f32.mrb[0].mxu0
  %3677 = vmatprep.mubr.f32.mxu0 0.0
  %3678 = vmatmul.mubr.f32.gmra.mrb[0].mxu0 %v2636
  %v3679 = vpop.f32.mrb[0].mxu0
  %v3680 = vadd.f32 0.0, %v3679
  %v3681 = vpop.f32.mrb[0].mxu0
  %3682 = vmatprep.mubr.f32.mxu0 0.0
  %3683 = vmatmul.mubr.f32.gmra.mrb[0].mxu0 %v2639
  %v3684 = vpop.f32.mrb[0].mxu0
  %v3685 = vadd.f32 0.0, %v3684
  %v3686 = vpop.f32.mrb[0].mxu0
  %3687 = vmatprep.mubr.f32.mxu0 0.0
  %3688 = vmatmul.mubr.f32.gmra.mrb[0].mxu0 %v2642
  %v3689 = vpop.f32.mrb[0].mxu0
  %v3690 = vadd.f32 0.0, %v3689
  %v3691 = vpop.f32.mrb[0].mxu0
  %3692 = vmatprep.mubr.f32.mxu0 0.0
  %3693 = vmatmul.mubr.f32.gmra.mrb[0].mxu0 %v2645
  %v3694 = vpop.f32.mrb[0].mxu0
  %v3695 = vadd.f32 0.0, %v3694
  %v3696 = vpop.f32.mrb[0].mxu0
  %3697 = vmatprep.mubr.f32.mxu0 0.0
  %3698 = vmatmul.mubr.f32.gmra.mrb[0].mxu0 %v2648
  %v3699 = vpop.f32.mrb[0].mxu0
  %v3700 = vadd.f32 0.0, %v3699
  %v3701 = vpop.f32.mrb[0].mxu0
  %3702 = vmatprep.mubr.f32.mxu0 0.0
  %3703 = vmatmul.mubr.f32.gmra.mrb[0].mxu0 %v2903
  %v3704 = vpop.f32.mrb[0].mxu0
  %v3705 = vadd.f32 0.0, %v3704
  %v3706 = vpop.f32.mrb[0].mxu0
  %3707 = vdwg.mxu0
  %v3708 = vadd.f32 %v3530, %v3660
  %v3709 = vadd.f32 %v3535, %v3665
  %v3710 = vadd.f32 %v3540, %v3670
  %v3711 = vadd.f32 %v3545, %v3675
  %v3712 = vadd.f32 %v3550, %v3680
  %v3713 = vadd.f32 %v3555, %v3685
  %v3714 = vadd.f32 %v3560, %v3690
  %v3715 = vadd.f32 %v3565, %v3695
  %v3716 = vadd.f32 %v3570, %v3700
  %v3717 = vadd.f32 %v3575, %v3705
  %s3718 = scalar_lea.vmem %s5, 264
  %v3719 = vld [vmem:[%s3718] sm:$0xff]
  %v3720 = vld [vmem:[%s3718 + $0x8] sm:$0xff]
  %v3721 = vld [vmem:[%s3718 + $0x10] sm:$0xff]
  %v3722 = vld [vmem:[%s3718 + $0x18] sm:$0xff]
  %v3723 = vld [vmem:[%s3718 + $0x20] sm:$0xff]
  %v3724 = vld [vmem:[%s3718 + $0x28] sm:$0xff]
  %v3725 = vld [vmem:[%s3718 + $0x30] sm:$0xff]
  %v3726 = vld [vmem:[%s3718 + $0x38] sm:$0xff]
  %v3727 = vld [vmem:[%s3718 + $0x40] sm:$0xff]
  %v3728 = vld [vmem:[%s3718 + $0x48] sm:$0xff]
  %v3729 = vld [vmem:[%s3718 + $0x50] sm:$0xf]
  %v3731 = vsel %vm2650, %v3729, 0
  %3733 = vmatprep.subr.mxu0 0.0
  %3734 = vmatpush1.msra.mxu0 %v3719
  %3735 = vmatprep.subr.mxu0 0.0
  %3736 = vmatpush1.msra.mxu0 %v3720
  %3737 = vmatprep.subr.mxu0 0.0
  %3738 = vmatpush1.msra.mxu0 %v3721
  %3739 = vmatprep.subr.mxu0 0.0
  %3740 = vmatpush1.msra.mxu0 %v3722
  %3741 = vmatprep.subr.mxu0 0.0
  %3742 = vmatpush1.msra.mxu0 %v3723
  %3743 = vmatprep.subr.mxu0 0.0
  %3744 = vmatpush1.msra.mxu0 %v3724
  %3745 = vmatprep.subr.mxu0 0.0
  %3746 = vmatpush1.msra.mxu0 %v3725
  %3747 = vmatprep.subr.mxu0 0.0
  %3748 = vmatpush1.msra.mxu0 %v3726
  %3749 = vmatprep.subr.mxu0 0.0
  %3750 = vmatpush1.msra.mxu0 %v3727
  %3751 = vmatprep.subr.mxu0 0.0
  %3752 = vmatpush1.msra.mxu0 %v3728
  %3753 = vmatprep.subr.mxu0 0.0
  %3754 = vmatpush1.msra.mxu0 %v3731
  %3755 = vmatprep.subr.mxu0 0.0
  %3756 = vmatpush1.msra.mxu0 0.0
  %3757 = vmatprep.subr.mxu0 0.0
  %3758 = vmatpush1.msra.mxu0 0.0
  %3759 = vmatprep.subr.mxu0 0.0
  %3760 = vmatpush1.msra.mxu0 0.0
  %3761 = vmatprep.subr.mxu0 0.0
  %3762 = vmatpush1.msra.mxu0 0.0
  %3763 = vmatprep.subr.mxu0 0.0
  %3764 = vmatpush1.msra.mxu0 0.0
  %3765 = vmatprep.subr.mxu0 0.0
  %3766 = vmatpush1.msra.mxu0 0.0
  %3767 = vmatprep.subr.mxu0 0.0
  %3768 = vmatpush1.msra.mxu0 0.0
  %3769 = vmatprep.subr.mxu0 0.0
  %3770 = vmatpush1.msra.mxu0 0.0
  %3771 = vmatprep.subr.mxu0 0.0
  %3772 = vmatpush1.msra.mxu0 0.0
  %3773 = vmatprep.subr.mxu0 0.0
  %3774 = vmatpush1.msra.mxu0 0.0
  %3775 = vmatprep.subr.mxu0 0.0
  %3776 = vmatpush1.msra.mxu0 0.0
  %3777 = vmatprep.subr.mxu0 0.0
  %3778 = vmatpush1.msra.mxu0 0.0
  %3779 = vmatprep.subr.mxu0 0.0
  %3780 = vmatpush1.msra.mxu0 0.0
  %3781 = vmatprep.subr.mxu0 0.0
  %3782 = vmatpush1.msra.mxu0 0.0
  %3783 = vmatprep.subr.mxu0 0.0
  %3784 = vmatpush1.msra.mxu0 0.0
  %3785 = vmatprep.subr.mxu0 0.0
  %3786 = vmatpush1.msra.mxu0 0.0
  %3787 = vmatprep.subr.mxu0 0.0
  %3788 = vmatpush1.msra.mxu0 0.0
  %3789 = vmatprep.subr.mxu0 0.0
  %3790 = vmatpush1.msra.mxu0 0.0
  %3791 = vmatprep.subr.mxu0 0.0
  %3792 = vmatpush1.msra.mxu0 0.0
  %3793 = vmatprep.subr.mxu0 0.0
  %3794 = vmatpush1.msra.mxu0 0.0
  %3795 = vmatprep.subr.mxu0 0.0
  %3796 = vmatpush1.msra.mxu0 0.0
  %3797 = vmatprep.mubr.f32.mxu0 0.0
  %3798 = vmatmul.mubr.f32.gmra.mrb[0].mxu0 %v2627
  %v3799 = vpop.f32.mrb[0].mxu0
  %v3800 = vadd.f32 0.0, %v3799
  %v3801 = vpop.f32.mrb[0].mxu0
  %3802 = vmatprep.mubr.f32.mxu0 0.0
  %3803 = vmatmul.mubr.f32.gmra.mrb[0].mxu0 %v2630
  %v3804 = vpop.f32.mrb[0].mxu0
  %v3805 = vadd.f32 0.0, %v3804
  %v3806 = vpop.f32.mrb[0].mxu0
  %3807 = vmatprep.mubr.f32.mxu0 0.0
  %3808 = vmatmul.mubr.f32.gmra.mrb[0].mxu0 %v2633
  %v3809 = vpop.f32.mrb[0].mxu0
  %v3810 = vadd.f32 0.0, %v3809
  %v3811 = vpop.f32.mrb[0].mxu0
  %3812 = vmatprep.mubr.f32.mxu0 0.0
  %3813 = vmatmul.mubr.f32.gmra.mrb[0].mxu0 %v2636
  %v3814 = vpop.f32.mrb[0].mxu0
  %v3815 = vadd.f32 0.0, %v3814
  %v3816 = vpop.f32.mrb[0].mxu0
  %3817 = vmatprep.mubr.f32.mxu0 0.0
  %3818 = vmatmul.mubr.f32.gmra.mrb[0].mxu0 %v2639
  %v3819 = vpop.f32.mrb[0].mxu0
  %v3820 = vadd.f32 0.0, %v3819
  %v3821 = vpop.f32.mrb[0].mxu0
  %3822 = vmatprep.mubr.f32.mxu0 0.0
  %3823 = vmatmul.mubr.f32.gmra.mrb[0].mxu0 %v2642
  %v3824 = vpop.f32.mrb[0].mxu0
  %v3825 = vadd.f32 0.0, %v3824
  %v3826 = vpop.f32.mrb[0].mxu0
  %3827 = vmatprep.mubr.f32.mxu0 0.0
  %3828 = vmatmul.mubr.f32.gmra.mrb[0].mxu0 %v2645
  %v3829 = vpop.f32.mrb[0].mxu0
  %v3830 = vadd.f32 0.0, %v3829
  %v3831 = vpop.f32.mrb[0].mxu0
  %3832 = vmatprep.mubr.f32.mxu0 0.0
  %3833 = vmatmul.mubr.f32.gmra.mrb[0].mxu0 %v2648
  %v3834 = vpop.f32.mrb[0].mxu0
  %v3835 = vadd.f32 0.0, %v3834
  %v3836 = vpop.f32.mrb[0].mxu0
  %3837 = vmatprep.mubr.f32.mxu0 0.0
  %3838 = vmatmul.mubr.f32.gmra.mrb[0].mxu0 %v2903
  %v3839 = vpop.f32.mrb[0].mxu0
  %v3840 = vadd.f32 0.0, %v3839
  %v3841 = vpop.f32.mrb[0].mxu0
  %3842 = vmatprep.mubr.f32.mxu0 0.0
  %3843 = vmatmul.mubr.f32.gmra.mrb[0].mxu0 %v3046
  %v3844 = vpop.f32.mrb[0].mxu0
  %v3845 = vadd.f32 0.0, %v3844
  %v3846 = vpop.f32.mrb[0].mxu0
  %3847 = vdwg.mxu0
  %v3848 = vadd.f32 %v3708, %v3800
  %v3849 = vadd.f32 %v3709, %v3805
  %v3850 = vadd.f32 %v3710, %v3810
  %v3851 = vadd.f32 %v3711, %v3815
  %v3852 = vadd.f32 %v3712, %v3820
  %v3853 = vadd.f32 %v3713, %v3825
  %v3854 = vadd.f32 %v3714, %v3830
  %v3855 = vadd.f32 %v3715, %v3835
  %v3856 = vadd.f32 %v3716, %v3840
  %v3857 = vadd.f32 %v3717, %v3845
  %s3858 = scalar_lea.vmem %s5, 352
  %v3859 = vld [vmem:[%s3858] sm:$0xff]
  %v3860 = vld [vmem:[%s3858 + $0x8] sm:$0xff]
  %v3861 = vld [vmem:[%s3858 + $0x10] sm:$0xff]
  %v3862 = vld [vmem:[%s3858 + $0x18] sm:$0xff]
  %v3863 = vld [vmem:[%s3858 + $0x20] sm:$0xff]
  %v3864 = vld [vmem:[%s3858 + $0x28] sm:$0xff]
  %v3865 = vld [vmem:[%s3858 + $0x30] sm:$0xff]
  %v3866 = vld [vmem:[%s3858 + $0x38] sm:$0xff]
  %v3867 = vld [vmem:[%s3858 + $0x40] sm:$0xff]
  %v3868 = vld [vmem:[%s3858 + $0x48] sm:$0xff]
  %v3869 = vld [vmem:[%s3858 + $0x50] sm:$0xf]
  %v3871 = vsel %vm2650, %v3869, 0
  %3873 = vmatprep.subr.mxu0 0.0
  %3874 = vmatpush1.msra.mxu0 %v3859
  %3875 = vmatprep.subr.mxu0 0.0
  %3876 = vmatpush1.msra.mxu0 %v3860
  %3877 = vmatprep.subr.mxu0 0.0
  %3878 = vmatpush1.msra.mxu0 %v3861
  %3879 = vmatprep.subr.mxu0 0.0
  %3880 = vmatpush1.msra.mxu0 %v3862
  %3881 = vmatprep.subr.mxu0 0.0
  %3882 = vmatpush1.msra.mxu0 %v3863
  %3883 = vmatprep.subr.mxu0 0.0
  %3884 = vmatpush1.msra.mxu0 %v3864
  %3885 = vmatprep.subr.mxu0 0.0
  %3886 = vmatpush1.msra.mxu0 %v3865
  %3887 = vmatprep.subr.mxu0 0.0
  %3888 = vmatpush1.msra.mxu0 %v3866
  %3889 = vmatprep.subr.mxu0 0.0
  %3890 = vmatpush1.msra.mxu0 %v3867
  %3891 = vmatprep.subr.mxu0 0.0
  %3892 = vmatpush1.msra.mxu0 %v3868
  %3893 = vmatprep.subr.mxu0 0.0
  %3894 = vmatpush1.msra.mxu0 %v3871
  %3895 = vmatprep.subr.mxu0 0.0
  %3896 = vmatpush1.msra.mxu0 0.0
  %3897 = vmatprep.subr.mxu0 0.0
  %3898 = vmatpush1.msra.mxu0 0.0
  %3899 = vmatprep.subr.mxu0 0.0
  %3900 = vmatpush1.msra.mxu0 0.0
  %3901 = vmatprep.subr.mxu0 0.0
  %3902 = vmatpush1.msra.mxu0 0.0
  %3903 = vmatprep.subr.mxu0 0.0
  %3904 = vmatpush1.msra.mxu0 0.0
  %3905 = vmatprep.subr.mxu0 0.0
  %3906 = vmatpush1.msra.mxu0 0.0
  %3907 = vmatprep.subr.mxu0 0.0
  %3908 = vmatpush1.msra.mxu0 0.0
  %3909 = vmatprep.subr.mxu0 0.0
  %3910 = vmatpush1.msra.mxu0 0.0
  %3911 = vmatprep.subr.mxu0 0.0
  %3912 = vmatpush1.msra.mxu0 0.0
  %3913 = vmatprep.subr.mxu0 0.0
  %3914 = vmatpush1.msra.mxu0 0.0
  %3915 = vmatprep.subr.mxu0 0.0
  %3916 = vmatpush1.msra.mxu0 0.0
  %3917 = vmatprep.subr.mxu0 0.0
  %3918 = vmatpush1.msra.mxu0 0.0
  %3919 = vmatprep.subr.mxu0 0.0
  %3920 = vmatpush1.msra.mxu0 0.0
  %3921 = vmatprep.subr.mxu0 0.0
  %3922 = vmatpush1.msra.mxu0 0.0
  %3923 = vmatprep.subr.mxu0 0.0
  %3924 = vmatpush1.msra.mxu0 0.0
  %3925 = vmatprep.subr.mxu0 0.0
  %3926 = vmatpush1.msra.mxu0 0.0
  %3927 = vmatprep.subr.mxu0 0.0
  %3928 = vmatpush1.msra.mxu0 0.0
  %3929 = vmatprep.subr.mxu0 0.0
  %3930 = vmatpush1.msra.mxu0 0.0
  %3931 = vmatprep.subr.mxu0 0.0
  %3932 = vmatpush1.msra.mxu0 0.0
  %3933 = vmatprep.subr.mxu0 0.0
  %3934 = vmatpush1.msra.mxu0 0.0
  %3935 = vmatprep.subr.mxu0 0.0
  %3936 = vmatpush1.msra.mxu0 0.0
  %3937 = vmatprep.mubr.f32.mxu0 0.0
  %3938 = vmatmul.mubr.f32.gmra.mrb[0].mxu0 %v2630
  %v3939 = vpop.f32.mrb[0].mxu0
  %v3940 = vadd.f32 0.0, %v3939
  %v3941 = vpop.f32.mrb[0].mxu0
  %3942 = vmatprep.mubr.f32.mxu0 0.0
  %3943 = vmatmul.mubr.f32.gmra.mrb[0].mxu0 %v2633
  %v3944 = vpop.f32.mrb[0].mxu0
  %v3945 = vadd.f32 0.0, %v3944
  %v3946 = vpop.f32.mrb[0].mxu0
  %3947 = vmatprep.mubr.f32.mxu0 0.0
  %3948 = vmatmul.mubr.f32.gmra.mrb[0].mxu0 %v2636
  %v3949 = vpop.f32.mrb[0].mxu0
  %v3950 = vadd.f32 0.0, %v3949
  %v3951 = vpop.f32.mrb[0].mxu0
  %3952 = vmatprep.mubr.f32.mxu0 0.0
  %3953 = vmatmul.mubr.f32.gmra.mrb[0].mxu0 %v2639
  %v3954 = vpop.f32.mrb[0].mxu0
  %v3955 = vadd.f32 0.0, %v3954
  %v3956 = vpop.f32.mrb[0].mxu0
  %3957 = vmatprep.mubr.f32.mxu0 0.0
  %3958 = vmatmul.mubr.f32.gmra.mrb[0].mxu0 %v2642
  %v3959 = vpop.f32.mrb[0].mxu0
  %v3960 = vadd.f32 0.0, %v3959
  %v3961 = vpop.f32.mrb[0].mxu0
  %3962 = vmatprep.mubr.f32.mxu0 0.0
  %3963 = vmatmul.mubr.f32.gmra.mrb[0].mxu0 %v2645
  %v3964 = vpop.f32.mrb[0].mxu0
  %v3965 = vadd.f32 0.0, %v3964
  %v3966 = vpop.f32.mrb[0].mxu0
  %3967 = vmatprep.mubr.f32.mxu0 0.0
  %3968 = vmatmul.mubr.f32.gmra.mrb[0].mxu0 %v2648
  %v3969 = vpop.f32.mrb[0].mxu0
  %v3970 = vadd.f32 0.0, %v3969
  %v3971 = vpop.f32.mrb[0].mxu0
  %3972 = vmatprep.mubr.f32.mxu0 0.0
  %3973 = vmatmul.mubr.f32.gmra.mrb[0].mxu0 %v2903
  %v3974 = vpop.f32.mrb[0].mxu0
  %v3975 = vadd.f32 0.0, %v3974
  %v3976 = vpop.f32.mrb[0].mxu0
  %3977 = vmatprep.mubr.f32.mxu0 0.0
  %3978 = vmatmul.mubr.f32.gmra.mrb[0].mxu0 %v3046
  %v3979 = vpop.f32.mrb[0].mxu0
  %v3980 = vadd.f32 0.0, %v3979
  %v3981 = vpop.f32.mrb[0].mxu0
  %3982 = vmatprep.mubr.f32.mxu0 0.0
  %3983 = vmatmul.mubr.f32.gmra.mrb[0].mxu0 %v3189
  %v3984 = vpop.f32.mrb[0].mxu0
  %v3985 = vadd.f32 0.0, %v3984
  %v3986 = vpop.f32.mrb[0].mxu0
  %3987 = vdwg.mxu0
  %v3988 = vadd.f32 %v3848, %v3940
  %v3989 = vadd.f32 %v3849, %v3945
  %v3990 = vadd.f32 %v3850, %v3950
  %v3991 = vadd.f32 %v3851, %v3955
  %v3992 = vadd.f32 %v3852, %v3960
  %v3993 = vadd.f32 %v3853, %v3965
  %v3994 = vadd.f32 %v3854, %v3970
  %v3995 = vadd.f32 %v3855, %v3975
  %v3996 = vadd.f32 %v3856, %v3980
  %v3997 = vadd.f32 %v3857, %v3985
  %v3998 = vmax.f32 %v3309, %v3988
  %v3999 = vmax.f32 %v3310, %v3989
  %v4000 = vmax.f32 %v3311, %v3990
  %v4001 = vmax.f32 %v3312, %v3991
  %v4002 = vmax.f32 %v3313, %v3992
  %v4003 = vmax.f32 %v3314, %v3993
  %v4004 = vmax.f32 %v3315, %v3994
  %v4005 = vmax.f32 %v3316, %v3995
  %v4006 = vmax.f32 %v3317, %v3996
  %v4007 = vmax.f32 %v3318, %v3997
  %v4008 = vmax.f32 %v3998, %v3999
  %v4009 = vmax.f32 %v4000, %v4001
  %v4010 = vmax.f32 %v4002, %v4003
  %v4011 = vmax.f32 %v4004, %v4005
  %v4012 = vmax.f32 %v4006, %v4007
  %v4013 = vld [vmem:[%s6] sm:$0x1]
  %v4015 = vlaneseq
  %v4016 = vshrl.u32 %v4015, 7
  %v4017 = vsub.s32 0, %v4016
  %v4018 = vrot.slane %v4013, %v4017
  %v4020 = vadd.f32 %v4008, %v4018
  %v4021 = vadd.f32 %v4009, %v4018
  %v4022 = vadd.f32 %v4010, %v4018
  %v4023 = vadd.f32 %v4011, %v4018
  %v4024 = vadd.f32 %v4012, %v4018
  %v4025 = vmax.f32 %v4020, 0.0
  %v4026 = vmax.f32 %v4021, 0.0
  %v4027 = vmax.f32 %v4022, 0.0
  %v4028 = vmax.f32 %v4023, 0.0
  %v4029 = vmax.f32 %v4024, 0.0
  %v4030 = vld [vmem:[%s7] sm:$0xff]
  %v4031 = vld [vmem:[%s7 + $0x8] sm:$0xff]
  %v4032 = vld [vmem:[%s7 + $0x10] sm:$0xff]
  %v4033 = vld [vmem:[%s7 + $0x18] sm:$0xff]
  %v4034 = vld [vmem:[%s7 + $0x20] sm:$0xff]
  %v4035 = vld [vmem:[%s7 + $0x28] sm:$0xff]
  %v4036 = vld [vmem:[%s7 + $0x30] sm:$0xff]
  %v4037 = vld [vmem:[%s7 + $0x38] sm:$0xff]
  %v4038 = vld [vmem:[%s7 + $0x40] sm:$0xff]
  %v4039 = vld [vmem:[%s7 + $0x48] sm:$0xff]
  %s4040 = scalar_lea.vmem %s7, 80
  %v4041 = vld [vmem:[%s4040] sm:$0xff]
  %v4042 = vld [vmem:[%s4040 + $0x8] sm:$0xff]
  %v4043 = vld [vmem:[%s4040 + $0x10] sm:$0xff]
  %v4044 = vld [vmem:[%s4040 + $0x18] sm:$0xff]
  %v4045 = vld [vmem:[%s4040 + $0x20] sm:$0xff]
  %v4046 = vld [vmem:[%s4040 + $0x28] sm:$0xff]
  %v4047 = vld [vmem:[%s4040 + $0x30] sm:$0xff]
  %v4048 = vld [vmem:[%s4040 + $0x38] sm:$0xff]
  %v4049 = vld [vmem:[%s4040 + $0x40] sm:$0xff]
  %v4050 = vld [vmem:[%s4040 + $0x48] sm:$0xff]
  %vm4051 = vcmask 654336
  %v4053 = vsel %vm4051, %v4026, 0
  %4055 = vmatprep.subr.mxu0 0.0
  %4056 = vmatpush1.msra.mxu0 %v4041
  %4057 = vmatprep.subr.mxu0 0.0
  %4058 = vmatpush1.msra.mxu0 %v4042
  %4059 = vmatprep.subr.mxu0 0.0
  %4060 = vmatpush1.msra.mxu0 %v4043
  %4061 = vmatprep.subr.mxu0 0.0
  %4062 = vmatpush1.msra.mxu0 %v4044
  %4063 = vmatprep.subr.mxu0 0.0
  %4064 = vmatpush1.msra.mxu0 %v4045
  %4065 = vmatprep.subr.mxu0 0.0
  %4066 = vmatpush1.msra.mxu0 %v4046
  %4067 = vmatprep.subr.mxu0 0.0
  %4068 = vmatpush1.msra.mxu0 %v4047
  %4069 = vmatprep.subr.mxu0 0.0
  %4070 = vmatpush1.msra.mxu0 %v4048
  %4071 = vmatprep.subr.mxu0 0.0
  %4072 = vmatpush1.msra.mxu0 %v4049
  %4073 = vmatprep.subr.mxu0 0.0
  %4074 = vmatpush1.msra.mxu0 %v4050
  %4075 = vmatprep.subr.mxu0 0.0
  %4076 = vmatpush1.msra.mxu0 0.0
  %4077 = vmatprep.subr.mxu0 0.0
  %4078 = vmatpush1.msra.mxu0 0.0
  %4079 = vmatprep.subr.mxu0 0.0
  %4080 = vmatpush1.msra.mxu0 0.0
  %4081 = vmatprep.subr.mxu0 0.0
  %4082 = vmatpush1.msra.mxu0 0.0
  %4083 = vmatprep.subr.mxu0 0.0
  %4084 = vmatpush1.msra.mxu0 0.0
  %4085 = vmatprep.subr.mxu0 0.0
  %4086 = vmatpush1.msra.mxu0 0.0
  %4087 = vmatprep.subr.mxu0 0.0
  %4088 = vmatpush1.msra.mxu0 0.0
  %4089 = vmatprep.subr.mxu0 0.0
  %4090 = vmatpush1.msra.mxu0 0.0
  %4091 = vmatprep.subr.mxu0 0.0
  %4092 = vmatpush1.msra.mxu0 0.0
  %4093 = vmatprep.subr.mxu0 0.0
  %4094 = vmatpush1.msra.mxu0 0.0
  %4095 = vmatprep.subr.mxu0 0.0
  %4096 = vmatpush1.msra.mxu0 0.0
  %4097 = vmatprep.subr.mxu0 0.0
  %4098 = vmatpush1.msra.mxu0 0.0
  %4099 = vmatprep.subr.mxu0 0.0
  %4100 = vmatpush1.msra.mxu0 0.0
  %4101 = vmatprep.subr.mxu0 0.0
  %4102 = vmatpush1.msra.mxu0 0.0
  %4103 = vmatprep.subr.mxu0 0.0
  %4104 = vmatpush1.msra.mxu0 0.0
  %4105 = vmatprep.subr.mxu0 0.0
  %4106 = vmatpush1.msra.mxu0 0.0
  %4107 = vmatprep.subr.mxu0 0.0
  %4108 = vmatpush1.msra.mxu0 0.0
  %4109 = vmatprep.subr.mxu0 0.0
  %4110 = vmatpush1.msra.mxu0 0.0
  %4111 = vmatprep.subr.mxu0 0.0
  %4112 = vmatpush1.msra.mxu0 0.0
  %4113 = vmatprep.subr.mxu0 0.0
  %4114 = vmatpush1.msra.mxu0 0.0
  %4115 = vmatprep.subr.mxu0 0.0
  %4116 = vmatpush1.msra.mxu0 0.0
  %4117 = vmatprep.subr.mxu0 0.0
  %4118 = vmatpush1.msra.mxu0 0.0
  %4119 = vmatprep.mubr.f32.mxu0 0.0
  %4120 = vmatmul.mubr.f32.gmra.mrb[0].mxu0 %v4053
  %v4121 = vpop.f32.mrb[0].mxu0
  %v4122 = vadd.f32 0.0, %v4121
  %v4123 = vpop.f32.mrb[0].mxu0
  %4124 = vdwg.mxu0
  %v4126 = vsel %vm4051, %v4025, 0
  %4128 = vmatprep.subr.mxu0 0.0
  %4129 = vmatpush1.msra.mxu0 %v4030
  %4130 = vmatprep.subr.mxu0 0.0
  %4131 = vmatpush1.msra.mxu0 %v4031
  %4132 = vmatprep.subr.mxu0 0.0
  %4133 = vmatpush1.msra.mxu0 %v4032
  %4134 = vmatprep.subr.mxu0 0.0
  %4135 = vmatpush1.msra.mxu0 %v4033
  %4136 = vmatprep.subr.mxu0 0.0
  %4137 = vmatpush1.msra.mxu0 %v4034
  %4138 = vmatprep.subr.mxu0 0.0
  %4139 = vmatpush1.msra.mxu0 %v4035
  %4140 = vmatprep.subr.mxu0 0.0
  %4141 = vmatpush1.msra.mxu0 %v4036
  %4142 = vmatprep.subr.mxu0 0.0
  %4143 = vmatpush1.msra.mxu0 %v4037
  %4144 = vmatprep.subr.mxu0 0.0
  %4145 = vmatpush1.msra.mxu0 %v4038
  %4146 = vmatprep.subr.mxu0 0.0
  %4147 = vmatpush1.msra.mxu0 %v4039
  %4148 = vmatprep.subr.mxu0 0.0
  %4149 = vmatpush1.msra.mxu0 0.0
  %4150 = vmatprep.subr.mxu0 0.0
  %4151 = vmatpush1.msra.mxu0 0.0
  %4152 = vmatprep.subr.mxu0 0.0
  %4153 = vmatpush1.msra.mxu0 0.0
  %4154 = vmatprep.subr.mxu0 0.0
  %4155 = vmatpush1.msra.mxu0 0.0
  %4156 = vmatprep.subr.mxu0 0.0
  %4157 = vmatpush1.msra.mxu0 0.0
  %4158 = vmatprep.subr.mxu0 0.0
  %4159 = vmatpush1.msra.mxu0 0.0
  %4160 = vmatprep.subr.mxu0 0.0
  %4161 = vmatpush1.msra.mxu0 0.0
  %4162 = vmatprep.subr.mxu0 0.0
  %4163 = vmatpush1.msra.mxu0 0.0
  %4164 = vmatprep.subr.mxu0 0.0
  %4165 = vmatpush1.msra.mxu0 0.0
  %4166 = vmatprep.subr.mxu0 0.0
  %4167 = vmatpush1.msra.mxu0 0.0
  %4168 = vmatprep.subr.mxu0 0.0
  %4169 = vmatpush1.msra.mxu0 0.0
  %4170 = vmatprep.subr.mxu0 0.0
  %4171 = vmatpush1.msra.mxu0 0.0
  %4172 = vmatprep.subr.mxu0 0.0
  %4173 = vmatpush1.msra.mxu0 0.0
  %4174 = vmatprep.subr.mxu0 0.0
  %4175 = vmatpush1.msra.mxu0 0.0
  %4176 = vmatprep.subr.mxu0 0.0
  %4177 = vmatpush1.msra.mxu0 0.0
  %4178 = vmatprep.subr.mxu0 0.0
  %4179 = vmatpush1.msra.mxu0 0.0
  %4180 = vmatprep.subr.mxu0 0.0
  %4181 = vmatpush1.msra.mxu0 0.0
  %4182 = vmatprep.subr.mxu0 0.0
  %4183 = vmatpush1.msra.mxu0 0.0
  %4184 = vmatprep.subr.mxu0 0.0
  %4185 = vmatpush1.msra.mxu0 0.0
  %4186 = vmatprep.subr.mxu0 0.0
  %4187 = vmatpush1.msra.mxu0 0.0
  %4188 = vmatprep.subr.mxu0 0.0
  %4189 = vmatpush1.msra.mxu0 0.0
  %4190 = vmatprep.subr.mxu0 0.0
  %4191 = vmatpush1.msra.mxu0 0.0
  %4192 = vmatprep.mubr.f32.mxu0 0.0
  %4193 = vmatmul.mubr.f32.gmra.mrb[0].mxu0 %v4126
  %v4194 = vpop.f32.mrb[0].mxu0
  %v4195 = vadd.f32 %v4122, %v4194
  %v4196 = vpop.f32.mrb[0].mxu0
  %4197 = vdwg.mxu0
  %s4198 = scalar_lea.vmem %s7, 160
  %v4199 = vld [vmem:[%s4198] sm:$0xff]
  %v4200 = vld [vmem:[%s4198 + $0x8] sm:$0xff]
  %v4201 = vld [vmem:[%s4198 + $0x10] sm:$0xff]
  %v4202 = vld [vmem:[%s4198 + $0x18] sm:$0xff]
  %v4203 = vld [vmem:[%s4198 + $0x20] sm:$0xff]
  %v4204 = vld [vmem:[%s4198 + $0x28] sm:$0xff]
  %v4205 = vld [vmem:[%s4198 + $0x30] sm:$0xff]
  %v4206 = vld [vmem:[%s4198 + $0x38] sm:$0xff]
  %v4207 = vld [vmem:[%s4198 + $0x40] sm:$0xff]
  %v4208 = vld [vmem:[%s4198 + $0x48] sm:$0xff]
  %v4210 = vsel %vm4051, %v4027, 0
  %4212 = vmatprep.subr.mxu0 0.0
  %4213 = vmatpush1.msra.mxu0 %v4199
  %4214 = vmatprep.subr.mxu0 0.0
  %4215 = vmatpush1.msra.mxu0 %v4200
  %4216 = vmatprep.subr.mxu0 0.0
  %4217 = vmatpush1.msra.mxu0 %v4201
  %4218 = vmatprep.subr.mxu0 0.0
  %4219 = vmatpush1.msra.mxu0 %v4202
  %4220 = vmatprep.subr.mxu0 0.0
  %4221 = vmatpush1.msra.mxu0 %v4203
  %4222 = vmatprep.subr.mxu0 0.0
  %4223 = vmatpush1.msra.mxu0 %v4204
  %4224 = vmatprep.subr.mxu0 0.0
  %4225 = vmatpush1.msra.mxu0 %v4205
  %4226 = vmatprep.subr.mxu0 0.0
  %4227 = vmatpush1.msra.mxu0 %v4206
  %4228 = vmatprep.subr.mxu0 0.0
  %4229 = vmatpush1.msra.mxu0 %v4207
  %4230 = vmatprep.subr.mxu0 0.0
  %4231 = vmatpush1.msra.mxu0 %v4208
  %4232 = vmatprep.subr.mxu0 0.0
  %4233 = vmatpush1.msra.mxu0 0.0
  %4234 = vmatprep.subr.mxu0 0.0
  %4235 = vmatpush1.msra.mxu0 0.0
  %4236 = vmatprep.subr.mxu0 0.0
  %4237 = vmatpush1.msra.mxu0 0.0
  %4238 = vmatprep.subr.mxu0 0.0
  %4239 = vmatpush1.msra.mxu0 0.0
  %4240 = vmatprep.subr.mxu0 0.0
  %4241 = vmatpush1.msra.mxu0 0.0
  %4242 = vmatprep.subr.mxu0 0.0
  %4243 = vmatpush1.msra.mxu0 0.0
  %4244 = vmatprep.subr.mxu0 0.0
  %4245 = vmatpush1.msra.mxu0 0.0
  %4246 = vmatprep.subr.mxu0 0.0
  %4247 = vmatpush1.msra.mxu0 0.0
  %4248 = vmatprep.subr.mxu0 0.0
  %4249 = vmatpush1.msra.mxu0 0.0
  %4250 = vmatprep.subr.mxu0 0.0
  %4251 = vmatpush1.msra.mxu0 0.0
  %4252 = vmatprep.subr.mxu0 0.0
  %4253 = vmatpush1.msra.mxu0 0.0
  %4254 = vmatprep.subr.mxu0 0.0
  %4255 = vmatpush1.msra.mxu0 0.0
  %4256 = vmatprep.subr.mxu0 0.0
  %4257 = vmatpush1.msra.mxu0 0.0
  %4258 = vmatprep.subr.mxu0 0.0
  %4259 = vmatpush1.msra.mxu0 0.0
  %4260 = vmatprep.subr.mxu0 0.0
  %4261 = vmatpush1.msra.mxu0 0.0
  %4262 = vmatprep.subr.mxu0 0.0
  %4263 = vmatpush1.msra.mxu0 0.0
  %4264 = vmatprep.subr.mxu0 0.0
  %4265 = vmatpush1.msra.mxu0 0.0
  %4266 = vmatprep.subr.mxu0 0.0
  %4267 = vmatpush1.msra.mxu0 0.0
  %4268 = vmatprep.subr.mxu0 0.0
  %4269 = vmatpush1.msra.mxu0 0.0
  %4270 = vmatprep.subr.mxu0 0.0
  %4271 = vmatpush1.msra.mxu0 0.0
  %4272 = vmatprep.subr.mxu0 0.0
  %4273 = vmatpush1.msra.mxu0 0.0
  %4274 = vmatprep.subr.mxu0 0.0
  %4275 = vmatpush1.msra.mxu0 0.0
  %4276 = vmatprep.mubr.f32.mxu0 0.0
  %4277 = vmatmul.mubr.f32.gmra.mrb[0].mxu0 %v4210
  %v4278 = vpop.f32.mrb[0].mxu0
  %v4279 = vadd.f32 0.0, %v4278
  %v4280 = vpop.f32.mrb[0].mxu0
  %4281 = vdwg.mxu0
  %v4282 = vadd.f32 %v4195, %v4279
  %s4283 = scalar_lea.vmem %s7, 240
  %v4284 = vld [vmem:[%s4283] sm:$0xff]
  %v4285 = vld [vmem:[%s4283 + $0x8] sm:$0xff]
  %v4286 = vld [vmem:[%s4283 + $0x10] sm:$0xff]
  %v4287 = vld [vmem:[%s4283 + $0x18] sm:$0xff]
  %v4288 = vld [vmem:[%s4283 + $0x20] sm:$0xff]
  %v4289 = vld [vmem:[%s4283 + $0x28] sm:$0xff]
  %v4290 = vld [vmem:[%s4283 + $0x30] sm:$0xff]
  %v4291 = vld [vmem:[%s4283 + $0x38] sm:$0xff]
  %v4292 = vld [vmem:[%s4283 + $0x40] sm:$0xff]
  %v4293 = vld [vmem:[%s4283 + $0x48] sm:$0xff]
  %v4295 = vsel %vm4051, %v4028, 0
  %4297 = vmatprep.subr.mxu0 0.0
  %4298 = vmatpush1.msra.mxu0 %v4284
  %4299 = vmatprep.subr.mxu0 0.0
  %4300 = vmatpush1.msra.mxu0 %v4285
  %4301 = vmatprep.subr.mxu0 0.0
  %4302 = vmatpush1.msra.mxu0 %v4286
  %4303 = vmatprep.subr.mxu0 0.0
  %4304 = vmatpush1.msra.mxu0 %v4287
  %4305 = vmatprep.subr.mxu0 0.0
  %4306 = vmatpush1.msra.mxu0 %v4288
  %4307 = vmatprep.subr.mxu0 0.0
  %4308 = vmatpush1.msra.mxu0 %v4289
  %4309 = vmatprep.subr.mxu0 0.0
  %4310 = vmatpush1.msra.mxu0 %v4290
  %4311 = vmatprep.subr.mxu0 0.0
  %4312 = vmatpush1.msra.mxu0 %v4291
  %4313 = vmatprep.subr.mxu0 0.0
  %4314 = vmatpush1.msra.mxu0 %v4292
  %4315 = vmatprep.subr.mxu0 0.0
  %4316 = vmatpush1.msra.mxu0 %v4293
  %4317 = vmatprep.subr.mxu0 0.0
  %4318 = vmatpush1.msra.mxu0 0.0
  %4319 = vmatprep.subr.mxu0 0.0
  %4320 = vmatpush1.msra.mxu0 0.0
  %4321 = vmatprep.subr.mxu0 0.0
  %4322 = vmatpush1.msra.mxu0 0.0
  %4323 = vmatprep.subr.mxu0 0.0
  %4324 = vmatpush1.msra.mxu0 0.0
  %4325 = vmatprep.subr.mxu0 0.0
  %4326 = vmatpush1.msra.mxu0 0.0
  %4327 = vmatprep.subr.mxu0 0.0
  %4328 = vmatpush1.msra.mxu0 0.0
  %4329 = vmatprep.subr.mxu0 0.0
  %4330 = vmatpush1.msra.mxu0 0.0
  %4331 = vmatprep.subr.mxu0 0.0
  %4332 = vmatpush1.msra.mxu0 0.0
  %4333 = vmatprep.subr.mxu0 0.0
  %4334 = vmatpush1.msra.mxu0 0.0
  %4335 = vmatprep.subr.mxu0 0.0
  %4336 = vmatpush1.msra.mxu0 0.0
  %4337 = vmatprep.subr.mxu0 0.0
  %4338 = vmatpush1.msra.mxu0 0.0
  %4339 = vmatprep.subr.mxu0 0.0
  %4340 = vmatpush1.msra.mxu0 0.0
  %4341 = vmatprep.subr.mxu0 0.0
  %4342 = vmatpush1.msra.mxu0 0.0
  %4343 = vmatprep.subr.mxu0 0.0
  %4344 = vmatpush1.msra.mxu0 0.0
  %4345 = vmatprep.subr.mxu0 0.0
  %4346 = vmatpush1.msra.mxu0 0.0
  %4347 = vmatprep.subr.mxu0 0.0
  %4348 = vmatpush1.msra.mxu0 0.0
  %4349 = vmatprep.subr.mxu0 0.0
  %4350 = vmatpush1.msra.mxu0 0.0
  %4351 = vmatprep.subr.mxu0 0.0
  %4352 = vmatpush1.msra.mxu0 0.0
  %4353 = vmatprep.subr.mxu0 0.0
  %4354 = vmatpush1.msra.mxu0 0.0
  %4355 = vmatprep.subr.mxu0 0.0
  %4356 = vmatpush1.msra.mxu0 0.0
  %4357 = vmatprep.subr.mxu0 0.0
  %4358 = vmatpush1.msra.mxu0 0.0
  %4359 = vmatprep.subr.mxu0 0.0
  %4360 = vmatpush1.msra.mxu0 0.0
  %4361 = vmatprep.mubr.f32.mxu0 0.0
  %4362 = vmatmul.mubr.f32.gmra.mrb[0].mxu0 %v4295
  %v4363 = vpop.f32.mrb[0].mxu0
  %v4364 = vadd.f32 0.0, %v4363
  %v4365 = vpop.f32.mrb[0].mxu0
  %4366 = vdwg.mxu0
  %v4367 = vadd.f32 %v4282, %v4364
  %s4368 = scalar_lea.vmem %s7, 320
  %v4369 = vld [vmem:[%s4368] sm:$0xff]
  %v4370 = vld [vmem:[%s4368 + $0x8] sm:$0xff]
  %v4371 = vld [vmem:[%s4368 + $0x10] sm:$0xff]
  %v4372 = vld [vmem:[%s4368 + $0x18] sm:$0xff]
  %v4373 = vld [vmem:[%s4368 + $0x20] sm:$0xff]
  %v4374 = vld [vmem:[%s4368 + $0x28] sm:$0xff]
  %v4375 = vld [vmem:[%s4368 + $0x30] sm:$0xff]
  %v4376 = vld [vmem:[%s4368 + $0x38] sm:$0xff]
  %v4377 = vld [vmem:[%s4368 + $0x40] sm:$0xff]
  %v4378 = vld [vmem:[%s4368 + $0x48] sm:$0xff]
  %v4380 = vsel %vm4051, %v4029, 0
  %4382 = vmatprep.subr.mxu0 0.0
  %4383 = vmatpush1.msra.mxu0 %v4369
  %4384 = vmatprep.subr.mxu0 0.0
  %4385 = vmatpush1.msra.mxu0 %v4370
  %4386 = vmatprep.subr.mxu0 0.0
  %4387 = vmatpush1.msra.mxu0 %v4371
  %4388 = vmatprep.subr.mxu0 0.0
  %4389 = vmatpush1.msra.mxu0 %v4372
  %4390 = vmatprep.subr.mxu0 0.0
  %4391 = vmatpush1.msra.mxu0 %v4373
  %4392 = vmatprep.subr.mxu0 0.0
  %4393 = vmatpush1.msra.mxu0 %v4374
  %4394 = vmatprep.subr.mxu0 0.0
  %4395 = vmatpush1.msra.mxu0 %v4375
  %4396 = vmatprep.subr.mxu0 0.0
  %4397 = vmatpush1.msra.mxu0 %v4376
  %4398 = vmatprep.subr.mxu0 0.0
  %4399 = vmatpush1.msra.mxu0 %v4377
  %4400 = vmatprep.subr.mxu0 0.0
  %4401 = vmatpush1.msra.mxu0 %v4378
  %4402 = vmatprep.subr.mxu0 0.0
  %4403 = vmatpush1.msra.mxu0 0.0
  %4404 = vmatprep.subr.mxu0 0.0
  %4405 = vmatpush1.msra.mxu0 0.0
  %4406 = vmatprep.subr.mxu0 0.0
  %4407 = vmatpush1.msra.mxu0 0.0
  %4408 = vmatprep.subr.mxu0 0.0
  %4409 = vmatpush1.msra.mxu0 0.0
  %4410 = vmatprep.subr.mxu0 0.0
  %4411 = vmatpush1.msra.mxu0 0.0
  %4412 = vmatprep.subr.mxu0 0.0
  %4413 = vmatpush1.msra.mxu0 0.0
  %4414 = vmatprep.subr.mxu0 0.0
  %4415 = vmatpush1.msra.mxu0 0.0
  %4416 = vmatprep.subr.mxu0 0.0
  %4417 = vmatpush1.msra.mxu0 0.0
  %4418 = vmatprep.subr.mxu0 0.0
  %4419 = vmatpush1.msra.mxu0 0.0
  %4420 = vmatprep.subr.mxu0 0.0
  %4421 = vmatpush1.msra.mxu0 0.0
  %4422 = vmatprep.subr.mxu0 0.0
  %4423 = vmatpush1.msra.mxu0 0.0
  %4424 = vmatprep.subr.mxu0 0.0
  %4425 = vmatpush1.msra.mxu0 0.0
  %4426 = vmatprep.subr.mxu0 0.0
  %4427 = vmatpush1.msra.mxu0 0.0
  %4428 = vmatprep.subr.mxu0 0.0
  %4429 = vmatpush1.msra.mxu0 0.0
  %4430 = vmatprep.subr.mxu0 0.0
  %4431 = vmatpush1.msra.mxu0 0.0
  %4432 = vmatprep.subr.mxu0 0.0
  %4433 = vmatpush1.msra.mxu0 0.0
  %4434 = vmatprep.subr.mxu0 0.0
  %4435 = vmatpush1.msra.mxu0 0.0
  %4436 = vmatprep.subr.mxu0 0.0
  %4437 = vmatpush1.msra.mxu0 0.0
  %4438 = vmatprep.subr.mxu0 0.0
  %4439 = vmatpush1.msra.mxu0 0.0
  %4440 = vmatprep.subr.mxu0 0.0
  %4441 = vmatpush1.msra.mxu0 0.0
  %4442 = vmatprep.subr.mxu0 0.0
  %4443 = vmatpush1.msra.mxu0 0.0
  %4444 = vmatprep.subr.mxu0 0.0
  %4445 = vmatpush1.msra.mxu0 0.0
  %4446 = vmatprep.mubr.f32.mxu0 0.0
  %4447 = vmatmul.mubr.f32.gmra.mrb[0].mxu0 %v4380
  %v4448 = vpop.f32.mrb[0].mxu0
  %v4449 = vadd.f32 0.0, %v4448
  %v4450 = vpop.f32.mrb[0].mxu0
  %4451 = vdwg.mxu0
  %v4452 = vadd.f32 %v4367, %v4449
  %v4453 = vld [vmem:[%s8] sm:$0x1]
  %v4455 = vlaneseq
  %v4456 = vshrl.u32 %v4455, 7
  %v4457 = vsub.s32 0, %v4456
  %v4458 = vrot.slane %v4453, %v4457
  %v4460 = vadd.f32 %v4452, %v4458
  %v4461 = vmax.f32 %v4460, 0.0
  %v4462 = vld [vmem:[%s9] sm:$0xff]
  %v4463 = vld [vmem:[%s9 + $0x8] sm:$0xff]
  %v4464 = vld [vmem:[%s9 + $0x10] sm:$0xff]
  %v4465 = vld [vmem:[%s9 + $0x18] sm:$0xff]
  %v4466 = vld [vmem:[%s9 + $0x20] sm:$0xff]
  %v4467 = vld [vmem:[%s9 + $0x28] sm:$0xff]
  %v4468 = vld [vmem:[%s9 + $0x30] sm:$0xff]
  %v4469 = vld [vmem:[%s9 + $0x38] sm:$0xff]
  %v4470 = vld [vmem:[%s9 + $0x40] sm:$0xff]
  %v4471 = vld [vmem:[%s9 + $0x48] sm:$0xff]
  %v4472 = vld [vmem:[%s9 + $0x50] sm:$0xff]
  %v4473 = vld [vmem:[%s9 + $0x58] sm:$0xff]
  %v4474 = vld [vmem:[%s9 + $0x60] sm:$0xff]
  %v4475 = vld [vmem:[%s9 + $0x68] sm:$0xff]
  %v4476 = vld [vmem:[%s9 + $0x70] sm:$0xff]
  %v4477 = vld [vmem:[%s9 + $0x78] sm:$0xff]
  %v4478 = vld [vmem:[%s10] sm:$0x1]
  %v4480 = vlaneseq
  %v4481 = vshrl.u32 %v4480, 7
  %v4482 = vsub.s32 0, %v4481
  %v4483 = vrot.slane %v4478, %v4482
  %4485 = vmatprep.subr.mxu0 0.0
  %4486 = vmatpush1.msra.mxu0 %v4462
  %4487 = vmatprep.subr.mxu0 0.0
  %4488 = vmatpush1.msra.mxu0 %v4463
  %4489 = vmatprep.subr.mxu0 0.0
  %4490 = vmatpush1.msra.mxu0 %v4464
  %4491 = vmatprep.subr.mxu0 0.0
  %4492 = vmatpush1.msra.mxu0 %v4465
  %4493 = vmatprep.subr.mxu0 0.0
  %4494 = vmatpush1.msra.mxu0 %v4466
  %4495 = vmatprep.subr.mxu0 0.0
  %4496 = vmatpush1.msra.mxu0 %v4467
  %4497 = vmatprep.subr.mxu0 0.0
  %4498 = vmatpush1.msra.mxu0 %v4468
  %4499 = vmatprep.subr.mxu0 0.0
  %4500 = vmatpush1.msra.mxu0 %v4469
  %4501 = vmatprep.subr.mxu0 0.0
  %4502 = vmatpush1.msra.mxu0 %v4470
  %4503 = vmatprep.subr.mxu0 0.0
  %4504 = vmatpush1.msra.mxu0 %v4471
  %4505 = vmatprep.subr.mxu0 0.0
  %4506 = vmatpush1.msra.mxu0 %v4472
  %4507 = vmatprep.subr.mxu0 0.0
  %4508 = vmatpush1.msra.mxu0 %v4473
  %4509 = vmatprep.subr.mxu0 0.0
  %4510 = vmatpush1.msra.mxu0 %v4474
  %4511 = vmatprep.subr.mxu0 0.0
  %4512 = vmatpush1.msra.mxu0 %v4475
  %4513 = vmatprep.subr.mxu0 0.0
  %4514 = vmatpush1.msra.mxu0 %v4476
  %4515 = vmatprep.subr.mxu0 0.0
  %4516 = vmatpush1.msra.mxu0 %v4477
  %4517 = vmatprep.subr.mxu0 0.0
  %4518 = vmatpush1.msra.mxu0 0.0
  %4519 = vmatprep.subr.mxu0 0.0
  %4520 = vmatpush1.msra.mxu0 0.0
  %4521 = vmatprep.subr.mxu0 0.0
  %4522 = vmatpush1.msra.mxu0 0.0
  %4523 = vmatprep.subr.mxu0 0.0
  %4524 = vmatpush1.msra.mxu0 0.0
  %4525 = vmatprep.subr.mxu0 0.0
  %4526 = vmatpush1.msra.mxu0 0.0
  %4527 = vmatprep.subr.mxu0 0.0
  %4528 = vmatpush1.msra.mxu0 0.0
  %4529 = vmatprep.subr.mxu0 0.0
  %4530 = vmatpush1.msra.mxu0 0.0
  %4531 = vmatprep.subr.mxu0 0.0
  %4532 = vmatpush1.msra.mxu0 0.0
  %4533 = vmatprep.subr.mxu0 0.0
  %4534 = vmatpush1.msra.mxu0 0.0
  %4535 = vmatprep.subr.mxu0 0.0
  %4536 = vmatpush1.msra.mxu0 0.0
  %4537 = vmatprep.subr.mxu0 0.0
  %4538 = vmatpush1.msra.mxu0 0.0
  %4539 = vmatprep.subr.mxu0 0.0
  %4540 = vmatpush1.msra.mxu0 0.0
  %4541 = vmatprep.subr.mxu0 0.0
  %4542 = vmatpush1.msra.mxu0 0.0
  %4543 = vmatprep.subr.mxu0 0.0
  %4544 = vmatpush1.msra.mxu0 0.0
  %4545 = vmatprep.subr.mxu0 0.0
  %4546 = vmatpush1.msra.mxu0 0.0
  %4547 = vmatprep.subr.mxu0 0.0
  %4548 = vmatpush1.msra.mxu0 0.0
  %4549 = vmatprep.mubr.f32.mxu0 0.0
  %4550 = vmatmul.mubr.f32.gmra.mrb[0].mxu0 %v4461
  %v4551 = vpop.f32.mrb[0].mxu0
  %v4552 = vadd.f32 %v4483, %v4551
  %v4553 = vpop.f32.mrb[0].mxu0
  %4554 = vdwg.mxu0
  %v4555 = vmax.f32 %v4552, 0.0
  %v4556 = vld [vmem:[%s11] sm:$0xff]
  %v4557 = vld [vmem:[%s11 + $0x8] sm:$0xff]
  %v4558 = vld [vmem:[%s11 + $0x10] sm:$0xff]
  %v4559 = vld [vmem:[%s11 + $0x18] sm:$0xff]
  %v4560 = vld [vmem:[%s11 + $0x20] sm:$0xff]
  %v4561 = vld [vmem:[%s11 + $0x28] sm:$0xff]
  %v4562 = vld [vmem:[%s11 + $0x30] sm:$0xff]
  %v4563 = vld [vmem:[%s11 + $0x38] sm:$0xff]
  %v4564 = vld [vmem:[%s11 + $0x40] sm:$0xff]
  %v4565 = vld [vmem:[%s11 + $0x48] sm:$0xff]
  %v4566 = vld [vmem:[%s11 + $0x50] sm:$0xff]
  %v4567 = vld [vmem:[%s11 + $0x58] sm:$0xff]
  %v4568 = vld [vmem:[%s11 + $0x60] sm:$0xff]
  %v4569 = vld [vmem:[%s11 + $0x68] sm:$0xff]
  %v4570 = vld [vmem:[%s11 + $0x70] sm:$0xff]
  %v4571 = vld [vmem:[%s11 + $0x78] sm:$0xff]
  %v4572 = vld [vmem:[%s12] sm:$0x1]
  %v4574 = vlaneseq
  %v4575 = vshrl.u32 %v4574, 7
  %v4576 = vsub.s32 0, %v4575
  %v4577 = vrot.slane %v4572, %v4576
  %4579 = vmatprep.subr.mxu0 0.0
  %4580 = vmatpush1.msra.mxu0 %v4556
  %4581 = vmatprep.subr.mxu0 0.0
  %4582 = vmatpush1.msra.mxu0 %v4557
  %4583 = vmatprep.subr.mxu0 0.0
  %4584 = vmatpush1.msra.mxu0 %v4558
  %4585 = vmatprep.subr.mxu0 0.0
  %4586 = vmatpush1.msra.mxu0 %v4559
  %4587 = vmatprep.subr.mxu0 0.0
  %4588 = vmatpush1.msra.mxu0 %v4560
  %4589 = vmatprep.subr.mxu0 0.0
  %4590 = vmatpush1.msra.mxu0 %v4561
  %4591 = vmatprep.subr.mxu0 0.0
  %4592 = vmatpush1.msra.mxu0 %v4562
  %4593 = vmatprep.subr.mxu0 0.0
  %4594 = vmatpush1.msra.mxu0 %v4563
  %4595 = vmatprep.subr.mxu0 0.0
  %4596 = vmatpush1.msra.mxu0 %v4564
  %4597 = vmatprep.subr.mxu0 0.0
  %4598 = vmatpush1.msra.mxu0 %v4565
  %4599 = vmatprep.subr.mxu0 0.0
  %4600 = vmatpush1.msra.mxu0 %v4566
  %4601 = vmatprep.subr.mxu0 0.0
  %4602 = vmatpush1.msra.mxu0 %v4567
  %4603 = vmatprep.subr.mxu0 0.0
  %4604 = vmatpush1.msra.mxu0 %v4568
  %4605 = vmatprep.subr.mxu0 0.0
  %4606 = vmatpush1.msra.mxu0 %v4569
  %4607 = vmatprep.subr.mxu0 0.0
  %4608 = vmatpush1.msra.mxu0 %v4570
  %4609 = vmatprep.subr.mxu0 0.0
  %4610 = vmatpush1.msra.mxu0 %v4571
  %4611 = vmatprep.subr.mxu0 0.0
  %4612 = vmatpush1.msra.mxu0 0.0
  %4613 = vmatprep.subr.mxu0 0.0
  %4614 = vmatpush1.msra.mxu0 0.0
  %4615 = vmatprep.subr.mxu0 0.0
  %4616 = vmatpush1.msra.mxu0 0.0
  %4617 = vmatprep.subr.mxu0 0.0
  %4618 = vmatpush1.msra.mxu0 0.0
  %4619 = vmatprep.subr.mxu0 0.0
  %4620 = vmatpush1.msra.mxu0 0.0
  %4621 = vmatprep.subr.mxu0 0.0
  %4622 = vmatpush1.msra.mxu0 0.0
  %4623 = vmatprep.subr.mxu0 0.0
  %4624 = vmatpush1.msra.mxu0 0.0
  %4625 = vmatprep.subr.mxu0 0.0
  %4626 = vmatpush1.msra.mxu0 0.0
  %4627 = vmatprep.subr.mxu0 0.0
  %4628 = vmatpush1.msra.mxu0 0.0
  %4629 = vmatprep.subr.mxu0 0.0
  %4630 = vmatpush1.msra.mxu0 0.0
  %4631 = vmatprep.subr.mxu0 0.0
  %4632 = vmatpush1.msra.mxu0 0.0
  %4633 = vmatprep.subr.mxu0 0.0
  %4634 = vmatpush1.msra.mxu0 0.0
  %4635 = vmatprep.subr.mxu0 0.0
  %4636 = vmatpush1.msra.mxu0 0.0
  %4637 = vmatprep.subr.mxu0 0.0
  %4638 = vmatpush1.msra.mxu0 0.0
  %4639 = vmatprep.subr.mxu0 0.0
  %4640 = vmatpush1.msra.mxu0 0.0
  %4641 = vmatprep.subr.mxu0 0.0
  %4642 = vmatpush1.msra.mxu0 0.0
  %4643 = vmatprep.mubr.f32.mxu0 0.0
  %4644 = vmatmul.mubr.f32.gmra.mrb[0].mxu0 %v4555
  %v4645 = vpop.f32.mrb[0].mxu0
  %v4646 = vadd.f32 %v4577, %v4645
  %v4647 = vpop.f32.mrb[0].mxu0
  %4648 = vdwg.mxu0
  %4649 = vst [vmem:[%s13] sm:$0xff] %v4646
  // Predicated region
  $region54: #{net_forward.1} parent=0 // pred_check
    _
  $region55: #{net_forward.1} parent=0 // pred_check_branch
    %4651 = sbr.rel (0) target = $region57
  $region56: #{net_forward.1} parent=0 // pred_region
    _
  $region57: #{net_forward.1} parent=0 // pred_fallthru
    _
  // Predicated region
  $region58: #{net_forward.1} parent=0 // pred_check
    _
  $region59: #{net_forward.1} parent=0 // pred_check_branch
    %4653 = sbr.rel (0) target = $region61
  $region60: #{net_forward.1} parent=0 // pred_region
    _
  $region61: #{net_forward.1} parent=0 // pred_fallthru
    _

</llo_original>
